<compile_context>
chip_gen: v5e
topology: v5e:2x2
jax: 0.10.0
libtpu: 0.0.40
codegen_flags: <defaults>
</compile_context>

<pallas_src>
import functools

import jax
import jax.numpy as jnp
from jax import lax
from jax.experimental import pallas as pl
from jax.experimental.pallas import tpu as pltpu

EPSILON = 1e-10
NEG_INF = -1e30


def discriminator_kernel(x_ref, wte_ref, wpe_ref, w_ref, b_ref, out_ref,
                         acc_ref, cnt_ref, *, num_classes, chunk_t):
    """Fused embedding + masked mean-pool (tiled over T) + classifier + log_softmax."""
    t = pl.program_id(1)
    n_t = pl.num_programs(1)

    @pl.when(t == 0)
    def _init():
        acc_ref[...] = jnp.zeros_like(acc_ref)
        cnt_ref[...] = jnp.zeros_like(cnt_ref)

    b_blk, t_blk = x_ref.shape
    vocab, _ = wte_ref.shape

    mask = (x_ref[...] != 0).astype(jnp.float32)                  # (bB, bT)

    # Masked token histogram for this T tile, built in vreg-sized chunks so
    # nothing spills:  counts[b, v] = #{t in tile : x[b, t] == v}.
    lane_iota = lax.broadcasted_iota(jnp.int32, (b_blk, chunk_t, vocab), 2)
    counts = jnp.zeros((b_blk, vocab), jnp.float32)
    for c in range(t_blk // chunk_t):                              # static unroll
        sub = x_ref[:, c * chunk_t:(c + 1) * chunk_t]              # (bB, chunk)
        oh = (sub[:, :, None] == lane_iota).astype(jnp.float32)    # (bB, chunk, V)
        counts = counts + jnp.sum(oh, axis=1)                      # (bB, V)

    # Pad id is 0, so dropping masked (pad) tokens == zeroing vocab column 0.
    # (Token ids >= V would silently drop; the synthetic setup guarantees id < V.)
    v_iota = lax.broadcasted_iota(jnp.int32, (b_blk, vocab), 1)
    counts = jnp.where(v_iota == 0, 0.0, counts)

    # Masked hidden-state sum pooled over T *before* the MXU:
    #   sum_t mask * (wte[x_t] + wpe_t) = counts @ wte + mask @ wpe
    # bf16 x bf16 -> f32 (native MXU mode); exact since counts <= 256 and
    # mask is 0/1.
    acc_ref[...] += (
        jnp.dot(counts.astype(jnp.bfloat16), wte_ref[...],
                preferred_element_type=jnp.float32) +
        jnp.dot(mask.astype(jnp.bfloat16), wpe_ref[...],
                preferred_element_type=jnp.float32))               # (bB, E)

    # Per-row token count (scalar per row).
    cnt_ref[...] = cnt_ref[...] + jnp.sum(mask, axis=1, keepdims=True)

    # NOTE: finalize depends on the T axis being the innermost grid axis.
    @pl.when(t == n_t - 1)
    def _finalize():
        denom = cnt_ref[...] + EPSILON                             # (bB, 1)
        avg_hidden = acc_ref[...] / denom                          # (bB, E) f32

        # ClassificationHead on a lane-dense (E, 128) zero-padded weight slab.
        logits = jnp.dot(avg_hidden, w_ref[...],
                         preferred_element_type=jnp.float32) + b_ref[...]

        # Mask padded classes out of the softmax.
        lane = lax.broadcasted_iota(jnp.int32, logits.shape, 1)
        logits = jnp.where(lane < num_classes, logits, NEG_INF)

        m = jnp.max(logits, axis=-1, keepdims=True)
        lse = m + jnp.log(jnp.sum(jnp.exp(logits - m), axis=-1, keepdims=True))
        out_ref[...] = logits - lse


def discriminator_forward(x, wte, wpe, w_cls, b_cls, *, block_b=8, block_t=256,
                          chunk_t=16, class_pad=128):
    """x: (B, T) int32 token ids.  Returns (B, C) log-probs."""
    B, T = x.shape
    C, E = w_cls.shape
    V = wte.shape[0]
    block_t = min(block_t, T)
    assert B % block_b == 0 and T % block_t == 0
    assert block_t % chunk_t == 0
    assert block_t <= 256, "bf16 histogram counts are exact only up to 256"
    assert C <= class_pad
    assert wte.shape == (V, E) and wpe.shape == (T, E)

    # Pad the classifier to a lane-dense 128-wide slab (padded columns are 0).
    w_pad = jnp.zeros((E, class_pad), jnp.float32).at[:, :C].set(
        w_cls.T.astype(jnp.float32))
    b_pad = jnp.zeros((1, class_pad), jnp.float32).at[0, :C].set(
        b_cls.astype(jnp.float32))

    grid = (B // block_b, T // block_t)
    n_t = grid[1]

    bytes_accessed = int(x.size * 4 + wte.size * 2 + wpe.size * 2 +
                         w_pad.size * 4 + b_pad.size * 4 + B * class_pad * 4)
    # Pooled restructure: counts matmul per (b,t) step + wpe matmul + classifier.
    flops = int(2 * B * n_t * V * E + 2 * B * T * E + 2 * B * E * class_pad)

    out_padded = pl.pallas_call(
        functools.partial(discriminator_kernel, num_classes=C, chunk_t=chunk_t),
        out_shape=jax.ShapeDtypeStruct((B, class_pad), jnp.float32),
        grid_spec=pltpu.PrefetchScalarGridSpec(
            num_scalar_prefetch=0,
            grid=grid,
            in_specs=[
                pl.BlockSpec((block_b, block_t), lambda b, t: (b, t)),  # token ids
                pl.BlockSpec((V, E), lambda b, t: (0, 0)),              # wte (resident)
                pl.BlockSpec((block_t, E), lambda b, t: (t, 0)),        # wpe tile
                pl.BlockSpec((E, class_pad), lambda b, t: (0, 0)),      # classifier W^T (padded)
                pl.BlockSpec((1, class_pad), lambda b, t: (0, 0)),      # classifier bias (padded)
            ],
            out_specs=pl.BlockSpec((block_b, class_pad), lambda b, t: (b, 0)),
            scratch_shapes=[
                pltpu.VMEM((block_b, E), jnp.float32),   # masked-sum accumulator
                pltpu.VMEM((block_b, 1), jnp.float32),   # per-row token count
            ],
        ),
        compiler_params=pltpu.CompilerParams(
            dimension_semantics=("parallel", "arbitrary"),
            vmem_limit_bytes=32 * 1024 * 1024,
        ),
        cost_estimate=pl.CostEstimate(
            flops=flops,
            transcendentals=int(B * (class_pad + 1)),
            bytes_accessed=bytes_accessed,
        ),
    )(x, wte, wpe, w_pad, b_pad)

    return out_padded[:, :C]


def reference_forward(x, wte, wpe, w_cls, b_cls):
    """Plain-JAX reference mirroring the PyTorch semantics."""
    hidden = wte.astype(jnp.float32)[x] + wpe.astype(jnp.float32)[None, :, :]
    mask = jnp.broadcast_to((x != 0).astype(jnp.float32)[:, :, None], hidden.shape)
    masked_hidden = hidden * mask
    avg_hidden = jnp.sum(masked_hidden, axis=1) / (jnp.sum(mask, axis=1) + EPSILON)
    logits = avg_hidden @ w_cls.astype(jnp.float32).T + b_cls.astype(jnp.float32)
    return jax.nn.log_softmax(logits, axis=-1)


if __name__ == "__main__":
    # Small, deterministic shapes consistent with the module's forward.
    # grid = (2, 2): two "parallel" B steps (v7x dual-TC) and two T reduction steps.
    B, T, E, C, VOCAB = 16, 512, 128, 4, 128

    key = jax.random.PRNGKey(0)
    k_tok, k_len, k_wte, k_wpe, k_w, k_b = jax.random.split(key, 6)

    # Token ids with per-row padding (id 0) tails so the mask matters.
    x = jax.random.randint(k_tok, (B, T), minval=1, maxval=VOCAB, dtype=jnp.int32)
    lengths = jax.random.randint(k_len, (B,), minval=T // 4, maxval=T, dtype=jnp.int32)
    x = jnp.where(jnp.arange(T)[None, :] < lengths[:, None], x, 0)

    # Deterministic synthetic parameters.  Embedding tables stored in bf16 so
    # the dominant DMA stream is half-width; accumulation stays f32 in VMEM.
    wte = (jax.random.normal(k_wte, (VOCAB, E), dtype=jnp.float32) * 0.02).astype(jnp.bfloat16)
    wpe = (jax.random.normal(k_wpe, (T, E), dtype=jnp.float32) * 0.02).astype(jnp.bfloat16)
    w_cls = jax.random.normal(k_w, (C, E), dtype=jnp.float32) * 0.1   # Linear(E->C) weight
    b_cls = jax.random.normal(k_b, (C,), dtype=jnp.float32) * 0.1     # Linear bias

    out = jax.block_until_ready(discriminator_forward(x, wte, wpe, w_cls, b_cls))
    ref = reference_forward(x, wte, wpe, w_cls, b_cls)

    assert out.shape == (B, C)
    assert jnp.allclose(out, ref, atol=1e-4, rtol=1e-4), (out, ref)

    print("KERNEL_OK")
</pallas_src>

<mosaic_0001>
module attributes {stable_mosaic.version = 11 : i64} {
  func.func @discriminator_kernel(%arg0: i32, %arg1: i32, %arg2: memref<8x256xi32, #tpu.memory_space<vmem>>, %arg3: memref<128x128xbf16, #tpu.memory_space<vmem>>, %arg4: memref<256x128xbf16, #tpu.memory_space<vmem>>, %arg5: memref<128x128xf32, #tpu.memory_space<vmem>>, %arg6: memref<1x128xf32, #tpu.memory_space<vmem>>, %arg7: memref<8x128xf32, #tpu.memory_space<vmem>>, %arg8: memref<8x128xf32, #tpu.memory_space<vmem>>, %arg9: memref<8x1xf32, #tpu.memory_space<vmem>>) attributes {dimension_semantics = [#tpu.dimension_semantics<parallel>, #tpu.dimension_semantics<arbitrary>], iteration_bounds = array<i64: 2, 2>, scalar_prefetch = 0 : i64, scratch_operands = 2 : i64, tpu.core_type = #tpu.core_type<tc>, window_params = [{transform_indices = @transform_0, window_bounds = array<i64: 8, 256>}, {pipeline_mode = #tpu.pipeline_mode<synchronous>, transform_indices = @transform_1, window_bounds = array<i64: 128, 128>}, {transform_indices = @transform_2, window_bounds = array<i64: 256, 128>}, {pipeline_mode = #tpu.pipeline_mode<synchronous>, transform_indices = @transform_3, window_bounds = array<i64: 128, 128>}, {pipeline_mode = #tpu.pipeline_mode<synchronous>, transform_indices = @transform_4, window_bounds = array<i64: 1, 128>}, {transform_indices = @transform_5, window_bounds = array<i64: 8, 128>}]} {
    %c0_i32 = arith.constant 0 : i32
    %0 = arith.cmpi eq, %arg1, %c0_i32 : i32
    %1 = arith.extui %0 : i1 to i32
    %c0_i32_0 = arith.constant 0 : i32
    %2 = arith.cmpi ne, %1, %c0_i32_0 : i32
    scf.if %2 {
      %cst_54 = arith.constant 0.000000e+00 : f32
      %161 = vector.broadcast %cst_54 : f32 to vector<8x128xf32>
      %c0_55 = arith.constant 0 : index
      %c0_56 = arith.constant 0 : index
      %162 = vector.load %arg8[%c0_55, %c0_56] : memref<8x128xf32, #tpu.memory_space<vmem>>, vector<8x128xf32>
      tpu.vector_store %arg8[%c0_55, %c0_56], %161 {strides = array<i32>} : memref<8x128xf32, #tpu.memory_space<vmem>>, vector<8x128xf32>,
      %cst_57 = arith.constant 0.000000e+00 : f32
      %163 = vector.broadcast %cst_57 : f32 to vector<8x1xf32>
      %c0_58 = arith.constant 0 : index
      %c0_59 = arith.constant 0 : index
      %164 = vector.load %arg9[%c0_58, %c0_59] : memref<8x1xf32, #tpu.memory_space<vmem>>, vector<8x1xf32>
      tpu.vector_store %arg9[%c0_58, %c0_59], %163 {strides = array<i32>} : memref<8x1xf32, #tpu.memory_space<vmem>>, vector<8x1xf32>,
    } else {
    }
    %c0 = arith.constant 0 : index
    %c0_1 = arith.constant 0 : index
    %3 = vector.load %arg2[%c0, %c0_1] : memref<8x256xi32, #tpu.memory_space<vmem>>, vector<8x256xi32>
    %c0_i32_2 = arith.constant 0 : i32
    %4 = vector.broadcast %c0_i32_2 : i32 to vector<8x256xi32>
    %5 = arith.cmpi ne, %3, %4 : vector<8x256xi32>
    %6 = arith.extui %5 : vector<8x256xi1> to vector<8x256xi32>
    %7 = arith.sitofp %6 : vector<8x256xi32> to vector<8x256xf32>
    %8 = tpu.iota {dimensions = array<i32: 2>} : vector<8x16x128xi32>
    %cst = arith.constant 0.000000e+00 : f32
    %9 = vector.broadcast %cst : f32 to vector<8x128xf32>
    %c0_3 = arith.constant 0 : index
    %c0_4 = arith.constant 0 : index
    %10 = vector.load %arg2[%c0_3, %c0_4] : memref<8x256xi32, #tpu.memory_space<vmem>>, vector<8x16xi32>
    %11 = vector.shape_cast %10 : vector<8x16xi32> to vector<8x16x1xi32>
    %12 = vector.broadcast %11 : vector<8x16x1xi32> to vector<8x16x128xi32>
    %13 = arith.cmpi eq, %12, %8 : vector<8x16x128xi32>
    %14 = arith.extui %13 : vector<8x16x128xi1> to vector<8x16x128xi32>
    %15 = arith.sitofp %14 : vector<8x16x128xi32> to vector<8x16x128xf32>
    %cst_5 = arith.constant dense<0.000000e+00> : vector<8x128xf32>
    %16 = vector.multi_reduction <add>, %15, %cst_5 [1] : vector<8x16x128xf32> to vector<8x128xf32>
    %17 = arith.addf %9, %16 : vector<8x128xf32>
    %c0_6 = arith.constant 0 : index
    %c16 = arith.constant 16 : index
    %18 = vector.load %arg2[%c0_6, %c16] : memref<8x256xi32, #tpu.memory_space<vmem>>, vector<8x16xi32>
    %19 = vector.shape_cast %18 : vector<8x16xi32> to vector<8x16x1xi32>
    %20 = vector.broadcast %19 : vector<8x16x1xi32> to vector<8x16x128xi32>
    %21 = arith.cmpi eq, %20, %8 : vector<8x16x128xi32>
    %22 = arith.extui %21 : vector<8x16x128xi1> to vector<8x16x128xi32>
    %23 = arith.sitofp %22 : vector<8x16x128xi32> to vector<8x16x128xf32>
    %cst_7 = arith.constant dense<0.000000e+00> : vector<8x128xf32>
    %24 = vector.multi_reduction <add>, %23, %cst_7 [1] : vector<8x16x128xf32> to vector<8x128xf32>
    %25 = arith.addf %17, %24 : vector<8x128xf32>
    %c0_8 = arith.constant 0 : index
    %c32 = arith.constant 32 : index
    %26 = vector.load %arg2[%c0_8, %c32] : memref<8x256xi32, #tpu.memory_space<vmem>>, vector<8x16xi32>
    %27 = vector.shape_cast %26 : vector<8x16xi32> to vector<8x16x1xi32>
    %28 = vector.broadcast %27 : vector<8x16x1xi32> to vector<8x16x128xi32>
    %29 = arith.cmpi eq, %28, %8 : vector<8x16x128xi32>
    %30 = arith.extui %29 : vector<8x16x128xi1> to vector<8x16x128xi32>
    %31 = arith.sitofp %30 : vector<8x16x128xi32> to vector<8x16x128xf32>
    %cst_9 = arith.constant dense<0.000000e+00> : vector<8x128xf32>
    %32 = vector.multi_reduction <add>, %31, %cst_9 [1] : vector<8x16x128xf32> to vector<8x128xf32>
    %33 = arith.addf %25, %32 : vector<8x128xf32>
    %c0_10 = arith.constant 0 : index
    %c48 = arith.constant 48 : index
    %34 = vector.load %arg2[%c0_10, %c48] : memref<8x256xi32, #tpu.memory_space<vmem>>, vector<8x16xi32>
    %35 = vector.shape_cast %34 : vector<8x16xi32> to vector<8x16x1xi32>
    %36 = vector.broadcast %35 : vector<8x16x1xi32> to vector<8x16x128xi32>
    %37 = arith.cmpi eq, %36, %8 : vector<8x16x128xi32>
    %38 = arith.extui %37 : vector<8x16x128xi1> to vector<8x16x128xi32>
    %39 = arith.sitofp %38 : vector<8x16x128xi32> to vector<8x16x128xf32>
    %cst_11 = arith.constant dense<0.000000e+00> : vector<8x128xf32>
    %40 = vector.multi_reduction <add>, %39, %cst_11 [1] : vector<8x16x128xf32> to vector<8x128xf32>
    %41 = arith.addf %33, %40 : vector<8x128xf32>
    %c0_12 = arith.constant 0 : index
    %c64 = arith.constant 64 : index
    %42 = vector.load %arg2[%c0_12, %c64] : memref<8x256xi32, #tpu.memory_space<vmem>>, vector<8x16xi32>
    %43 = vector.shape_cast %42 : vector<8x16xi32> to vector<8x16x1xi32>
    %44 = vector.broadcast %43 : vector<8x16x1xi32> to vector<8x16x128xi32>
    %45 = arith.cmpi eq, %44, %8 : vector<8x16x128xi32>
    %46 = arith.extui %45 : vector<8x16x128xi1> to vector<8x16x128xi32>
    %47 = arith.sitofp %46 : vector<8x16x128xi32> to vector<8x16x128xf32>
    %cst_13 = arith.constant dense<0.000000e+00> : vector<8x128xf32>
    %48 = vector.multi_reduction <add>, %47, %cst_13 [1] : vector<8x16x128xf32> to vector<8x128xf32>
    %49 = arith.addf %41, %48 : vector<8x128xf32>
    %c0_14 = arith.constant 0 : index
    %c80 = arith.constant 80 : index
    %50 = vector.load %arg2[%c0_14, %c80] : memref<8x256xi32, #tpu.memory_space<vmem>>, vector<8x16xi32>
    %51 = vector.shape_cast %50 : vector<8x16xi32> to vector<8x16x1xi32>
    %52 = vector.broadcast %51 : vector<8x16x1xi32> to vector<8x16x128xi32>
    %53 = arith.cmpi eq, %52, %8 : vector<8x16x128xi32>
    %54 = arith.extui %53 : vector<8x16x128xi1> to vector<8x16x128xi32>
    %55 = arith.sitofp %54 : vector<8x16x128xi32> to vector<8x16x128xf32>
    %cst_15 = arith.constant dense<0.000000e+00> : vector<8x128xf32>
    %56 = vector.multi_reduction <add>, %55, %cst_15 [1] : vector<8x16x128xf32> to vector<8x128xf32>
    %57 = arith.addf %49, %56 : vector<8x128xf32>
    %c0_16 = arith.constant 0 : index
    %c96 = arith.constant 96 : index
    %58 = vector.load %arg2[%c0_16, %c96] : memref<8x256xi32, #tpu.memory_space<vmem>>, vector<8x16xi32>
    %59 = vector.shape_cast %58 : vector<8x16xi32> to vector<8x16x1xi32>
    %60 = vector.broadcast %59 : vector<8x16x1xi32> to vector<8x16x128xi32>
    %61 = arith.cmpi eq, %60, %8 : vector<8x16x128xi32>
    %62 = arith.extui %61 : vector<8x16x128xi1> to vector<8x16x128xi32>
    %63 = arith.sitofp %62 : vector<8x16x128xi32> to vector<8x16x128xf32>
    %cst_17 = arith.constant dense<0.000000e+00> : vector<8x128xf32>
    %64 = vector.multi_reduction <add>, %63, %cst_17 [1] : vector<8x16x128xf32> to vector<8x128xf32>
    %65 = arith.addf %57, %64 : vector<8x128xf32>
    %c0_18 = arith.constant 0 : index
    %c112 = arith.constant 112 : index
    %66 = vector.load %arg2[%c0_18, %c112] : memref<8x256xi32, #tpu.memory_space<vmem>>, vector<8x16xi32>
    %67 = vector.shape_cast %66 : vector<8x16xi32> to vector<8x16x1xi32>
    %68 = vector.broadcast %67 : vector<8x16x1xi32> to vector<8x16x128xi32>
    %69 = arith.cmpi eq, %68, %8 : vector<8x16x128xi32>
    %70 = arith.extui %69 : vector<8x16x128xi1> to vector<8x16x128xi32>
    %71 = arith.sitofp %70 : vector<8x16x128xi32> to vector<8x16x128xf32>
    %cst_19 = arith.constant dense<0.000000e+00> : vector<8x128xf32>
    %72 = vector.multi_reduction <add>, %71, %cst_19 [1] : vector<8x16x128xf32> to vector<8x128xf32>
    %73 = arith.addf %65, %72 : vector<8x128xf32>
    %c0_20 = arith.constant 0 : index
    %c128 = arith.constant 128 : index
    %74 = vector.load %arg2[%c0_20, %c128] : memref<8x256xi32, #tpu.memory_space<vmem>>, vector<8x16xi32>
    %75 = vector.shape_cast %74 : vector<8x16xi32> to vector<8x16x1xi32>
    %76 = vector.broadcast %75 : vector<8x16x1xi32> to vector<8x16x128xi32>
    %77 = arith.cmpi eq, %76, %8 : vector<8x16x128xi32>
    %78 = arith.extui %77 : vector<8x16x128xi1> to vector<8x16x128xi32>
    %79 = arith.sitofp %78 : vector<8x16x128xi32> to vector<8x16x128xf32>
    %cst_21 = arith.constant dense<0.000000e+00> : vector<8x128xf32>
    %80 = vector.multi_reduction <add>, %79, %cst_21 [1] : vector<8x16x128xf32> to vector<8x128xf32>
    %81 = arith.addf %73, %80 : vector<8x128xf32>
    %c0_22 = arith.constant 0 : index
    %c144 = arith.constant 144 : index
    %82 = vector.load %arg2[%c0_22, %c144] : memref<8x256xi32, #tpu.memory_space<vmem>>, vector<8x16xi32>
    %83 = vector.shape_cast %82 : vector<8x16xi32> to vector<8x16x1xi32>
    %84 = vector.broadcast %83 : vector<8x16x1xi32> to vector<8x16x128xi32>
    %85 = arith.cmpi eq, %84, %8 : vector<8x16x128xi32>
    %86 = arith.extui %85 : vector<8x16x128xi1> to vector<8x16x128xi32>
    %87 = arith.sitofp %86 : vector<8x16x128xi32> to vector<8x16x128xf32>
    %cst_23 = arith.constant dense<0.000000e+00> : vector<8x128xf32>
    %88 = vector.multi_reduction <add>, %87, %cst_23 [1] : vector<8x16x128xf32> to vector<8x128xf32>
    %89 = arith.addf %81, %88 : vector<8x128xf32>
    %c0_24 = arith.constant 0 : index
    %c160 = arith.constant 160 : index
    %90 = vector.load %arg2[%c0_24, %c160] : memref<8x256xi32, #tpu.memory_space<vmem>>, vector<8x16xi32>
    %91 = vector.shape_cast %90 : vector<8x16xi32> to vector<8x16x1xi32>
    %92 = vector.broadcast %91 : vector<8x16x1xi32> to vector<8x16x128xi32>
    %93 = arith.cmpi eq, %92, %8 : vector<8x16x128xi32>
    %94 = arith.extui %93 : vector<8x16x128xi1> to vector<8x16x128xi32>
    %95 = arith.sitofp %94 : vector<8x16x128xi32> to vector<8x16x128xf32>
    %cst_25 = arith.constant dense<0.000000e+00> : vector<8x128xf32>
    %96 = vector.multi_reduction <add>, %95, %cst_25 [1] : vector<8x16x128xf32> to vector<8x128xf32>
    %97 = arith.addf %89, %96 : vector<8x128xf32>
    %c0_26 = arith.constant 0 : index
    %c176 = arith.constant 176 : index
    %98 = vector.load %arg2[%c0_26, %c176] : memref<8x256xi32, #tpu.memory_space<vmem>>, vector<8x16xi32>
    %99 = vector.shape_cast %98 : vector<8x16xi32> to vector<8x16x1xi32>
    %100 = vector.broadcast %99 : vector<8x16x1xi32> to vector<8x16x128xi32>
    %101 = arith.cmpi eq, %100, %8 : vector<8x16x128xi32>
    %102 = arith.extui %101 : vector<8x16x128xi1> to vector<8x16x128xi32>
    %103 = arith.sitofp %102 : vector<8x16x128xi32> to vector<8x16x128xf32>
    %cst_27 = arith.constant dense<0.000000e+00> : vector<8x128xf32>
    %104 = vector.multi_reduction <add>, %103, %cst_27 [1] : vector<8x16x128xf32> to vector<8x128xf32>
    %105 = arith.addf %97, %104 : vector<8x128xf32>
    %c0_28 = arith.constant 0 : index
    %c192 = arith.constant 192 : index
    %106 = vector.load %arg2[%c0_28, %c192] : memref<8x256xi32, #tpu.memory_space<vmem>>, vector<8x16xi32>
    %107 = vector.shape_cast %106 : vector<8x16xi32> to vector<8x16x1xi32>
    %108 = vector.broadcast %107 : vector<8x16x1xi32> to vector<8x16x128xi32>
    %109 = arith.cmpi eq, %108, %8 : vector<8x16x128xi32>
    %110 = arith.extui %109 : vector<8x16x128xi1> to vector<8x16x128xi32>
    %111 = arith.sitofp %110 : vector<8x16x128xi32> to vector<8x16x128xf32>
    %cst_29 = arith.constant dense<0.000000e+00> : vector<8x128xf32>
    %112 = vector.multi_reduction <add>, %111, %cst_29 [1] : vector<8x16x128xf32> to vector<8x128xf32>
    %113 = arith.addf %105, %112 : vector<8x128xf32>
    %c0_30 = arith.constant 0 : index
    %c208 = arith.constant 208 : index
    %114 = vector.load %arg2[%c0_30, %c208] : memref<8x256xi32, #tpu.memory_space<vmem>>, vector<8x16xi32>
    %115 = vector.shape_cast %114 : vector<8x16xi32> to vector<8x16x1xi32>
    %116 = vector.broadcast %115 : vector<8x16x1xi32> to vector<8x16x128xi32>
    %117 = arith.cmpi eq, %116, %8 : vector<8x16x128xi32>
    %118 = arith.extui %117 : vector<8x16x128xi1> to vector<8x16x128xi32>
    %119 = arith.sitofp %118 : vector<8x16x128xi32> to vector<8x16x128xf32>
    %cst_31 = arith.constant dense<0.000000e+00> : vector<8x128xf32>
    %120 = vector.multi_reduction <add>, %119, %cst_31 [1] : vector<8x16x128xf32> to vector<8x128xf32>
    %121 = arith.addf %113, %120 : vector<8x128xf32>
    %c0_32 = arith.constant 0 : index
    %c224 = arith.constant 224 : index
    %122 = vector.load %arg2[%c0_32, %c224] : memref<8x256xi32, #tpu.memory_space<vmem>>, vector<8x16xi32>
    %123 = vector.shape_cast %122 : vector<8x16xi32> to vector<8x16x1xi32>
    %124 = vector.broadcast %123 : vector<8x16x1xi32> to vector<8x16x128xi32>
    %125 = arith.cmpi eq, %124, %8 : vector<8x16x128xi32>
    %126 = arith.extui %125 : vector<8x16x128xi1> to vector<8x16x128xi32>
    %127 = arith.sitofp %126 : vector<8x16x128xi32> to vector<8x16x128xf32>
    %cst_33 = arith.constant dense<0.000000e+00> : vector<8x128xf32>
    %128 = vector.multi_reduction <add>, %127, %cst_33 [1] : vector<8x16x128xf32> to vector<8x128xf32>
    %129 = arith.addf %121, %128 : vector<8x128xf32>
    %c0_34 = arith.constant 0 : index
    %c240 = arith.constant 240 : index
    %130 = vector.load %arg2[%c0_34, %c240] : memref<8x256xi32, #tpu.memory_space<vmem>>, vector<8x16xi32>
    %131 = vector.shape_cast %130 : vector<8x16xi32> to vector<8x16x1xi32>
    %132 = vector.broadcast %131 : vector<8x16x1xi32> to vector<8x16x128xi32>
    %133 = arith.cmpi eq, %132, %8 : vector<8x16x128xi32>
    %134 = arith.extui %133 : vector<8x16x128xi1> to vector<8x16x128xi32>
    %135 = arith.sitofp %134 : vector<8x16x128xi32> to vector<8x16x128xf32>
    %cst_35 = arith.constant dense<0.000000e+00> : vector<8x128xf32>
    %136 = vector.multi_reduction <add>, %135, %cst_35 [1] : vector<8x16x128xf32> to vector<8x128xf32>
    %137 = arith.addf %129, %136 : vector<8x128xf32>
    %138 = tpu.iota {dimensions = array<i32: 1>} : vector<8x128xi32>
    %c0_i32_36 = arith.constant 0 : i32
    %139 = vector.broadcast %c0_i32_36 : i32 to vector<8x128xi32>
    %140 = arith.cmpi eq, %138, %139 : vector<8x128xi32>
    %cst_37 = arith.constant 0.000000e+00 : f32
    %141 = vector.broadcast %cst_37 : f32 to vector<8x128xf32>
    %142 = arith.select %140, %141, %137 : vector<8x128xi1>, vector<8x128xf32>
    %c0_38 = arith.constant 0 : index
    %c0_39 = arith.constant 0 : index
    %143 = vector.load %arg8[%c0_38, %c0_39] : memref<8x128xf32, #tpu.memory_space<vmem>>, vector<8x128xf32>
    %144 = arith.truncf %142 : vector<8x128xf32> to vector<8x128xbf16>
    %c0_40 = arith.constant 0 : index
    %c0_41 = arith.constant 0 : index
    %145 = vector.load %arg3[%c0_40, %c0_41] : memref<128x128xbf16, #tpu.memory_space<vmem>>, vector<128x128xbf16>
    %cst_42 = arith.constant dense<0.000000e+00> : vector<8x128xf32>
    %146 = tpu.matmul %144, %145, %cst_42 {dimension_numbers = #tpu.dot_dimension_numbers<[1], [0], [0], [1], [0, 0, 1, 1], [], []>} : vector<8x128xbf16>, vector<128x128xbf16>, vector<8x128xf32> -> vector<8x128xf32>
    %147 = arith.truncf %7 : vector<8x256xf32> to vector<8x256xbf16>
    %c0_43 = arith.constant 0 : index
    %c0_44 = arith.constant 0 : index
    %148 = vector.load %arg4[%c0_43, %c0_44] : memref<256x128xbf16, #tpu.memory_space<vmem>>, vector<256x128xbf16>
    %cst_45 = arith.constant dense<0.000000e+00> : vector<8x128xf32>
    %149 = tpu.matmul %147, %148, %cst_45 {dimension_numbers = #tpu.dot_dimension_numbers<[1], [0], [0], [1], [0, 0, 1, 1], [], []>} : vector<8x256xbf16>, vector<256x128xbf16>, vector<8x128xf32> -> vector<8x128xf32>
    %150 = arith.addf %146, %149 : vector<8x128xf32>
    %151 = arith.addf %143, %150 : vector<8x128xf32>
    %c0_46 = arith.constant 0 : index
    %c0_47 = arith.constant 0 : index
    %152 = vector.load %arg8[%c0_46, %c0_47] : memref<8x128xf32, #tpu.memory_space<vmem>>, vector<8x128xf32>
    tpu.vector_store %arg8[%c0_46, %c0_47], %151 {strides = array<i32>} : memref<8x128xf32, #tpu.memory_space<vmem>>, vector<8x128xf32>,
    %c0_48 = arith.constant 0 : index
    %c0_49 = arith.constant 0 : index
    %153 = vector.load %arg9[%c0_48, %c0_49] : memref<8x1xf32, #tpu.memory_space<vmem>>, vector<8x1xf32>
    %cst_50 = arith.constant dense<0.000000e+00> : vector<8xf32>
    %154 = vector.multi_reduction <add>, %7, %cst_50 [1] : vector<8x256xf32> to vector<8xf32>
    %155 = vector.shape_cast %154 : vector<8xf32> to vector<8x1xf32>
    %156 = arith.addf %153, %155 : vector<8x1xf32>
    %c0_51 = arith.constant 0 : index
    %c0_52 = arith.constant 0 : index
    %157 = vector.load %arg9[%c0_51, %c0_52] : memref<8x1xf32, #tpu.memory_space<vmem>>, vector<8x1xf32>
    tpu.vector_store %arg9[%c0_51, %c0_52], %156 {strides = array<i32>} : memref<8x1xf32, #tpu.memory_space<vmem>>, vector<8x1xf32>,
    %c1_i32 = arith.constant 1 : i32
    %158 = arith.cmpi eq, %arg1, %c1_i32 : i32
    %159 = arith.extui %158 : i1 to i32
    %c0_i32_53 = arith.constant 0 : i32
    %160 = arith.cmpi ne, %159, %c0_i32_53 : i32
    scf.if %160 {
      %c0_54 = arith.constant 0 : index
      %c0_55 = arith.constant 0 : index
      %161 = vector.load %arg9[%c0_54, %c0_55] : memref<8x1xf32, #tpu.memory_space<vmem>>, vector<8x1xf32>
      %cst_56 = arith.constant 1.000000e-10 : f32
      %162 = vector.broadcast %cst_56 : f32 to vector<8x1xf32>
      %163 = arith.addf %161, %162 : vector<8x1xf32>
      %c0_57 = arith.constant 0 : index
      %c0_58 = arith.constant 0 : index
      %164 = vector.load %arg8[%c0_57, %c0_58] : memref<8x128xf32, #tpu.memory_space<vmem>>, vector<8x128xf32>
      %165 = vector.broadcast %163 : vector<8x1xf32> to vector<8x128xf32>
      %166 = arith.divf %164, %165 : vector<8x128xf32>
      %c0_59 = arith.constant 0 : index
      %c0_60 = arith.constant 0 : index
      %167 = vector.load %arg5[%c0_59, %c0_60] : memref<128x128xf32, #tpu.memory_space<vmem>>, vector<128x128xf32>
      %cst_61 = arith.constant dense<0.000000e+00> : vector<8x128xf32>
      %168 = tpu.matmul %166, %167, %cst_61 {dimension_numbers = #tpu.dot_dimension_numbers<[1], [0], [0], [1], [0, 0, 1, 1], [], []>} : vector<8x128xf32>, vector<128x128xf32>, vector<8x128xf32> -> vector<8x128xf32>
      %c0_62 = arith.constant 0 : index
      %c0_63 = arith.constant 0 : index
      %169 = vector.load %arg6[%c0_62, %c0_63] : memref<1x128xf32, #tpu.memory_space<vmem>>, vector<1x128xf32>
      %170 = vector.broadcast %169 : vector<1x128xf32> to vector<8x128xf32>
      %171 = arith.addf %168, %170 : vector<8x128xf32>
      %172 = tpu.iota {dimensions = array<i32: 1>} : vector<8x128xi32>
      %c4_i32 = arith.constant 4 : i32
      %173 = vector.broadcast %c4_i32 : i32 to vector<8x128xi32>
      %174 = arith.cmpi slt, %172, %173 : vector<8x128xi32>
      %cst_64 = arith.constant -1.000000e+30 : f32
      %175 = vector.broadcast %cst_64 : f32 to vector<8x128xf32>
      %176 = arith.select %174, %171, %175 : vector<8x128xi1>, vector<8x128xf32>
      %cst_65 = arith.constant dense<0xFF800000> : vector<8xf32>
      %177 = vector.multi_reduction <maximumf>, %176, %cst_65 [1] : vector<8x128xf32> to vector<8xf32>
      %178 = vector.shape_cast %177 : vector<8xf32> to vector<8x1xf32>
      %179 = vector.broadcast %178 : vector<8x1xf32> to vector<8x128xf32>
      %180 = arith.subf %176, %179 : vector<8x128xf32>
      %181 = math.exp %180 : vector<8x128xf32>
      %cst_66 = arith.constant dense<0.000000e+00> : vector<8xf32>
      %182 = vector.multi_reduction <add>, %181, %cst_66 [1] : vector<8x128xf32> to vector<8xf32>
      %183 = vector.shape_cast %182 : vector<8xf32> to vector<8x1xf32>
      %184 = math.log %183 : vector<8x1xf32>
      %185 = arith.addf %178, %184 : vector<8x1xf32>
      %186 = vector.broadcast %185 : vector<8x1xf32> to vector<8x128xf32>
      %187 = arith.subf %176, %186 : vector<8x128xf32>
      %c0_67 = arith.constant 0 : index
      %c0_68 = arith.constant 0 : index
      %188 = vector.load %arg7[%c0_67, %c0_68] : memref<8x128xf32, #tpu.memory_space<vmem>>, vector<8x128xf32>
      tpu.vector_store %arg7[%c0_67, %c0_68], %187 {strides = array<i32>} : memref<8x128xf32, #tpu.memory_space<vmem>>, vector<8x128xf32>,
    } else {
    }
    return
  }
  func.func @transform_0(%arg0: i32, %arg1: i32) -> (i32, i32) {
    %c0_i32 = arith.constant 0 : i32
    return %arg0, %arg1 : i32, i32
  }
  func.func @transform_1(%arg0: i32, %arg1: i32) -> (i32, i32) {
    %c0_i32 = arith.constant 0 : i32
    %c0_i32_0 = arith.constant 0 : i32
    %c0_i32_1 = arith.constant 0 : i32
    return %c0_i32, %c0_i32_0 : i32, i32
  }
  func.func @transform_2(%arg0: i32, %arg1: i32) -> (i32, i32) {
    %c0_i32 = arith.constant 0 : i32
    %c0_i32_0 = arith.constant 0 : i32
    return %arg1, %c0_i32 : i32, i32
  }
  func.func @transform_3(%arg0: i32, %arg1: i32) -> (i32, i32) {
    %c0_i32 = arith.constant 0 : i32
    %c0_i32_0 = arith.constant 0 : i32
    %c0_i32_1 = arith.constant 0 : i32
    return %c0_i32, %c0_i32_0 : i32, i32
  }
  func.func @transform_4(%arg0: i32, %arg1: i32) -> (i32, i32) {
    %c0_i32 = arith.constant 0 : i32
    %c0_i32_0 = arith.constant 0 : i32
    %c0_i32_1 = arith.constant 0 : i32
    return %c0_i32, %c0_i32_0 : i32, i32
  }
  func.func @transform_5(%arg0: i32, %arg1: i32) -> (i32, i32) {
    %c0_i32 = arith.constant 0 : i32
    %c0_i32_0 = arith.constant 0 : i32
    return %arg0, %c0_i32 : i32, i32
  }
}

</mosaic_0001>

<llo_original>
// kernel: tpu_custom_call.1
$region0: #{tpu_custom_call.1}
  #allocation0 [shape = 'u32[]', space=smem, size = 0x4, offset = 0x4, fixed_abs, tag = 'smem constant byte address 0x4 - core index']
  #allocation1 [shape = 'u32[72,128]{1,0:T(1,128)}', space=vmem, size = 0x9000, scoped, tag = 'internal scratch']
  #allocation2 [shape = 'f32[8,128]{1,0:T(8,128)}', space=vmem, size = 0x1000, scoped, tag = 'scratch operand']
  #allocation3 [shape = 'f32[8,1]{1,0:T(8,128)}', space=vmem, size = 0x1000, scoped, tag = 'scratch operand']
  %s0 = inlined_call_operand.hbm [shape: s32[16,512], index: 0, kind: input, shape index: {}]
  %s1 = inlined_call_operand.hbm [shape: bf16[128,128], index: 1, kind: input, shape index: {}]
  %s2 = inlined_call_operand.hbm [shape: bf16[512,128], index: 2, kind: input, shape index: {}]
  %s3 = inlined_call_operand.hbm [shape: f32[128,128], index: 3, kind: input, shape index: {}]
  %s4 = inlined_call_operand.vmem [shape: f32[1,128], index: 4, kind: input, shape index: {}]
  %s5 = inlined_call_operand.hbm [shape: f32[16,128], index: 5, kind: output, shape index: {}]
  %s6 = sld [smem:[#allocation0]]
  $region77: #{tpu_custom_call.1} parent=0
    _
  %s8 = ssub.s32 1, %s6
  %s9 = scalar_select 0, %s8, %s6
  $region1: #{tpu_custom_call.1} parent=0
    #allocation4 [shape = 'u8[16384]{0}', space=vmem, size = 0x4000, scoped, tag = 'input window, operand 0']
    #allocation5 [shape = 's32[2]{0}', space=sflag, size = 0x8, scoped, tag = 'scoped memory for tpu_custom_call.1']
    #allocation6 [shape = 's32[2]{0}', space=sflag, size = 0x8, scoped, tag = 'scoped memory for tpu_custom_call.1']
    #allocation7 [shape = 'u8[32768]{0}', space=vmem, size = 0x8000, scoped, tag = 'input window, operand 1, single buffered']
    #allocation8 [shape = 's32[1]{0}', space=sflag, size = 0x4, scoped, tag = 'scoped memory for tpu_custom_call.1']
    #allocation9 [shape = 'u8[131072]{0}', space=vmem, size = 0x20000, scoped, tag = 'input window, operand 2']
    #allocation10 [shape = 'u8[65536]{0}', space=vmem, size = 0x10000, scoped, tag = 'input window, operand 3, single buffered']
    #allocation11 [shape = 'u8[8192]{0}', space=vmem, size = 0x2000, scoped, tag = 'output window, operand 0']
    %10 = vsyncpa [#allocation5], 0
    %s11 = scalar_lea.sflag [#allocation5], 1
    %12 = vsyncpa %s11, 0
    %13 = vsyncpa [#allocation8], 0
    %14 = vsyncpa [#allocation6], 0
    %s15 = scalar_lea.sflag [#allocation6], 1
    %16 = vsyncpa %s15, 0
    loop: start=0, step=1, limit=6
    $region2: #{tpu_custom_call.1} parent=1 // loop_pre_header
      _
    $region3: #{tpu_custom_call.1} parent=1 // loop_header
      %s18 = sphi 0, %s22
      %p19 = scmp.ge.s32.totalorder %s18, 6
      %s25 = sphi 0, %s37
      %s26 = sphi 0, %s33
      %s27 = sphi 0, %s25
      %s28 = sphi 0, %s26
      %s29 = sphi 0, %s27
      %s30 = sphi 0, %s28
      %s42 = sphi 0, %s44
      %s45 = sphi 0, %s42
      %s46 = sphi 0, %s45
      %s62 = sphi 0, %s46
      %s66 = sphi 0, %s66
      %s68 = sphi 0, %s66
      %s69 = sphi 0, %s68
      %s83 = sphi 0, %s69
      %s89 = sphi 0, %s91
      %s92 = sphi 0, %s89
      %s93 = sphi 0, %s92
      %s109 = sphi 0, %s93
      %s113 = sphi 0, %s113
      %s115 = sphi 0, %s113
      %s116 = sphi 0, %s115
      %s130 = sphi 0, %s116
      %s134 = sphi 0, %s134
      %s136 = sphi 0, %s134
      %s137 = sphi 0, %s136
      %s151 = sphi 0, %s137
      %s157 = sphi 0, %s159
      %s160 = sphi 0, %s157
      %s161 = sphi 0, %s160
      %s177 = sphi 0, %s161
    $region4: #{tpu_custom_call.1} parent=1 // loop_header_branch
      %21 = sbr.rel (%p19) target = $region8
    $region5: #{tpu_custom_call.1} parent=1 // loop_body
      %s23 = ssub.s32 %s18, 1
      %s24 = ssub.s32 %s18, 2
      %s31 = sadd.s32 1, %s26
      %p32 = scmp.ge.s32.totalorder %s31, 2
      %s33 = scalar_select %p32, 0, %s31
      %s34 = sadd.s32 1, %s25
      %s35 = scalar_select %p32, %s34, %s25
      %p36 = scmp.ge.s32.totalorder %s35, 2
      %s37 = scalar_select %p36, 0, %s35
      %s38 = ssub.s32 %s25, %s37
      %s39 = ssub.s32 %s26, %s33
      %s40 = sor.u32 %s38, %s39
      %p41 = scmp.eq.s32.totalorder %s40, 0
      %s43 = sadd.s32 %s42, 1
      %s44 = scalar_select %p41, %s42, %s43
      %p47 = pneg %p41
      %p48 = scmp.eq.s32.totalorder %s18, 3
      %p49 = por %p47, %p48
      %p50 = scmp.ne.s32.totalorder %s42, %s45
      %p51 = scmp.eq.s32.totalorder %s18, 0
      %p52 = por %p50, %p51
      %p53 = scmp.ne.s32.totalorder %s42, %s45
      %p54 = scmp.eq.s32.totalorder %s23, 3
      %p55 = por %p53, %p54
      %p56 = scmp.ne.s32.totalorder %s45, %s46
      %p57 = scmp.eq.s32.totalorder %s23, 0
      %p58 = por %p56, %p57
      %p59 = scmp.ne.s32.totalorder %s45, %s46
      %p60 = scmp.eq.s32.totalorder %s24, 3
      %p61 = por %p59, %p60
      %p63 = scmp.ne.s32.totalorder %s46, %s62
      %p64 = scmp.eq.s32.totalorder %s24, 0
      %p65 = por %p63, %p64
      %s67 = sadd.s32 %s66, 1
      %p70 = scmp.eq.s32.totalorder %s18, 3
      %p71 = scmp.ne.s32.totalorder %s66, %s68
      %p72 = scmp.eq.s32.totalorder %s18, 0
      %p73 = por %p71, %p72
      %p74 = scmp.ne.s32.totalorder %s66, %s68
      %p75 = scmp.eq.s32.totalorder %s23, 3
      %p76 = por %p74, %p75
      %p77 = scmp.ne.s32.totalorder %s68, %s69
      %p78 = scmp.eq.s32.totalorder %s23, 0
      %p79 = por %p77, %p78
      %p80 = scmp.ne.s32.totalorder %s68, %s69
      %p81 = scmp.eq.s32.totalorder %s24, 3
      %p82 = por %p80, %p81
      %p84 = scmp.ne.s32.totalorder %s69, %s83
      %p85 = scmp.eq.s32.totalorder %s24, 0
      %p86 = por %p84, %p85
      %s87 = ssub.s32 %s26, %s33
      %p88 = scmp.eq.s32.totalorder %s87, 0
      %s90 = sadd.s32 %s89, 1
      %s91 = scalar_select %p88, %s89, %s90
      %p94 = pneg %p88
      %p95 = scmp.eq.s32.totalorder %s18, 3
      %p96 = por %p94, %p95
      %p97 = scmp.ne.s32.totalorder %s89, %s92
      %p98 = scmp.eq.s32.totalorder %s18, 0
      %p99 = por %p97, %p98
      %p100 = scmp.ne.s32.totalorder %s89, %s92
      %p101 = scmp.eq.s32.totalorder %s23, 3
      %p102 = por %p100, %p101
      %p103 = scmp.ne.s32.totalorder %s92, %s93
      %p104 = scmp.eq.s32.totalorder %s23, 0
      %p105 = por %p103, %p104
      %p106 = scmp.ne.s32.totalorder %s92, %s93
      %p107 = scmp.eq.s32.totalorder %s24, 3
      %p108 = por %p106, %p107
      %p110 = scmp.ne.s32.totalorder %s93, %s109
      %p111 = scmp.eq.s32.totalorder %s24, 0
      %p112 = por %p110, %p111
      %s114 = sadd.s32 %s113, 1
      %p117 = scmp.eq.s32.totalorder %s18, 3
      %p118 = scmp.ne.s32.totalorder %s113, %s115
      %p119 = scmp.eq.s32.totalorder %s18, 0
      %p120 = por %p118, %p119
      %p121 = scmp.ne.s32.totalorder %s113, %s115
      %p122 = scmp.eq.s32.totalorder %s23, 3
      %p123 = por %p121, %p122
      %p124 = scmp.ne.s32.totalorder %s115, %s116
      %p125 = scmp.eq.s32.totalorder %s23, 0
      %p126 = por %p124, %p125
      %p127 = scmp.ne.s32.totalorder %s115, %s116
      %p128 = scmp.eq.s32.totalorder %s24, 3
      %p129 = por %p127, %p128
      %p131 = scmp.ne.s32.totalorder %s116, %s130
      %p132 = scmp.eq.s32.totalorder %s24, 0
      %p133 = por %p131, %p132
      %s135 = sadd.s32 %s134, 1
      %p138 = scmp.eq.s32.totalorder %s18, 3
      %p139 = scmp.ne.s32.totalorder %s134, %s136
      %p140 = scmp.eq.s32.totalorder %s18, 0
      %p141 = por %p139, %p140
      %p142 = scmp.ne.s32.totalorder %s134, %s136
      %p143 = scmp.eq.s32.totalorder %s23, 3
      %p144 = por %p142, %p143
      %p145 = scmp.ne.s32.totalorder %s136, %s137
      %p146 = scmp.eq.s32.totalorder %s23, 0
      %p147 = por %p145, %p146
      %p148 = scmp.ne.s32.totalorder %s136, %s137
      %p149 = scmp.eq.s32.totalorder %s24, 3
      %p150 = por %p148, %p149
      %p152 = scmp.ne.s32.totalorder %s137, %s151
      %p153 = scmp.eq.s32.totalorder %s24, 0
      %p154 = por %p152, %p153
      %s155 = ssub.s32 %s25, %s37
      %p156 = scmp.eq.s32.totalorder %s155, 0
      %s158 = sadd.s32 %s157, 1
      %s159 = scalar_select %p156, %s157, %s158
      %p162 = pneg %p156
      %p163 = scmp.eq.s32.totalorder %s18, 3
      %p164 = por %p162, %p163
      %p165 = scmp.ne.s32.totalorder %s157, %s160
      %p166 = scmp.eq.s32.totalorder %s18, 0
      %p167 = por %p165, %p166
      %p168 = scmp.ne.s32.totalorder %s157, %s160
      %p169 = scmp.eq.s32.totalorder %s23, 3
      %p170 = por %p168, %p169
      %p171 = scmp.ne.s32.totalorder %s160, %s161
      %p172 = scmp.eq.s32.totalorder %s23, 0
      %p173 = por %p171, %p172
      %p174 = scmp.ne.s32.totalorder %s160, %s161
      %p175 = scmp.eq.s32.totalorder %s24, 3
      %p176 = por %p174, %p175
      %p178 = scmp.ne.s32.totalorder %s161, %s177
      %p179 = scmp.eq.s32.totalorder %s24, 0
      %p180 = por %p178, %p179
      %p181 = scmp.le.s32.totalorder 1, %s18
      %p182 = scmp.lt.s32.totalorder %s18, 5
      %p183 = pnand %p181, %p182
      %p184 = pneg %p183
      // Predicated region
      $region9: #{tpu_custom_call.1} parent=5 // pred_check
        _
      $region10: #{tpu_custom_call.1} parent=5 // pred_check_branch
        %186 = sbr.rel (%p183) target = $region12
      $region11: #{tpu_custom_call.1} parent=5 // pred_region
        %s187 = ssub.s32 %s18, 1
        // Predicated region
        $region13: #{tpu_custom_call.1} parent=11 // pred_check
          %p188 = pneg %p79
        $region14: #{tpu_custom_call.1} parent=11 // pred_check_branch
          %190 = sbr.rel (%p188) target = $region16
        $region15: #{tpu_custom_call.1} parent=11 // pred_region
          %192 = vsyncadd [#allocation8], 0
          %s193 = sshll.u32 %s1, 4
          %s194 = int_to_ptr.hbm [resolvable:$true] %s193
          %s195 = sshll.u32 [#allocation7], 4
          %s196 = int_to_ptr.vmem [resolvable:$true] %s195
          %201 = dma.hbm_to_vmem [thread:$0]  %s194, 1024, %s196, [#allocation8], 64, 64, 4
        $region16: #{tpu_custom_call.1} parent=11 // pred_fallthru
          _
        // Predicated region
        $region17: #{tpu_custom_call.1} parent=11 // pred_check
          %p202 = pneg %p126
        $region18: #{tpu_custom_call.1} parent=11 // pred_check_branch
          %204 = sbr.rel (%p202) target = $region20
        $region19: #{tpu_custom_call.1} parent=11 // pred_region
          %206 = vsyncadd [#allocation8], 0
          %s207 = sshll.u32 %s3, 4
          %s208 = int_to_ptr.hbm [resolvable:$true] %s207
          %s209 = sshll.u32 [#allocation10], 4
          %s210 = int_to_ptr.vmem [resolvable:$true] %s209
          %215 = dma.hbm_to_vmem [thread:$0]  %s208, 2048, %s210, [#allocation8], 128, 128, 8
        $region20: #{tpu_custom_call.1} parent=11 // pred_fallthru
          _
        // Predicated region
        $region21: #{tpu_custom_call.1} parent=11 // pred_check
          %p216 = pneg %p147
        $region22: #{tpu_custom_call.1} parent=11 // pred_check_branch
          %218 = sbr.rel (%p216) target = $region24
        $region23: #{tpu_custom_call.1} parent=11 // pred_region
          _
        $region24: #{tpu_custom_call.1} parent=11 // pred_fallthru
          _
      $region12: #{tpu_custom_call.1} parent=5 // pred_fallthru
        _
      %p219 = scmp.lt.s32.totalorder %s18, 4
      // Predicated region
      $region25: #{tpu_custom_call.1} parent=5 // pred_check
        %p220 = pneg %p219
      $region26: #{tpu_custom_call.1} parent=5 // pred_check_branch
        %222 = sbr.rel (%p220) target = $region28
      $region27: #{tpu_custom_call.1} parent=5 // pred_region
        // Predicated region
        $region29: #{tpu_custom_call.1} parent=27 // pred_check
          %p223 = pneg %p52
        $region30: #{tpu_custom_call.1} parent=27 // pred_check_branch
          %225 = sbr.rel (%p223) target = $region32
        $region31: #{tpu_custom_call.1} parent=27 // pred_region
          %s226 = sand.u32 %s18, 1
          %s227 = scalar_lea.sflag [#allocation5], %s226
          %s228 = sand.u32 %s42, 1
          %s229 = smul.addr %s228, 16
          %s230 = scalar_lea.vmem [#allocation4], %s229
          %s231 = smul.u32 2, %s26
          %233 = vsyncadd %s227, 0
          %s234 = smul.addr %s25, 4
          %s235 = sadd.s32 %s231, %s234
          %s236 = smul.addr %s235, 8
          %s237 = scalar_lea.hbm %s0, %s236
          %s239 = sshll.u32 %s237, 4
          %s240 = int_to_ptr.hbm [resolvable:$true] %s239
          %s241 = sshll.u32 %s230, 4
          %s242 = int_to_ptr.vmem [resolvable:$true] %s241
          %244 = dma.hbm_to_vmem [thread:$0]  %s240, 256, %s242, %s227
        $region32: #{tpu_custom_call.1} parent=27 // pred_fallthru
          _
        // Predicated region
        $region33: #{tpu_custom_call.1} parent=27 // pred_check
          %p245 = pneg %p99
        $region34: #{tpu_custom_call.1} parent=27 // pred_check_branch
          %247 = sbr.rel (%p245) target = $region36
        $region35: #{tpu_custom_call.1} parent=27 // pred_region
          %s248 = sand.u32 %s18, 1
          %s249 = scalar_lea.sflag [#allocation5], %s248
          %s250 = sand.u32 %s89, 1
          %s251 = smul.addr %s250, 128
          %s252 = scalar_lea.vmem [#allocation9], %s251
          %s253 = smul.u32 32, %s26
          %255 = vsyncadd %s249, 0
          %s256 = smul.addr %s253, 4
          %s257 = scalar_lea.hbm %s2, %s256
          %s258 = sshll.u32 %s257, 4
          %s259 = int_to_ptr.hbm [resolvable:$true] %s258
          %s260 = sshll.u32 %s252, 4
          %s261 = int_to_ptr.vmem [resolvable:$true] %s260
          %266 = dma.hbm_to_vmem [thread:$0]  %s259, 2048, %s261, %s249, 64, 64, 4
        $region36: #{tpu_custom_call.1} parent=27 // pred_fallthru
          _
      $region28: #{tpu_custom_call.1} parent=5 // pred_fallthru
        _
      %p267 = scmp.le.s32.totalorder 1, %s18
      %p268 = scmp.lt.s32.totalorder %s18, 5
      %p269 = pnand %p267, %p268
      %p270 = pneg %p269
      // Predicated region
      $region37: #{tpu_custom_call.1} parent=5 // pred_check
        _
      $region38: #{tpu_custom_call.1} parent=5 // pred_check_branch
        %272 = sbr.rel (%p269) target = $region40
      $region39: #{tpu_custom_call.1} parent=5 // pred_region
        %s273 = ssub.s32 %s18, 1
        %s274 = sand.u32 %s23, 1
        %s275 = scalar_lea.sflag [#allocation5], %s274
        %s276 = sand.u32 %s45, 1
        %s277 = smul.addr %s276, 16
        %s278 = scalar_lea.vmem [#allocation4], %s277
        // Predicated region
        $region41: #{tpu_custom_call.1} parent=39 // pred_check
          %p279 = pneg %p58
        $region42: #{tpu_custom_call.1} parent=39 // pred_check_branch
          %281 = sbr.rel (%p279) target = $region44
        $region43: #{tpu_custom_call.1} parent=39 // pred_region
          %283 = dma.done %s275, 256
        $region44: #{tpu_custom_call.1} parent=39 // pred_fallthru
          _
        // Predicated region
        $region45: #{tpu_custom_call.1} parent=39 // pred_check
          %p284 = pneg %p79
        $region46: #{tpu_custom_call.1} parent=39 // pred_check_branch
          %286 = sbr.rel (%p284) target = $region48
        $region47: #{tpu_custom_call.1} parent=39 // pred_region
          %288 = dma.done [#allocation8], 1024
        $region48: #{tpu_custom_call.1} parent=39 // pred_fallthru
          _
        %s289 = sand.u32 %s23, 1
        %s290 = scalar_lea.sflag [#allocation5], %s289
        %s291 = sand.u32 %s92, 1
        %s292 = smul.addr %s291, 128
        %s293 = scalar_lea.vmem [#allocation9], %s292
        // Predicated region
        $region49: #{tpu_custom_call.1} parent=39 // pred_check
          %p294 = pneg %p105
        $region50: #{tpu_custom_call.1} parent=39 // pred_check_branch
          %296 = sbr.rel (%p294) target = $region52
        $region51: #{tpu_custom_call.1} parent=39 // pred_region
          %298 = dma.done %s290, 2048
        $region52: #{tpu_custom_call.1} parent=39 // pred_fallthru
          _
        // Predicated region
        $region53: #{tpu_custom_call.1} parent=39 // pred_check
          %p299 = pneg %p126
        $region54: #{tpu_custom_call.1} parent=39 // pred_check_branch
          %301 = sbr.rel (%p299) target = $region56
        $region55: #{tpu_custom_call.1} parent=39 // pred_region
          %303 = dma.done [#allocation8], 2048
        $region56: #{tpu_custom_call.1} parent=39 // pred_fallthru
          _
        %s304 = sand.u32 %s23, 1
        %s305 = scalar_lea.sflag [#allocation5], %s304
        %s306 = sand.u32 %s45, 1
        %s307 = smul.addr %s306, 16
        %s308 = scalar_lea.vmem [#allocation4], %s307
        %p309 = pneg %p58
        %p310 = pneg %p55
        %p311 = pneg %p79
        %p312 = pneg %p76
        %s313 = sand.u32 %s23, 1
        %s314 = scalar_lea.sflag [#allocation5], %s313
        %s315 = sand.u32 %s92, 1
        %s316 = smul.addr %s315, 128
        %s317 = scalar_lea.vmem [#allocation9], %s316
        %p318 = pneg %p105
        %p319 = pneg %p102
        %p320 = pneg %p126
        %p321 = pneg %p123
        %p322 = pneg %p147
        %p323 = pneg %p144
        %p324 = pneg %p173
        %p325 = pneg %p170
        %s326 = sand.u32 %s160, 1
        %s327 = scalar_lea.sflag [#allocation6], %s326
        %s328 = sand.u32 %s160, 1
        %s329 = smul.addr %s328, 8
        %s330 = scalar_lea.vmem [#allocation11], %s329
        %s331 = smul.u32 2, %s28
        %s332 = smul.u32 32, %s28
        %p333 = scmp.eq.s32.totalorder %s28, 0
        // Predicated region
        $region57: #{tpu_custom_call.1} parent=39 // pred_check
          %p334 = pneg %p333
        $region58: #{tpu_custom_call.1} parent=39 // pred_check_branch
          %336 = sbr.rel (%p334) target = $region60
        $region59: #{tpu_custom_call.1} parent=39 // pred_region
          %337 = vst [vmem:[#allocation2] sm:$0xff] 0.0
          %vm338 = vcmask 7168
          %339 = vst.msk [vmem:[#allocation3] sm:$0xff] %vm338, 0.0
        $region60: #{tpu_custom_call.1} parent=39 // pred_fallthru
          _
        %v340 = vld [vmem:[%s278] sm:$0xff]
        %v341 = vld [vmem:[%s278 + $0x8] sm:$0xff]
        %vm342 = vcmp.ne.s32.totalorder %v340, 0
        %vm343 = vcmp.ne.s32.totalorder %v341, 0
        %v344 = vsel %vm342, 1, 0
        %v345 = vsel %vm343, 1, 0
        %v346 = vcvt.s32.f32 %v344
        %v347 = vcvt.s32.f32 %v345
        %v348 = vlaneseq
        %v349 = vand.u32 %v348, 127
        %v350 = vld [vmem:[%s278] sm:$0xff]
        %v351 = vperm.slane %v350, 0
        %v352 = vlaneseq
        %v353 = vshrl.u32 %v352, 7
        %355 = vset.pattern.permute.xlu0 %v353
        %356 = vperm.xlu0 %355, %v351
        %v357 = vpop.permute.xlu0 %356
        %v358 = vlaneseq
        %v359 = vshrl.u32 %v358, 7
        %v360 = vadd.s32 %v359, 8
        %361 = vset.pattern.permute.xlu0 %v360
        %362 = vperm.xlu0 %361, %v351
        %v363 = vpop.permute.xlu0 %362
        %v364 = vperm.slane %v350, 1
        %v365 = vlaneseq
        %v366 = vshrl.u32 %v365, 7
        %368 = vset.pattern.permute.xlu0 %v366
        %369 = vperm.xlu0 %368, %v364
        %v370 = vpop.permute.xlu0 %369
        %v371 = vlaneseq
        %v372 = vshrl.u32 %v371, 7
        %v373 = vadd.s32 %v372, 8
        %374 = vset.pattern.permute.xlu0 %v373
        %375 = vperm.xlu0 %374, %v364
        %v376 = vpop.permute.xlu0 %375
        %v377 = vperm.slane %v350, 2
        %v378 = vlaneseq
        %v379 = vshrl.u32 %v378, 7
        %381 = vset.pattern.permute.xlu0 %v379
        %382 = vperm.xlu0 %381, %v377
        %v383 = vpop.permute.xlu0 %382
        %v384 = vlaneseq
        %v385 = vshrl.u32 %v384, 7
        %v386 = vadd.s32 %v385, 8
        %387 = vset.pattern.permute.xlu0 %v386
        %388 = vperm.xlu0 %387, %v377
        %v389 = vpop.permute.xlu0 %388
        %v390 = vperm.slane %v350, 3
        %v391 = vlaneseq
        %v392 = vshrl.u32 %v391, 7
        %394 = vset.pattern.permute.xlu0 %v392
        %395 = vperm.xlu0 %394, %v390
        %v396 = vpop.permute.xlu0 %395
        %v397 = vlaneseq
        %v398 = vshrl.u32 %v397, 7
        %v399 = vadd.s32 %v398, 8
        %400 = vset.pattern.permute.xlu0 %v399
        %401 = vperm.xlu0 %400, %v390
        %v402 = vpop.permute.xlu0 %401
        %v403 = vperm.slane %v350, 4
        %v404 = vlaneseq
        %v405 = vshrl.u32 %v404, 7
        %407 = vset.pattern.permute.xlu0 %v405
        %408 = vperm.xlu0 %407, %v403
        %v409 = vpop.permute.xlu0 %408
        %v410 = vlaneseq
        %v411 = vshrl.u32 %v410, 7
        %v412 = vadd.s32 %v411, 8
        %413 = vset.pattern.permute.xlu0 %v412
        %414 = vperm.xlu0 %413, %v403
        %v415 = vpop.permute.xlu0 %414
        %v416 = vperm.slane %v350, 5
        %v417 = vlaneseq
        %v418 = vshrl.u32 %v417, 7
        %420 = vset.pattern.permute.xlu0 %v418
        %421 = vperm.xlu0 %420, %v416
        %v422 = vpop.permute.xlu0 %421
        %v423 = vlaneseq
        %v424 = vshrl.u32 %v423, 7
        %v425 = vadd.s32 %v424, 8
        %426 = vset.pattern.permute.xlu0 %v425
        %427 = vperm.xlu0 %426, %v416
        %v428 = vpop.permute.xlu0 %427
        %v429 = vperm.slane %v350, 6
        %v430 = vlaneseq
        %v431 = vshrl.u32 %v430, 7
        %433 = vset.pattern.permute.xlu0 %v431
        %434 = vperm.xlu0 %433, %v429
        %v435 = vpop.permute.xlu0 %434
        %v436 = vlaneseq
        %v437 = vshrl.u32 %v436, 7
        %v438 = vadd.s32 %v437, 8
        %439 = vset.pattern.permute.xlu0 %v438
        %440 = vperm.xlu0 %439, %v429
        %v441 = vpop.permute.xlu0 %440
        %v442 = vperm.slane %v350, 7
        %v443 = vlaneseq
        %v444 = vshrl.u32 %v443, 7
        %446 = vset.pattern.permute.xlu0 %v444
        %447 = vperm.xlu0 %446, %v442
        %v448 = vpop.permute.xlu0 %447
        %v449 = vlaneseq
        %v450 = vshrl.u32 %v449, 7
        %v451 = vadd.s32 %v450, 8
        %452 = vset.pattern.permute.xlu0 %v451
        %453 = vperm.xlu0 %452, %v442
        %v454 = vpop.permute.xlu0 %453
        %vm455 = vcmp.eq.s32.totalorder %v357, %v349
        %vm456 = vcmp.eq.s32.totalorder %v363, %v349
        %vm457 = vcmp.eq.s32.totalorder %v370, %v349
        %vm458 = vcmp.eq.s32.totalorder %v376, %v349
        %vm459 = vcmp.eq.s32.totalorder %v383, %v349
        %vm460 = vcmp.eq.s32.totalorder %v389, %v349
        %vm461 = vcmp.eq.s32.totalorder %v396, %v349
        %vm462 = vcmp.eq.s32.totalorder %v402, %v349
        %vm463 = vcmp.eq.s32.totalorder %v409, %v349
        %vm464 = vcmp.eq.s32.totalorder %v415, %v349
        %vm465 = vcmp.eq.s32.totalorder %v422, %v349
        %vm466 = vcmp.eq.s32.totalorder %v428, %v349
        %vm467 = vcmp.eq.s32.totalorder %v435, %v349
        %vm468 = vcmp.eq.s32.totalorder %v441, %v349
        %vm469 = vcmp.eq.s32.totalorder %v448, %v349
        %vm470 = vcmp.eq.s32.totalorder %v454, %v349
        %v471 = vsel %vm455, 1, 0
        %v472 = vsel %vm456, 1, 0
        %v473 = vsel %vm457, 1, 0
        %v474 = vsel %vm458, 1, 0
        %v475 = vsel %vm459, 1, 0
        %v476 = vsel %vm460, 1, 0
        %v477 = vsel %vm461, 1, 0
        %v478 = vsel %vm462, 1, 0
        %v479 = vsel %vm463, 1, 0
        %v480 = vsel %vm464, 1, 0
        %v481 = vsel %vm465, 1, 0
        %v482 = vsel %vm466, 1, 0
        %v483 = vsel %vm467, 1, 0
        %v484 = vsel %vm468, 1, 0
        %v485 = vsel %vm469, 1, 0
        %v486 = vsel %vm470, 1, 0
        %v487 = vcvt.s32.f32 %v471
        %v488 = vcvt.s32.f32 %v472
        %v489 = vcvt.s32.f32 %v473
        %v490 = vcvt.s32.f32 %v474
        %v491 = vcvt.s32.f32 %v475
        %v492 = vcvt.s32.f32 %v476
        %v493 = vcvt.s32.f32 %v477
        %v494 = vcvt.s32.f32 %v478
        %v495 = vcvt.s32.f32 %v479
        %v496 = vcvt.s32.f32 %v480
        %v497 = vcvt.s32.f32 %v481
        %v498 = vcvt.s32.f32 %v482
        %v499 = vcvt.s32.f32 %v483
        %v500 = vcvt.s32.f32 %v484
        %v501 = vcvt.s32.f32 %v485
        %v502 = vcvt.s32.f32 %v486
        %v503 = vadd.f32 %v487, %v488
        %v504 = vrot.slane %v503, 4
        %v505 = vadd.f32 %v503, %v504
        %v506 = vrot.slane %v505, 2
        %v507 = vadd.f32 %v505, %v506
        %v508 = vrot.slane %v507, 1
        %v509 = vadd.f32 %v507, %v508
        %v510 = vadd.f32 %v489, %v490
        %v511 = vrot.slane %v510, 4
        %v512 = vadd.f32 %v510, %v511
        %v513 = vrot.slane %v512, 2
        %v514 = vadd.f32 %v512, %v513
        %v515 = vrot.slane %v514, 1
        %v516 = vadd.f32 %v514, %v515
        %v517 = vadd.f32 %v491, %v492
        %v518 = vrot.slane %v517, 4
        %v519 = vadd.f32 %v517, %v518
        %v520 = vrot.slane %v519, 2
        %v521 = vadd.f32 %v519, %v520
        %v522 = vrot.slane %v521, 1
        %v523 = vadd.f32 %v521, %v522
        %v524 = vadd.f32 %v493, %v494
        %v525 = vrot.slane %v524, 4
        %v526 = vadd.f32 %v524, %v525
        %v527 = vrot.slane %v526, 2
        %v528 = vadd.f32 %v526, %v527
        %v529 = vrot.slane %v528, 1
        %v530 = vadd.f32 %v528, %v529
        %v531 = vadd.f32 %v495, %v496
        %v532 = vrot.slane %v531, 4
        %v533 = vadd.f32 %v531, %v532
        %v534 = vrot.slane %v533, 2
        %v535 = vadd.f32 %v533, %v534
        %v536 = vrot.slane %v535, 1
        %v537 = vadd.f32 %v535, %v536
        %v538 = vadd.f32 %v497, %v498
        %v539 = vrot.slane %v538, 4
        %v540 = vadd.f32 %v538, %v539
        %v541 = vrot.slane %v540, 2
        %v542 = vadd.f32 %v540, %v541
        %v543 = vrot.slane %v542, 1
        %v544 = vadd.f32 %v542, %v543
        %v545 = vadd.f32 %v499, %v500
        %v546 = vrot.slane %v545, 4
        %v547 = vadd.f32 %v545, %v546
        %v548 = vrot.slane %v547, 2
        %v549 = vadd.f32 %v547, %v548
        %v550 = vrot.slane %v549, 1
        %v551 = vadd.f32 %v549, %v550
        %v552 = vadd.f32 %v501, %v502
        %v553 = vrot.slane %v552, 4
        %v554 = vadd.f32 %v552, %v553
        %v555 = vrot.slane %v554, 2
        %v556 = vadd.f32 %v554, %v555
        %v557 = vrot.slane %v556, 1
        %v558 = vadd.f32 %v556, %v557
        %v559 = vadd.f32 %v509, 0.0
        %v560 = vadd.f32 %v516, 0.0
        %v561 = vadd.f32 %v523, 0.0
        %v562 = vadd.f32 %v530, 0.0
        %v563 = vadd.f32 %v537, 0.0
        %v564 = vadd.f32 %v544, 0.0
        %v565 = vadd.f32 %v551, 0.0
        %v566 = vadd.f32 %v558, 0.0
        %v567 = vlaneseq
        %v568 = vshrl.u32 %v567, 7
        %v569 = vadd.s32 %v568, 16
        %570 = vset.pattern.permute.xlu0 %v569
        %571 = vperm.xlu0 %570, %v351
        %v572 = vpop.permute.xlu0 %571
        %v573 = vlaneseq
        %v574 = vshrl.u32 %v573, 7
        %v575 = vadd.s32 %v574, 24
        %576 = vset.pattern.permute.xlu0 %v575
        %577 = vperm.xlu0 %576, %v351
        %v578 = vpop.permute.xlu0 %577
        %v579 = vlaneseq
        %v580 = vshrl.u32 %v579, 7
        %v581 = vadd.s32 %v580, 16
        %582 = vset.pattern.permute.xlu0 %v581
        %583 = vperm.xlu0 %582, %v364
        %v584 = vpop.permute.xlu0 %583
        %v585 = vlaneseq
        %v586 = vshrl.u32 %v585, 7
        %v587 = vadd.s32 %v586, 24
        %588 = vset.pattern.permute.xlu0 %v587
        %589 = vperm.xlu0 %588, %v364
        %v590 = vpop.permute.xlu0 %589
        %v591 = vlaneseq
        %v592 = vshrl.u32 %v591, 7
        %v593 = vadd.s32 %v592, 16
        %594 = vset.pattern.permute.xlu0 %v593
        %595 = vperm.xlu0 %594, %v377
        %v596 = vpop.permute.xlu0 %595
        %v597 = vlaneseq
        %v598 = vshrl.u32 %v597, 7
        %v599 = vadd.s32 %v598, 24
        %600 = vset.pattern.permute.xlu0 %v599
        %601 = vperm.xlu0 %600, %v377
        %v602 = vpop.permute.xlu0 %601
        %v603 = vlaneseq
        %v604 = vshrl.u32 %v603, 7
        %v605 = vadd.s32 %v604, 16
        %606 = vset.pattern.permute.xlu0 %v605
        %607 = vperm.xlu0 %606, %v390
        %v608 = vpop.permute.xlu0 %607
        %v609 = vlaneseq
        %v610 = vshrl.u32 %v609, 7
        %v611 = vadd.s32 %v610, 24
        %612 = vset.pattern.permute.xlu0 %v611
        %613 = vperm.xlu0 %612, %v390
        %v614 = vpop.permute.xlu0 %613
        %v615 = vlaneseq
        %v616 = vshrl.u32 %v615, 7
        %v617 = vadd.s32 %v616, 16
        %618 = vset.pattern.permute.xlu0 %v617
        %619 = vperm.xlu0 %618, %v403
        %v620 = vpop.permute.xlu0 %619
        %v621 = vlaneseq
        %v622 = vshrl.u32 %v621, 7
        %v623 = vadd.s32 %v622, 24
        %624 = vset.pattern.permute.xlu0 %v623
        %625 = vperm.xlu0 %624, %v403
        %v626 = vpop.permute.xlu0 %625
        %v627 = vlaneseq
        %v628 = vshrl.u32 %v627, 7
        %v629 = vadd.s32 %v628, 16
        %630 = vset.pattern.permute.xlu0 %v629
        %631 = vperm.xlu0 %630, %v416
        %v632 = vpop.permute.xlu0 %631
        %v633 = vlaneseq
        %v634 = vshrl.u32 %v633, 7
        %v635 = vadd.s32 %v634, 24
        %636 = vset.pattern.permute.xlu0 %v635
        %637 = vperm.xlu0 %636, %v416
        %v638 = vpop.permute.xlu0 %637
        %v639 = vlaneseq
        %v640 = vshrl.u32 %v639, 7
        %v641 = vadd.s32 %v640, 16
        %642 = vset.pattern.permute.xlu0 %v641
        %643 = vperm.xlu0 %642, %v429
        %v644 = vpop.permute.xlu0 %643
        %v645 = vlaneseq
        %v646 = vshrl.u32 %v645, 7
        %v647 = vadd.s32 %v646, 24
        %648 = vset.pattern.permute.xlu0 %v647
        %649 = vperm.xlu0 %648, %v429
        %v650 = vpop.permute.xlu0 %649
        %v651 = vlaneseq
        %v652 = vshrl.u32 %v651, 7
        %v653 = vadd.s32 %v652, 16
        %654 = vset.pattern.permute.xlu0 %v653
        %655 = vperm.xlu0 %654, %v442
        %v656 = vpop.permute.xlu0 %655
        %v657 = vlaneseq
        %v658 = vshrl.u32 %v657, 7
        %v659 = vadd.s32 %v658, 24
        %660 = vset.pattern.permute.xlu0 %v659
        %661 = vperm.xlu0 %660, %v442
        %v662 = vpop.permute.xlu0 %661
        %vm663 = vcmp.eq.s32.totalorder %v572, %v349
        %vm664 = vcmp.eq.s32.totalorder %v578, %v349
        %vm665 = vcmp.eq.s32.totalorder %v584, %v349
        %vm666 = vcmp.eq.s32.totalorder %v590, %v349
        %vm667 = vcmp.eq.s32.totalorder %v596, %v349
        %vm668 = vcmp.eq.s32.totalorder %v602, %v349
        %vm669 = vcmp.eq.s32.totalorder %v608, %v349
        %vm670 = vcmp.eq.s32.totalorder %v614, %v349
        %vm671 = vcmp.eq.s32.totalorder %v620, %v349
        %vm672 = vcmp.eq.s32.totalorder %v626, %v349
        %vm673 = vcmp.eq.s32.totalorder %v632, %v349
        %vm674 = vcmp.eq.s32.totalorder %v638, %v349
        %vm675 = vcmp.eq.s32.totalorder %v644, %v349
        %vm676 = vcmp.eq.s32.totalorder %v650, %v349
        %vm677 = vcmp.eq.s32.totalorder %v656, %v349
        %vm678 = vcmp.eq.s32.totalorder %v662, %v349
        %v679 = vsel %vm663, 1, 0
        %v680 = vsel %vm664, 1, 0
        %v681 = vsel %vm665, 1, 0
        %v682 = vsel %vm666, 1, 0
        %v683 = vsel %vm667, 1, 0
        %v684 = vsel %vm668, 1, 0
        %v685 = vsel %vm669, 1, 0
        %v686 = vsel %vm670, 1, 0
        %v687 = vsel %vm671, 1, 0
        %v688 = vsel %vm672, 1, 0
        %v689 = vsel %vm673, 1, 0
        %v690 = vsel %vm674, 1, 0
        %v691 = vsel %vm675, 1, 0
        %v692 = vsel %vm676, 1, 0
        %v693 = vsel %vm677, 1, 0
        %v694 = vsel %vm678, 1, 0
        %v695 = vcvt.s32.f32 %v679
        %v696 = vcvt.s32.f32 %v680
        %v697 = vcvt.s32.f32 %v681
        %v698 = vcvt.s32.f32 %v682
        %v699 = vcvt.s32.f32 %v683
        %v700 = vcvt.s32.f32 %v684
        %v701 = vcvt.s32.f32 %v685
        %v702 = vcvt.s32.f32 %v686
        %v703 = vcvt.s32.f32 %v687
        %v704 = vcvt.s32.f32 %v688
        %v705 = vcvt.s32.f32 %v689
        %v706 = vcvt.s32.f32 %v690
        %v707 = vcvt.s32.f32 %v691
        %v708 = vcvt.s32.f32 %v692
        %v709 = vcvt.s32.f32 %v693
        %v710 = vcvt.s32.f32 %v694
        %v711 = vadd.f32 %v695, %v696
        %v712 = vrot.slane %v711, 4
        %v713 = vadd.f32 %v711, %v712
        %v714 = vrot.slane %v713, 2
        %v715 = vadd.f32 %v713, %v714
        %v716 = vrot.slane %v715, 1
        %v717 = vadd.f32 %v715, %v716
        %v718 = vadd.f32 %v697, %v698
        %v719 = vrot.slane %v718, 4
        %v720 = vadd.f32 %v718, %v719
        %v721 = vrot.slane %v720, 2
        %v722 = vadd.f32 %v720, %v721
        %v723 = vrot.slane %v722, 1
        %v724 = vadd.f32 %v722, %v723
        %v725 = vadd.f32 %v699, %v700
        %v726 = vrot.slane %v725, 4
        %v727 = vadd.f32 %v725, %v726
        %v728 = vrot.slane %v727, 2
        %v729 = vadd.f32 %v727, %v728
        %v730 = vrot.slane %v729, 1
        %v731 = vadd.f32 %v729, %v730
        %v732 = vadd.f32 %v701, %v702
        %v733 = vrot.slane %v732, 4
        %v734 = vadd.f32 %v732, %v733
        %v735 = vrot.slane %v734, 2
        %v736 = vadd.f32 %v734, %v735
        %v737 = vrot.slane %v736, 1
        %v738 = vadd.f32 %v736, %v737
        %v739 = vadd.f32 %v703, %v704
        %v740 = vrot.slane %v739, 4
        %v741 = vadd.f32 %v739, %v740
        %v742 = vrot.slane %v741, 2
        %v743 = vadd.f32 %v741, %v742
        %v744 = vrot.slane %v743, 1
        %v745 = vadd.f32 %v743, %v744
        %v746 = vadd.f32 %v705, %v706
        %v747 = vrot.slane %v746, 4
        %v748 = vadd.f32 %v746, %v747
        %v749 = vrot.slane %v748, 2
        %v750 = vadd.f32 %v748, %v749
        %v751 = vrot.slane %v750, 1
        %v752 = vadd.f32 %v750, %v751
        %v753 = vadd.f32 %v707, %v708
        %v754 = vrot.slane %v753, 4
        %v755 = vadd.f32 %v753, %v754
        %v756 = vrot.slane %v755, 2
        %v757 = vadd.f32 %v755, %v756
        %v758 = vrot.slane %v757, 1
        %v759 = vadd.f32 %v757, %v758
        %v760 = vadd.f32 %v709, %v710
        %v761 = vrot.slane %v760, 4
        %v762 = vadd.f32 %v760, %v761
        %v763 = vrot.slane %v762, 2
        %v764 = vadd.f32 %v762, %v763
        %v765 = vrot.slane %v764, 1
        %v766 = vadd.f32 %v764, %v765
        %v767 = vadd.f32 %v559, %v717
        %v768 = vadd.f32 %v560, %v724
        %v769 = vadd.f32 %v561, %v731
        %v770 = vadd.f32 %v562, %v738
        %v771 = vadd.f32 %v563, %v745
        %v772 = vadd.f32 %v564, %v752
        %v773 = vadd.f32 %v565, %v759
        %v774 = vadd.f32 %v566, %v766
        %v775 = vlaneseq
        %v776 = vshrl.u32 %v775, 7
        %v777 = vadd.s32 %v776, 32
        %778 = vset.pattern.permute.xlu0 %v777
        %779 = vperm.xlu0 %778, %v351
        %v780 = vpop.permute.xlu0 %779
        %v781 = vlaneseq
        %v782 = vshrl.u32 %v781, 7
        %v783 = vadd.s32 %v782, 40
        %784 = vset.pattern.permute.xlu0 %v783
        %785 = vperm.xlu0 %784, %v351
        %v786 = vpop.permute.xlu0 %785
        %v787 = vlaneseq
        %v788 = vshrl.u32 %v787, 7
        %v789 = vadd.s32 %v788, 32
        %790 = vset.pattern.permute.xlu0 %v789
        %791 = vperm.xlu0 %790, %v364
        %v792 = vpop.permute.xlu0 %791
        %v793 = vlaneseq
        %v794 = vshrl.u32 %v793, 7
        %v795 = vadd.s32 %v794, 40
        %796 = vset.pattern.permute.xlu0 %v795
        %797 = vperm.xlu0 %796, %v364
        %v798 = vpop.permute.xlu0 %797
        %v799 = vlaneseq
        %v800 = vshrl.u32 %v799, 7
        %v801 = vadd.s32 %v800, 32
        %802 = vset.pattern.permute.xlu0 %v801
        %803 = vperm.xlu0 %802, %v377
        %v804 = vpop.permute.xlu0 %803
        %v805 = vlaneseq
        %v806 = vshrl.u32 %v805, 7
        %v807 = vadd.s32 %v806, 40
        %808 = vset.pattern.permute.xlu0 %v807
        %809 = vperm.xlu0 %808, %v377
        %v810 = vpop.permute.xlu0 %809
        %v811 = vlaneseq
        %v812 = vshrl.u32 %v811, 7
        %v813 = vadd.s32 %v812, 32
        %814 = vset.pattern.permute.xlu0 %v813
        %815 = vperm.xlu0 %814, %v390
        %v816 = vpop.permute.xlu0 %815
        %v817 = vlaneseq
        %v818 = vshrl.u32 %v817, 7
        %v819 = vadd.s32 %v818, 40
        %820 = vset.pattern.permute.xlu0 %v819
        %821 = vperm.xlu0 %820, %v390
        %v822 = vpop.permute.xlu0 %821
        %v823 = vlaneseq
        %v824 = vshrl.u32 %v823, 7
        %v825 = vadd.s32 %v824, 32
        %826 = vset.pattern.permute.xlu0 %v825
        %827 = vperm.xlu0 %826, %v403
        %v828 = vpop.permute.xlu0 %827
        %v829 = vlaneseq
        %v830 = vshrl.u32 %v829, 7
        %v831 = vadd.s32 %v830, 40
        %832 = vset.pattern.permute.xlu0 %v831
        %833 = vperm.xlu0 %832, %v403
        %v834 = vpop.permute.xlu0 %833
        %v835 = vlaneseq
        %v836 = vshrl.u32 %v835, 7
        %v837 = vadd.s32 %v836, 32
        %838 = vset.pattern.permute.xlu0 %v837
        %839 = vperm.xlu0 %838, %v416
        %v840 = vpop.permute.xlu0 %839
        %v841 = vlaneseq
        %v842 = vshrl.u32 %v841, 7
        %v843 = vadd.s32 %v842, 40
        %844 = vset.pattern.permute.xlu0 %v843
        %845 = vperm.xlu0 %844, %v416
        %v846 = vpop.permute.xlu0 %845
        %v847 = vlaneseq
        %v848 = vshrl.u32 %v847, 7
        %v849 = vadd.s32 %v848, 32
        %850 = vset.pattern.permute.xlu0 %v849
        %851 = vperm.xlu0 %850, %v429
        %v852 = vpop.permute.xlu0 %851
        %v853 = vlaneseq
        %v854 = vshrl.u32 %v853, 7
        %v855 = vadd.s32 %v854, 40
        %856 = vset.pattern.permute.xlu0 %v855
        %857 = vperm.xlu0 %856, %v429
        %v858 = vpop.permute.xlu0 %857
        %v859 = vlaneseq
        %v860 = vshrl.u32 %v859, 7
        %v861 = vadd.s32 %v860, 32
        %862 = vset.pattern.permute.xlu0 %v861
        %863 = vperm.xlu0 %862, %v442
        %v864 = vpop.permute.xlu0 %863
        %v865 = vlaneseq
        %v866 = vshrl.u32 %v865, 7
        %v867 = vadd.s32 %v866, 40
        %868 = vset.pattern.permute.xlu0 %v867
        %869 = vperm.xlu0 %868, %v442
        %v870 = vpop.permute.xlu0 %869
        %vm871 = vcmp.eq.s32.totalorder %v780, %v349
        %vm872 = vcmp.eq.s32.totalorder %v786, %v349
        %vm873 = vcmp.eq.s32.totalorder %v792, %v349
        %vm874 = vcmp.eq.s32.totalorder %v798, %v349
        %vm875 = vcmp.eq.s32.totalorder %v804, %v349
        %vm876 = vcmp.eq.s32.totalorder %v810, %v349
        %vm877 = vcmp.eq.s32.totalorder %v816, %v349
        %vm878 = vcmp.eq.s32.totalorder %v822, %v349
        %vm879 = vcmp.eq.s32.totalorder %v828, %v349
        %vm880 = vcmp.eq.s32.totalorder %v834, %v349
        %vm881 = vcmp.eq.s32.totalorder %v840, %v349
        %vm882 = vcmp.eq.s32.totalorder %v846, %v349
        %vm883 = vcmp.eq.s32.totalorder %v852, %v349
        %vm884 = vcmp.eq.s32.totalorder %v858, %v349
        %vm885 = vcmp.eq.s32.totalorder %v864, %v349
        %vm886 = vcmp.eq.s32.totalorder %v870, %v349
        %v887 = vsel %vm871, 1, 0
        %v888 = vsel %vm872, 1, 0
        %v889 = vsel %vm873, 1, 0
        %v890 = vsel %vm874, 1, 0
        %v891 = vsel %vm875, 1, 0
        %v892 = vsel %vm876, 1, 0
        %v893 = vsel %vm877, 1, 0
        %v894 = vsel %vm878, 1, 0
        %v895 = vsel %vm879, 1, 0
        %v896 = vsel %vm880, 1, 0
        %v897 = vsel %vm881, 1, 0
        %v898 = vsel %vm882, 1, 0
        %v899 = vsel %vm883, 1, 0
        %v900 = vsel %vm884, 1, 0
        %v901 = vsel %vm885, 1, 0
        %v902 = vsel %vm886, 1, 0
        %v903 = vcvt.s32.f32 %v887
        %v904 = vcvt.s32.f32 %v888
        %v905 = vcvt.s32.f32 %v889
        %v906 = vcvt.s32.f32 %v890
        %v907 = vcvt.s32.f32 %v891
        %v908 = vcvt.s32.f32 %v892
        %v909 = vcvt.s32.f32 %v893
        %v910 = vcvt.s32.f32 %v894
        %v911 = vcvt.s32.f32 %v895
        %v912 = vcvt.s32.f32 %v896
        %v913 = vcvt.s32.f32 %v897
        %v914 = vcvt.s32.f32 %v898
        %v915 = vcvt.s32.f32 %v899
        %v916 = vcvt.s32.f32 %v900
        %v917 = vcvt.s32.f32 %v901
        %v918 = vcvt.s32.f32 %v902
        %v919 = vadd.f32 %v903, %v904
        %v920 = vrot.slane %v919, 4
        %v921 = vadd.f32 %v919, %v920
        %v922 = vrot.slane %v921, 2
        %v923 = vadd.f32 %v921, %v922
        %v924 = vrot.slane %v923, 1
        %v925 = vadd.f32 %v923, %v924
        %v926 = vadd.f32 %v905, %v906
        %v927 = vrot.slane %v926, 4
        %v928 = vadd.f32 %v926, %v927
        %v929 = vrot.slane %v928, 2
        %v930 = vadd.f32 %v928, %v929
        %v931 = vrot.slane %v930, 1
        %v932 = vadd.f32 %v930, %v931
        %v933 = vadd.f32 %v907, %v908
        %v934 = vrot.slane %v933, 4
        %v935 = vadd.f32 %v933, %v934
        %v936 = vrot.slane %v935, 2
        %v937 = vadd.f32 %v935, %v936
        %v938 = vrot.slane %v937, 1
        %v939 = vadd.f32 %v937, %v938
        %v940 = vadd.f32 %v909, %v910
        %v941 = vrot.slane %v940, 4
        %v942 = vadd.f32 %v940, %v941
        %v943 = vrot.slane %v942, 2
        %v944 = vadd.f32 %v942, %v943
        %v945 = vrot.slane %v944, 1
        %v946 = vadd.f32 %v944, %v945
        %v947 = vadd.f32 %v911, %v912
        %v948 = vrot.slane %v947, 4
        %v949 = vadd.f32 %v947, %v948
        %v950 = vrot.slane %v949, 2
        %v951 = vadd.f32 %v949, %v950
        %v952 = vrot.slane %v951, 1
        %v953 = vadd.f32 %v951, %v952
        %v954 = vadd.f32 %v913, %v914
        %v955 = vrot.slane %v954, 4
        %v956 = vadd.f32 %v954, %v955
        %v957 = vrot.slane %v956, 2
        %v958 = vadd.f32 %v956, %v957
        %v959 = vrot.slane %v958, 1
        %v960 = vadd.f32 %v958, %v959
        %v961 = vadd.f32 %v915, %v916
        %v962 = vrot.slane %v961, 4
        %v963 = vadd.f32 %v961, %v962
        %v964 = vrot.slane %v963, 2
        %v965 = vadd.f32 %v963, %v964
        %v966 = vrot.slane %v965, 1
        %v967 = vadd.f32 %v965, %v966
        %v968 = vadd.f32 %v917, %v918
        %v969 = vrot.slane %v968, 4
        %v970 = vadd.f32 %v968, %v969
        %v971 = vrot.slane %v970, 2
        %v972 = vadd.f32 %v970, %v971
        %v973 = vrot.slane %v972, 1
        %v974 = vadd.f32 %v972, %v973
        %v975 = vadd.f32 %v767, %v925
        %v976 = vadd.f32 %v768, %v932
        %v977 = vadd.f32 %v769, %v939
        %v978 = vadd.f32 %v770, %v946
        %v979 = vadd.f32 %v771, %v953
        %v980 = vadd.f32 %v772, %v960
        %v981 = vadd.f32 %v773, %v967
        %v982 = vadd.f32 %v774, %v974
        %v983 = vlaneseq
        %v984 = vshrl.u32 %v983, 7
        %v985 = vadd.s32 %v984, 48
        %986 = vset.pattern.permute.xlu0 %v985
        %987 = vperm.xlu0 %986, %v351
        %v988 = vpop.permute.xlu0 %987
        %v989 = vlaneseq
        %v990 = vshrl.u32 %v989, 7
        %v991 = vadd.s32 %v990, 56
        %992 = vset.pattern.permute.xlu0 %v991
        %993 = vperm.xlu0 %992, %v351
        %v994 = vpop.permute.xlu0 %993
        %v995 = vlaneseq
        %v996 = vshrl.u32 %v995, 7
        %v997 = vadd.s32 %v996, 48
        %998 = vset.pattern.permute.xlu0 %v997
        %999 = vperm.xlu0 %998, %v364
        %v1000 = vpop.permute.xlu0 %999
        %v1001 = vlaneseq
        %v1002 = vshrl.u32 %v1001, 7
        %v1003 = vadd.s32 %v1002, 56
        %1004 = vset.pattern.permute.xlu0 %v1003
        %1005 = vperm.xlu0 %1004, %v364
        %v1006 = vpop.permute.xlu0 %1005
        %v1007 = vlaneseq
        %v1008 = vshrl.u32 %v1007, 7
        %v1009 = vadd.s32 %v1008, 48
        %1010 = vset.pattern.permute.xlu0 %v1009
        %1011 = vperm.xlu0 %1010, %v377
        %v1012 = vpop.permute.xlu0 %1011
        %v1013 = vlaneseq
        %v1014 = vshrl.u32 %v1013, 7
        %v1015 = vadd.s32 %v1014, 56
        %1016 = vset.pattern.permute.xlu0 %v1015
        %1017 = vperm.xlu0 %1016, %v377
        %v1018 = vpop.permute.xlu0 %1017
        %v1019 = vlaneseq
        %v1020 = vshrl.u32 %v1019, 7
        %v1021 = vadd.s32 %v1020, 48
        %1022 = vset.pattern.permute.xlu0 %v1021
        %1023 = vperm.xlu0 %1022, %v390
        %v1024 = vpop.permute.xlu0 %1023
        %v1025 = vlaneseq
        %v1026 = vshrl.u32 %v1025, 7
        %v1027 = vadd.s32 %v1026, 56
        %1028 = vset.pattern.permute.xlu0 %v1027
        %1029 = vperm.xlu0 %1028, %v390
        %v1030 = vpop.permute.xlu0 %1029
        %v1031 = vlaneseq
        %v1032 = vshrl.u32 %v1031, 7
        %v1033 = vadd.s32 %v1032, 48
        %1034 = vset.pattern.permute.xlu0 %v1033
        %1035 = vperm.xlu0 %1034, %v403
        %v1036 = vpop.permute.xlu0 %1035
        %v1037 = vlaneseq
        %v1038 = vshrl.u32 %v1037, 7
        %v1039 = vadd.s32 %v1038, 56
        %1040 = vset.pattern.permute.xlu0 %v1039
        %1041 = vperm.xlu0 %1040, %v403
        %v1042 = vpop.permute.xlu0 %1041
        %v1043 = vlaneseq
        %v1044 = vshrl.u32 %v1043, 7
        %v1045 = vadd.s32 %v1044, 48
        %1046 = vset.pattern.permute.xlu0 %v1045
        %1047 = vperm.xlu0 %1046, %v416
        %v1048 = vpop.permute.xlu0 %1047
        %v1049 = vlaneseq
        %v1050 = vshrl.u32 %v1049, 7
        %v1051 = vadd.s32 %v1050, 56
        %1052 = vset.pattern.permute.xlu0 %v1051
        %1053 = vperm.xlu0 %1052, %v416
        %v1054 = vpop.permute.xlu0 %1053
        %v1055 = vlaneseq
        %v1056 = vshrl.u32 %v1055, 7
        %v1057 = vadd.s32 %v1056, 48
        %1058 = vset.pattern.permute.xlu0 %v1057
        %1059 = vperm.xlu0 %1058, %v429
        %v1060 = vpop.permute.xlu0 %1059
        %v1061 = vlaneseq
        %v1062 = vshrl.u32 %v1061, 7
        %v1063 = vadd.s32 %v1062, 56
        %1064 = vset.pattern.permute.xlu0 %v1063
        %1065 = vperm.xlu0 %1064, %v429
        %v1066 = vpop.permute.xlu0 %1065
        %v1067 = vlaneseq
        %v1068 = vshrl.u32 %v1067, 7
        %v1069 = vadd.s32 %v1068, 48
        %1070 = vset.pattern.permute.xlu0 %v1069
        %1071 = vperm.xlu0 %1070, %v442
        %v1072 = vpop.permute.xlu0 %1071
        %v1073 = vlaneseq
        %v1074 = vshrl.u32 %v1073, 7
        %v1075 = vadd.s32 %v1074, 56
        %1076 = vset.pattern.permute.xlu0 %v1075
        %1077 = vperm.xlu0 %1076, %v442
        %v1078 = vpop.permute.xlu0 %1077
        %vm1079 = vcmp.eq.s32.totalorder %v988, %v349
        %vm1080 = vcmp.eq.s32.totalorder %v994, %v349
        %vm1081 = vcmp.eq.s32.totalorder %v1000, %v349
        %vm1082 = vcmp.eq.s32.totalorder %v1006, %v349
        %vm1083 = vcmp.eq.s32.totalorder %v1012, %v349
        %vm1084 = vcmp.eq.s32.totalorder %v1018, %v349
        %vm1085 = vcmp.eq.s32.totalorder %v1024, %v349
        %vm1086 = vcmp.eq.s32.totalorder %v1030, %v349
        %vm1087 = vcmp.eq.s32.totalorder %v1036, %v349
        %vm1088 = vcmp.eq.s32.totalorder %v1042, %v349
        %vm1089 = vcmp.eq.s32.totalorder %v1048, %v349
        %vm1090 = vcmp.eq.s32.totalorder %v1054, %v349
        %vm1091 = vcmp.eq.s32.totalorder %v1060, %v349
        %vm1092 = vcmp.eq.s32.totalorder %v1066, %v349
        %vm1093 = vcmp.eq.s32.totalorder %v1072, %v349
        %vm1094 = vcmp.eq.s32.totalorder %v1078, %v349
        %v1095 = vsel %vm1079, 1, 0
        %v1096 = vsel %vm1080, 1, 0
        %v1097 = vsel %vm1081, 1, 0
        %v1098 = vsel %vm1082, 1, 0
        %v1099 = vsel %vm1083, 1, 0
        %v1100 = vsel %vm1084, 1, 0
        %v1101 = vsel %vm1085, 1, 0
        %v1102 = vsel %vm1086, 1, 0
        %v1103 = vsel %vm1087, 1, 0
        %v1104 = vsel %vm1088, 1, 0
        %v1105 = vsel %vm1089, 1, 0
        %v1106 = vsel %vm1090, 1, 0
        %v1107 = vsel %vm1091, 1, 0
        %v1108 = vsel %vm1092, 1, 0
        %v1109 = vsel %vm1093, 1, 0
        %v1110 = vsel %vm1094, 1, 0
        %v1111 = vcvt.s32.f32 %v1095
        %v1112 = vcvt.s32.f32 %v1096
        %v1113 = vcvt.s32.f32 %v1097
        %v1114 = vcvt.s32.f32 %v1098
        %v1115 = vcvt.s32.f32 %v1099
        %v1116 = vcvt.s32.f32 %v1100
        %v1117 = vcvt.s32.f32 %v1101
        %v1118 = vcvt.s32.f32 %v1102
        %v1119 = vcvt.s32.f32 %v1103
        %v1120 = vcvt.s32.f32 %v1104
        %v1121 = vcvt.s32.f32 %v1105
        %v1122 = vcvt.s32.f32 %v1106
        %v1123 = vcvt.s32.f32 %v1107
        %v1124 = vcvt.s32.f32 %v1108
        %v1125 = vcvt.s32.f32 %v1109
        %v1126 = vcvt.s32.f32 %v1110
        %v1127 = vadd.f32 %v1111, %v1112
        %v1128 = vrot.slane %v1127, 4
        %v1129 = vadd.f32 %v1127, %v1128
        %v1130 = vrot.slane %v1129, 2
        %v1131 = vadd.f32 %v1129, %v1130
        %v1132 = vrot.slane %v1131, 1
        %v1133 = vadd.f32 %v1131, %v1132
        %v1134 = vadd.f32 %v1113, %v1114
        %v1135 = vrot.slane %v1134, 4
        %v1136 = vadd.f32 %v1134, %v1135
        %v1137 = vrot.slane %v1136, 2
        %v1138 = vadd.f32 %v1136, %v1137
        %v1139 = vrot.slane %v1138, 1
        %v1140 = vadd.f32 %v1138, %v1139
        %v1141 = vadd.f32 %v1115, %v1116
        %v1142 = vrot.slane %v1141, 4
        %v1143 = vadd.f32 %v1141, %v1142
        %v1144 = vrot.slane %v1143, 2
        %v1145 = vadd.f32 %v1143, %v1144
        %v1146 = vrot.slane %v1145, 1
        %v1147 = vadd.f32 %v1145, %v1146
        %v1148 = vadd.f32 %v1117, %v1118
        %v1149 = vrot.slane %v1148, 4
        %v1150 = vadd.f32 %v1148, %v1149
        %v1151 = vrot.slane %v1150, 2
        %v1152 = vadd.f32 %v1150, %v1151
        %v1153 = vrot.slane %v1152, 1
        %v1154 = vadd.f32 %v1152, %v1153
        %v1155 = vadd.f32 %v1119, %v1120
        %v1156 = vrot.slane %v1155, 4
        %v1157 = vadd.f32 %v1155, %v1156
        %v1158 = vrot.slane %v1157, 2
        %v1159 = vadd.f32 %v1157, %v1158
        %v1160 = vrot.slane %v1159, 1
        %v1161 = vadd.f32 %v1159, %v1160
        %v1162 = vadd.f32 %v1121, %v1122
        %v1163 = vrot.slane %v1162, 4
        %v1164 = vadd.f32 %v1162, %v1163
        %v1165 = vrot.slane %v1164, 2
        %v1166 = vadd.f32 %v1164, %v1165
        %v1167 = vrot.slane %v1166, 1
        %v1168 = vadd.f32 %v1166, %v1167
        %v1169 = vadd.f32 %v1123, %v1124
        %v1170 = vrot.slane %v1169, 4
        %v1171 = vadd.f32 %v1169, %v1170
        %v1172 = vrot.slane %v1171, 2
        %v1173 = vadd.f32 %v1171, %v1172
        %v1174 = vrot.slane %v1173, 1
        %v1175 = vadd.f32 %v1173, %v1174
        %v1176 = vadd.f32 %v1125, %v1126
        %v1177 = vrot.slane %v1176, 4
        %v1178 = vadd.f32 %v1176, %v1177
        %v1179 = vrot.slane %v1178, 2
        %v1180 = vadd.f32 %v1178, %v1179
        %v1181 = vrot.slane %v1180, 1
        %v1182 = vadd.f32 %v1180, %v1181
        %v1183 = vadd.f32 %v975, %v1133
        %v1184 = vadd.f32 %v976, %v1140
        %v1185 = vadd.f32 %v977, %v1147
        %v1186 = vadd.f32 %v978, %v1154
        %v1187 = vadd.f32 %v979, %v1161
        %v1188 = vadd.f32 %v980, %v1168
        %v1189 = vadd.f32 %v981, %v1175
        %v1190 = vadd.f32 %v982, %v1182
        %v1191 = vlaneseq
        %v1192 = vshrl.u32 %v1191, 7
        %v1193 = vadd.s32 %v1192, 64
        %1194 = vset.pattern.permute.xlu0 %v1193
        %1195 = vperm.xlu0 %1194, %v351
        %v1196 = vpop.permute.xlu0 %1195
        %v1197 = vlaneseq
        %v1198 = vshrl.u32 %v1197, 7
        %v1199 = vadd.s32 %v1198, 72
        %1200 = vset.pattern.permute.xlu0 %v1199
        %1201 = vperm.xlu0 %1200, %v351
        %v1202 = vpop.permute.xlu0 %1201
        %v1203 = vlaneseq
        %v1204 = vshrl.u32 %v1203, 7
        %v1205 = vadd.s32 %v1204, 64
        %1206 = vset.pattern.permute.xlu0 %v1205
        %1207 = vperm.xlu0 %1206, %v364
        %v1208 = vpop.permute.xlu0 %1207
        %v1209 = vlaneseq
        %v1210 = vshrl.u32 %v1209, 7
        %v1211 = vadd.s32 %v1210, 72
        %1212 = vset.pattern.permute.xlu0 %v1211
        %1213 = vperm.xlu0 %1212, %v364
        %v1214 = vpop.permute.xlu0 %1213
        %v1215 = vlaneseq
        %v1216 = vshrl.u32 %v1215, 7
        %v1217 = vadd.s32 %v1216, 64
        %1218 = vset.pattern.permute.xlu0 %v1217
        %1219 = vperm.xlu0 %1218, %v377
        %v1220 = vpop.permute.xlu0 %1219
        %v1221 = vlaneseq
        %v1222 = vshrl.u32 %v1221, 7
        %v1223 = vadd.s32 %v1222, 72
        %1224 = vset.pattern.permute.xlu0 %v1223
        %1225 = vperm.xlu0 %1224, %v377
        %v1226 = vpop.permute.xlu0 %1225
        %v1227 = vlaneseq
        %v1228 = vshrl.u32 %v1227, 7
        %v1229 = vadd.s32 %v1228, 64
        %1230 = vset.pattern.permute.xlu0 %v1229
        %1231 = vperm.xlu0 %1230, %v390
        %v1232 = vpop.permute.xlu0 %1231
        %v1233 = vlaneseq
        %v1234 = vshrl.u32 %v1233, 7
        %v1235 = vadd.s32 %v1234, 72
        %1236 = vset.pattern.permute.xlu0 %v1235
        %1237 = vperm.xlu0 %1236, %v390
        %v1238 = vpop.permute.xlu0 %1237
        %v1239 = vlaneseq
        %v1240 = vshrl.u32 %v1239, 7
        %v1241 = vadd.s32 %v1240, 64
        %1242 = vset.pattern.permute.xlu0 %v1241
        %1243 = vperm.xlu0 %1242, %v403
        %v1244 = vpop.permute.xlu0 %1243
        %v1245 = vlaneseq
        %v1246 = vshrl.u32 %v1245, 7
        %v1247 = vadd.s32 %v1246, 72
        %1248 = vset.pattern.permute.xlu0 %v1247
        %1249 = vperm.xlu0 %1248, %v403
        %v1250 = vpop.permute.xlu0 %1249
        %v1251 = vlaneseq
        %v1252 = vshrl.u32 %v1251, 7
        %v1253 = vadd.s32 %v1252, 64
        %1254 = vset.pattern.permute.xlu0 %v1253
        %1255 = vperm.xlu0 %1254, %v416
        %v1256 = vpop.permute.xlu0 %1255
        %v1257 = vlaneseq
        %v1258 = vshrl.u32 %v1257, 7
        %v1259 = vadd.s32 %v1258, 72
        %1260 = vset.pattern.permute.xlu0 %v1259
        %1261 = vperm.xlu0 %1260, %v416
        %v1262 = vpop.permute.xlu0 %1261
        %v1263 = vlaneseq
        %v1264 = vshrl.u32 %v1263, 7
        %v1265 = vadd.s32 %v1264, 64
        %1266 = vset.pattern.permute.xlu0 %v1265
        %1267 = vperm.xlu0 %1266, %v429
        %v1268 = vpop.permute.xlu0 %1267
        %v1269 = vlaneseq
        %v1270 = vshrl.u32 %v1269, 7
        %v1271 = vadd.s32 %v1270, 72
        %1272 = vset.pattern.permute.xlu0 %v1271
        %1273 = vperm.xlu0 %1272, %v429
        %v1274 = vpop.permute.xlu0 %1273
        %v1275 = vlaneseq
        %v1276 = vshrl.u32 %v1275, 7
        %v1277 = vadd.s32 %v1276, 64
        %1278 = vset.pattern.permute.xlu0 %v1277
        %1279 = vperm.xlu0 %1278, %v442
        %v1280 = vpop.permute.xlu0 %1279
        %v1281 = vlaneseq
        %v1282 = vshrl.u32 %v1281, 7
        %v1283 = vadd.s32 %v1282, 72
        %1284 = vset.pattern.permute.xlu0 %v1283
        %1285 = vperm.xlu0 %1284, %v442
        %v1286 = vpop.permute.xlu0 %1285
        %vm1287 = vcmp.eq.s32.totalorder %v1196, %v349
        %vm1288 = vcmp.eq.s32.totalorder %v1202, %v349
        %vm1289 = vcmp.eq.s32.totalorder %v1208, %v349
        %vm1290 = vcmp.eq.s32.totalorder %v1214, %v349
        %vm1291 = vcmp.eq.s32.totalorder %v1220, %v349
        %vm1292 = vcmp.eq.s32.totalorder %v1226, %v349
        %vm1293 = vcmp.eq.s32.totalorder %v1232, %v349
        %vm1294 = vcmp.eq.s32.totalorder %v1238, %v349
        %vm1295 = vcmp.eq.s32.totalorder %v1244, %v349
        %vm1296 = vcmp.eq.s32.totalorder %v1250, %v349
        %vm1297 = vcmp.eq.s32.totalorder %v1256, %v349
        %vm1298 = vcmp.eq.s32.totalorder %v1262, %v349
        %vm1299 = vcmp.eq.s32.totalorder %v1268, %v349
        %vm1300 = vcmp.eq.s32.totalorder %v1274, %v349
        %vm1301 = vcmp.eq.s32.totalorder %v1280, %v349
        %vm1302 = vcmp.eq.s32.totalorder %v1286, %v349
        %v1303 = vsel %vm1287, 1, 0
        %v1304 = vsel %vm1288, 1, 0
        %v1305 = vsel %vm1289, 1, 0
        %v1306 = vsel %vm1290, 1, 0
        %v1307 = vsel %vm1291, 1, 0
        %v1308 = vsel %vm1292, 1, 0
        %v1309 = vsel %vm1293, 1, 0
        %v1310 = vsel %vm1294, 1, 0
        %v1311 = vsel %vm1295, 1, 0
        %v1312 = vsel %vm1296, 1, 0
        %v1313 = vsel %vm1297, 1, 0
        %v1314 = vsel %vm1298, 1, 0
        %v1315 = vsel %vm1299, 1, 0
        %v1316 = vsel %vm1300, 1, 0
        %v1317 = vsel %vm1301, 1, 0
        %v1318 = vsel %vm1302, 1, 0
        %v1319 = vcvt.s32.f32 %v1303
        %v1320 = vcvt.s32.f32 %v1304
        %v1321 = vcvt.s32.f32 %v1305
        %v1322 = vcvt.s32.f32 %v1306
        %v1323 = vcvt.s32.f32 %v1307
        %v1324 = vcvt.s32.f32 %v1308
        %v1325 = vcvt.s32.f32 %v1309
        %v1326 = vcvt.s32.f32 %v1310
        %v1327 = vcvt.s32.f32 %v1311
        %v1328 = vcvt.s32.f32 %v1312
        %v1329 = vcvt.s32.f32 %v1313
        %v1330 = vcvt.s32.f32 %v1314
        %v1331 = vcvt.s32.f32 %v1315
        %v1332 = vcvt.s32.f32 %v1316
        %v1333 = vcvt.s32.f32 %v1317
        %v1334 = vcvt.s32.f32 %v1318
        %v1335 = vadd.f32 %v1319, %v1320
        %v1336 = vrot.slane %v1335, 4
        %v1337 = vadd.f32 %v1335, %v1336
        %v1338 = vrot.slane %v1337, 2
        %v1339 = vadd.f32 %v1337, %v1338
        %v1340 = vrot.slane %v1339, 1
        %v1341 = vadd.f32 %v1339, %v1340
        %v1342 = vadd.f32 %v1321, %v1322
        %v1343 = vrot.slane %v1342, 4
        %v1344 = vadd.f32 %v1342, %v1343
        %v1345 = vrot.slane %v1344, 2
        %v1346 = vadd.f32 %v1344, %v1345
        %v1347 = vrot.slane %v1346, 1
        %v1348 = vadd.f32 %v1346, %v1347
        %v1349 = vadd.f32 %v1323, %v1324
        %v1350 = vrot.slane %v1349, 4
        %v1351 = vadd.f32 %v1349, %v1350
        %v1352 = vrot.slane %v1351, 2
        %v1353 = vadd.f32 %v1351, %v1352
        %v1354 = vrot.slane %v1353, 1
        %v1355 = vadd.f32 %v1353, %v1354
        %v1356 = vadd.f32 %v1325, %v1326
        %v1357 = vrot.slane %v1356, 4
        %v1358 = vadd.f32 %v1356, %v1357
        %v1359 = vrot.slane %v1358, 2
        %v1360 = vadd.f32 %v1358, %v1359
        %v1361 = vrot.slane %v1360, 1
        %v1362 = vadd.f32 %v1360, %v1361
        %v1363 = vadd.f32 %v1327, %v1328
        %v1364 = vrot.slane %v1363, 4
        %v1365 = vadd.f32 %v1363, %v1364
        %v1366 = vrot.slane %v1365, 2
        %v1367 = vadd.f32 %v1365, %v1366
        %v1368 = vrot.slane %v1367, 1
        %v1369 = vadd.f32 %v1367, %v1368
        %v1370 = vadd.f32 %v1329, %v1330
        %v1371 = vrot.slane %v1370, 4
        %v1372 = vadd.f32 %v1370, %v1371
        %v1373 = vrot.slane %v1372, 2
        %v1374 = vadd.f32 %v1372, %v1373
        %v1375 = vrot.slane %v1374, 1
        %v1376 = vadd.f32 %v1374, %v1375
        %v1377 = vadd.f32 %v1331, %v1332
        %v1378 = vrot.slane %v1377, 4
        %v1379 = vadd.f32 %v1377, %v1378
        %v1380 = vrot.slane %v1379, 2
        %v1381 = vadd.f32 %v1379, %v1380
        %v1382 = vrot.slane %v1381, 1
        %v1383 = vadd.f32 %v1381, %v1382
        %v1384 = vadd.f32 %v1333, %v1334
        %v1385 = vrot.slane %v1384, 4
        %v1386 = vadd.f32 %v1384, %v1385
        %v1387 = vrot.slane %v1386, 2
        %v1388 = vadd.f32 %v1386, %v1387
        %v1389 = vrot.slane %v1388, 1
        %v1390 = vadd.f32 %v1388, %v1389
        %v1391 = vadd.f32 %v1183, %v1341
        %v1392 = vadd.f32 %v1184, %v1348
        %v1393 = vadd.f32 %v1185, %v1355
        %v1394 = vadd.f32 %v1186, %v1362
        %v1395 = vadd.f32 %v1187, %v1369
        %v1396 = vadd.f32 %v1188, %v1376
        %v1397 = vadd.f32 %v1189, %v1383
        %v1398 = vadd.f32 %v1190, %v1390
        %v1399 = vlaneseq
        %v1400 = vshrl.u32 %v1399, 7
        %v1401 = vadd.s32 %v1400, 80
        %1402 = vset.pattern.permute.xlu0 %v1401
        %1403 = vperm.xlu0 %1402, %v351
        %v1404 = vpop.permute.xlu0 %1403
        %v1405 = vlaneseq
        %v1406 = vshrl.u32 %v1405, 7
        %v1407 = vadd.s32 %v1406, 88
        %1408 = vset.pattern.permute.xlu0 %v1407
        %1409 = vperm.xlu0 %1408, %v351
        %v1410 = vpop.permute.xlu0 %1409
        %v1411 = vlaneseq
        %v1412 = vshrl.u32 %v1411, 7
        %v1413 = vadd.s32 %v1412, 80
        %1414 = vset.pattern.permute.xlu0 %v1413
        %1415 = vperm.xlu0 %1414, %v364
        %v1416 = vpop.permute.xlu0 %1415
        %v1417 = vlaneseq
        %v1418 = vshrl.u32 %v1417, 7
        %v1419 = vadd.s32 %v1418, 88
        %1420 = vset.pattern.permute.xlu0 %v1419
        %1421 = vperm.xlu0 %1420, %v364
        %v1422 = vpop.permute.xlu0 %1421
        %v1423 = vlaneseq
        %v1424 = vshrl.u32 %v1423, 7
        %v1425 = vadd.s32 %v1424, 80
        %1426 = vset.pattern.permute.xlu0 %v1425
        %1427 = vperm.xlu0 %1426, %v377
        %v1428 = vpop.permute.xlu0 %1427
        %v1429 = vlaneseq
        %v1430 = vshrl.u32 %v1429, 7
        %v1431 = vadd.s32 %v1430, 88
        %1432 = vset.pattern.permute.xlu0 %v1431
        %1433 = vperm.xlu0 %1432, %v377
        %v1434 = vpop.permute.xlu0 %1433
        %v1435 = vlaneseq
        %v1436 = vshrl.u32 %v1435, 7
        %v1437 = vadd.s32 %v1436, 80
        %1438 = vset.pattern.permute.xlu0 %v1437
        %1439 = vperm.xlu0 %1438, %v390
        %v1440 = vpop.permute.xlu0 %1439
        %v1441 = vlaneseq
        %v1442 = vshrl.u32 %v1441, 7
        %v1443 = vadd.s32 %v1442, 88
        %1444 = vset.pattern.permute.xlu0 %v1443
        %1445 = vperm.xlu0 %1444, %v390
        %v1446 = vpop.permute.xlu0 %1445
        %v1447 = vlaneseq
        %v1448 = vshrl.u32 %v1447, 7
        %v1449 = vadd.s32 %v1448, 80
        %1450 = vset.pattern.permute.xlu0 %v1449
        %1451 = vperm.xlu0 %1450, %v403
        %v1452 = vpop.permute.xlu0 %1451
        %v1453 = vlaneseq
        %v1454 = vshrl.u32 %v1453, 7
        %v1455 = vadd.s32 %v1454, 88
        %1456 = vset.pattern.permute.xlu0 %v1455
        %1457 = vperm.xlu0 %1456, %v403
        %v1458 = vpop.permute.xlu0 %1457
        %v1459 = vlaneseq
        %v1460 = vshrl.u32 %v1459, 7
        %v1461 = vadd.s32 %v1460, 80
        %1462 = vset.pattern.permute.xlu0 %v1461
        %1463 = vperm.xlu0 %1462, %v416
        %v1464 = vpop.permute.xlu0 %1463
        %v1465 = vlaneseq
        %v1466 = vshrl.u32 %v1465, 7
        %v1467 = vadd.s32 %v1466, 88
        %1468 = vset.pattern.permute.xlu0 %v1467
        %1469 = vperm.xlu0 %1468, %v416
        %v1470 = vpop.permute.xlu0 %1469
        %v1471 = vlaneseq
        %v1472 = vshrl.u32 %v1471, 7
        %v1473 = vadd.s32 %v1472, 80
        %1474 = vset.pattern.permute.xlu0 %v1473
        %1475 = vperm.xlu0 %1474, %v429
        %v1476 = vpop.permute.xlu0 %1475
        %v1477 = vlaneseq
        %v1478 = vshrl.u32 %v1477, 7
        %v1479 = vadd.s32 %v1478, 88
        %1480 = vset.pattern.permute.xlu0 %v1479
        %1481 = vperm.xlu0 %1480, %v429
        %v1482 = vpop.permute.xlu0 %1481
        %v1483 = vlaneseq
        %v1484 = vshrl.u32 %v1483, 7
        %v1485 = vadd.s32 %v1484, 80
        %1486 = vset.pattern.permute.xlu0 %v1485
        %1487 = vperm.xlu0 %1486, %v442
        %v1488 = vpop.permute.xlu0 %1487
        %v1489 = vlaneseq
        %v1490 = vshrl.u32 %v1489, 7
        %v1491 = vadd.s32 %v1490, 88
        %1492 = vset.pattern.permute.xlu0 %v1491
        %1493 = vperm.xlu0 %1492, %v442
        %v1494 = vpop.permute.xlu0 %1493
        %vm1495 = vcmp.eq.s32.totalorder %v1404, %v349
        %vm1496 = vcmp.eq.s32.totalorder %v1410, %v349
        %vm1497 = vcmp.eq.s32.totalorder %v1416, %v349
        %vm1498 = vcmp.eq.s32.totalorder %v1422, %v349
        %vm1499 = vcmp.eq.s32.totalorder %v1428, %v349
        %vm1500 = vcmp.eq.s32.totalorder %v1434, %v349
        %vm1501 = vcmp.eq.s32.totalorder %v1440, %v349
        %vm1502 = vcmp.eq.s32.totalorder %v1446, %v349
        %vm1503 = vcmp.eq.s32.totalorder %v1452, %v349
        %vm1504 = vcmp.eq.s32.totalorder %v1458, %v349
        %vm1505 = vcmp.eq.s32.totalorder %v1464, %v349
        %vm1506 = vcmp.eq.s32.totalorder %v1470, %v349
        %vm1507 = vcmp.eq.s32.totalorder %v1476, %v349
        %vm1508 = vcmp.eq.s32.totalorder %v1482, %v349
        %vm1509 = vcmp.eq.s32.totalorder %v1488, %v349
        %vm1510 = vcmp.eq.s32.totalorder %v1494, %v349
        %v1511 = vsel %vm1495, 1, 0
        %v1512 = vsel %vm1496, 1, 0
        %v1513 = vsel %vm1497, 1, 0
        %v1514 = vsel %vm1498, 1, 0
        %v1515 = vsel %vm1499, 1, 0
        %v1516 = vsel %vm1500, 1, 0
        %v1517 = vsel %vm1501, 1, 0
        %v1518 = vsel %vm1502, 1, 0
        %v1519 = vsel %vm1503, 1, 0
        %v1520 = vsel %vm1504, 1, 0
        %v1521 = vsel %vm1505, 1, 0
        %v1522 = vsel %vm1506, 1, 0
        %v1523 = vsel %vm1507, 1, 0
        %v1524 = vsel %vm1508, 1, 0
        %v1525 = vsel %vm1509, 1, 0
        %v1526 = vsel %vm1510, 1, 0
        %v1527 = vcvt.s32.f32 %v1511
        %v1528 = vcvt.s32.f32 %v1512
        %v1529 = vcvt.s32.f32 %v1513
        %v1530 = vcvt.s32.f32 %v1514
        %v1531 = vcvt.s32.f32 %v1515
        %v1532 = vcvt.s32.f32 %v1516
        %v1533 = vcvt.s32.f32 %v1517
        %v1534 = vcvt.s32.f32 %v1518
        %v1535 = vcvt.s32.f32 %v1519
        %v1536 = vcvt.s32.f32 %v1520
        %v1537 = vcvt.s32.f32 %v1521
        %v1538 = vcvt.s32.f32 %v1522
        %v1539 = vcvt.s32.f32 %v1523
        %v1540 = vcvt.s32.f32 %v1524
        %v1541 = vcvt.s32.f32 %v1525
        %v1542 = vcvt.s32.f32 %v1526
        %v1543 = vadd.f32 %v1527, %v1528
        %v1544 = vrot.slane %v1543, 4
        %v1545 = vadd.f32 %v1543, %v1544
        %v1546 = vrot.slane %v1545, 2
        %v1547 = vadd.f32 %v1545, %v1546
        %v1548 = vrot.slane %v1547, 1
        %v1549 = vadd.f32 %v1547, %v1548
        %v1550 = vadd.f32 %v1529, %v1530
        %v1551 = vrot.slane %v1550, 4
        %v1552 = vadd.f32 %v1550, %v1551
        %v1553 = vrot.slane %v1552, 2
        %v1554 = vadd.f32 %v1552, %v1553
        %v1555 = vrot.slane %v1554, 1
        %v1556 = vadd.f32 %v1554, %v1555
        %v1557 = vadd.f32 %v1531, %v1532
        %v1558 = vrot.slane %v1557, 4
        %v1559 = vadd.f32 %v1557, %v1558
        %v1560 = vrot.slane %v1559, 2
        %v1561 = vadd.f32 %v1559, %v1560
        %v1562 = vrot.slane %v1561, 1
        %v1563 = vadd.f32 %v1561, %v1562
        %v1564 = vadd.f32 %v1533, %v1534
        %v1565 = vrot.slane %v1564, 4
        %v1566 = vadd.f32 %v1564, %v1565
        %v1567 = vrot.slane %v1566, 2
        %v1568 = vadd.f32 %v1566, %v1567
        %v1569 = vrot.slane %v1568, 1
        %v1570 = vadd.f32 %v1568, %v1569
        %v1571 = vadd.f32 %v1535, %v1536
        %v1572 = vrot.slane %v1571, 4
        %v1573 = vadd.f32 %v1571, %v1572
        %v1574 = vrot.slane %v1573, 2
        %v1575 = vadd.f32 %v1573, %v1574
        %v1576 = vrot.slane %v1575, 1
        %v1577 = vadd.f32 %v1575, %v1576
        %v1578 = vadd.f32 %v1537, %v1538
        %v1579 = vrot.slane %v1578, 4
        %v1580 = vadd.f32 %v1578, %v1579
        %v1581 = vrot.slane %v1580, 2
        %v1582 = vadd.f32 %v1580, %v1581
        %v1583 = vrot.slane %v1582, 1
        %v1584 = vadd.f32 %v1582, %v1583
        %v1585 = vadd.f32 %v1539, %v1540
        %v1586 = vrot.slane %v1585, 4
        %v1587 = vadd.f32 %v1585, %v1586
        %v1588 = vrot.slane %v1587, 2
        %v1589 = vadd.f32 %v1587, %v1588
        %v1590 = vrot.slane %v1589, 1
        %v1591 = vadd.f32 %v1589, %v1590
        %v1592 = vadd.f32 %v1541, %v1542
        %v1593 = vrot.slane %v1592, 4
        %v1594 = vadd.f32 %v1592, %v1593
        %v1595 = vrot.slane %v1594, 2
        %v1596 = vadd.f32 %v1594, %v1595
        %v1597 = vrot.slane %v1596, 1
        %v1598 = vadd.f32 %v1596, %v1597
        %v1599 = vadd.f32 %v1391, %v1549
        %v1600 = vadd.f32 %v1392, %v1556
        %v1601 = vadd.f32 %v1393, %v1563
        %v1602 = vadd.f32 %v1394, %v1570
        %v1603 = vadd.f32 %v1395, %v1577
        %v1604 = vadd.f32 %v1396, %v1584
        %v1605 = vadd.f32 %v1397, %v1591
        %v1606 = vadd.f32 %v1398, %v1598
        %v1607 = vlaneseq
        %v1608 = vshrl.u32 %v1607, 7
        %v1609 = vadd.s32 %v1608, 96
        %1610 = vset.pattern.permute.xlu0 %v1609
        %1611 = vperm.xlu0 %1610, %v351
        %v1612 = vpop.permute.xlu0 %1611
        %v1613 = vlaneseq
        %v1614 = vshrl.u32 %v1613, 7
        %v1615 = vadd.s32 %v1614, 104
        %1616 = vset.pattern.permute.xlu0 %v1615
        %1617 = vperm.xlu0 %1616, %v351
        %v1618 = vpop.permute.xlu0 %1617
        %v1619 = vlaneseq
        %v1620 = vshrl.u32 %v1619, 7
        %v1621 = vadd.s32 %v1620, 96
        %1622 = vset.pattern.permute.xlu0 %v1621
        %1623 = vperm.xlu0 %1622, %v364
        %v1624 = vpop.permute.xlu0 %1623
        %v1625 = vlaneseq
        %v1626 = vshrl.u32 %v1625, 7
        %v1627 = vadd.s32 %v1626, 104
        %1628 = vset.pattern.permute.xlu0 %v1627
        %1629 = vperm.xlu0 %1628, %v364
        %v1630 = vpop.permute.xlu0 %1629
        %v1631 = vlaneseq
        %v1632 = vshrl.u32 %v1631, 7
        %v1633 = vadd.s32 %v1632, 96
        %1634 = vset.pattern.permute.xlu0 %v1633
        %1635 = vperm.xlu0 %1634, %v377
        %v1636 = vpop.permute.xlu0 %1635
        %v1637 = vlaneseq
        %v1638 = vshrl.u32 %v1637, 7
        %v1639 = vadd.s32 %v1638, 104
        %1640 = vset.pattern.permute.xlu0 %v1639
        %1641 = vperm.xlu0 %1640, %v377
        %v1642 = vpop.permute.xlu0 %1641
        %v1643 = vlaneseq
        %v1644 = vshrl.u32 %v1643, 7
        %v1645 = vadd.s32 %v1644, 96
        %1646 = vset.pattern.permute.xlu0 %v1645
        %1647 = vperm.xlu0 %1646, %v390
        %v1648 = vpop.permute.xlu0 %1647
        %v1649 = vlaneseq
        %v1650 = vshrl.u32 %v1649, 7
        %v1651 = vadd.s32 %v1650, 104
        %1652 = vset.pattern.permute.xlu0 %v1651
        %1653 = vperm.xlu0 %1652, %v390
        %v1654 = vpop.permute.xlu0 %1653
        %v1655 = vlaneseq
        %v1656 = vshrl.u32 %v1655, 7
        %v1657 = vadd.s32 %v1656, 96
        %1658 = vset.pattern.permute.xlu0 %v1657
        %1659 = vperm.xlu0 %1658, %v403
        %v1660 = vpop.permute.xlu0 %1659
        %v1661 = vlaneseq
        %v1662 = vshrl.u32 %v1661, 7
        %v1663 = vadd.s32 %v1662, 104
        %1664 = vset.pattern.permute.xlu0 %v1663
        %1665 = vperm.xlu0 %1664, %v403
        %v1666 = vpop.permute.xlu0 %1665
        %v1667 = vlaneseq
        %v1668 = vshrl.u32 %v1667, 7
        %v1669 = vadd.s32 %v1668, 96
        %1670 = vset.pattern.permute.xlu0 %v1669
        %1671 = vperm.xlu0 %1670, %v416
        %v1672 = vpop.permute.xlu0 %1671
        %v1673 = vlaneseq
        %v1674 = vshrl.u32 %v1673, 7
        %v1675 = vadd.s32 %v1674, 104
        %1676 = vset.pattern.permute.xlu0 %v1675
        %1677 = vperm.xlu0 %1676, %v416
        %v1678 = vpop.permute.xlu0 %1677
        %v1679 = vlaneseq
        %v1680 = vshrl.u32 %v1679, 7
        %v1681 = vadd.s32 %v1680, 96
        %1682 = vset.pattern.permute.xlu0 %v1681
        %1683 = vperm.xlu0 %1682, %v429
        %v1684 = vpop.permute.xlu0 %1683
        %v1685 = vlaneseq
        %v1686 = vshrl.u32 %v1685, 7
        %v1687 = vadd.s32 %v1686, 104
        %1688 = vset.pattern.permute.xlu0 %v1687
        %1689 = vperm.xlu0 %1688, %v429
        %v1690 = vpop.permute.xlu0 %1689
        %v1691 = vlaneseq
        %v1692 = vshrl.u32 %v1691, 7
        %v1693 = vadd.s32 %v1692, 96
        %1694 = vset.pattern.permute.xlu0 %v1693
        %1695 = vperm.xlu0 %1694, %v442
        %v1696 = vpop.permute.xlu0 %1695
        %v1697 = vlaneseq
        %v1698 = vshrl.u32 %v1697, 7
        %v1699 = vadd.s32 %v1698, 104
        %1700 = vset.pattern.permute.xlu0 %v1699
        %1701 = vperm.xlu0 %1700, %v442
        %v1702 = vpop.permute.xlu0 %1701
        %vm1703 = vcmp.eq.s32.totalorder %v1612, %v349
        %vm1704 = vcmp.eq.s32.totalorder %v1618, %v349
        %vm1705 = vcmp.eq.s32.totalorder %v1624, %v349
        %vm1706 = vcmp.eq.s32.totalorder %v1630, %v349
        %vm1707 = vcmp.eq.s32.totalorder %v1636, %v349
        %vm1708 = vcmp.eq.s32.totalorder %v1642, %v349
        %vm1709 = vcmp.eq.s32.totalorder %v1648, %v349
        %vm1710 = vcmp.eq.s32.totalorder %v1654, %v349
        %vm1711 = vcmp.eq.s32.totalorder %v1660, %v349
        %vm1712 = vcmp.eq.s32.totalorder %v1666, %v349
        %vm1713 = vcmp.eq.s32.totalorder %v1672, %v349
        %vm1714 = vcmp.eq.s32.totalorder %v1678, %v349
        %vm1715 = vcmp.eq.s32.totalorder %v1684, %v349
        %vm1716 = vcmp.eq.s32.totalorder %v1690, %v349
        %vm1717 = vcmp.eq.s32.totalorder %v1696, %v349
        %vm1718 = vcmp.eq.s32.totalorder %v1702, %v349
        %v1719 = vsel %vm1703, 1, 0
        %v1720 = vsel %vm1704, 1, 0
        %v1721 = vsel %vm1705, 1, 0
        %v1722 = vsel %vm1706, 1, 0
        %v1723 = vsel %vm1707, 1, 0
        %v1724 = vsel %vm1708, 1, 0
        %v1725 = vsel %vm1709, 1, 0
        %v1726 = vsel %vm1710, 1, 0
        %v1727 = vsel %vm1711, 1, 0
        %v1728 = vsel %vm1712, 1, 0
        %v1729 = vsel %vm1713, 1, 0
        %v1730 = vsel %vm1714, 1, 0
        %v1731 = vsel %vm1715, 1, 0
        %v1732 = vsel %vm1716, 1, 0
        %v1733 = vsel %vm1717, 1, 0
        %v1734 = vsel %vm1718, 1, 0
        %v1735 = vcvt.s32.f32 %v1719
        %v1736 = vcvt.s32.f32 %v1720
        %v1737 = vcvt.s32.f32 %v1721
        %v1738 = vcvt.s32.f32 %v1722
        %v1739 = vcvt.s32.f32 %v1723
        %v1740 = vcvt.s32.f32 %v1724
        %v1741 = vcvt.s32.f32 %v1725
        %v1742 = vcvt.s32.f32 %v1726
        %v1743 = vcvt.s32.f32 %v1727
        %v1744 = vcvt.s32.f32 %v1728
        %v1745 = vcvt.s32.f32 %v1729
        %v1746 = vcvt.s32.f32 %v1730
        %v1747 = vcvt.s32.f32 %v1731
        %v1748 = vcvt.s32.f32 %v1732
        %v1749 = vcvt.s32.f32 %v1733
        %v1750 = vcvt.s32.f32 %v1734
        %v1751 = vadd.f32 %v1735, %v1736
        %v1752 = vrot.slane %v1751, 4
        %v1753 = vadd.f32 %v1751, %v1752
        %v1754 = vrot.slane %v1753, 2
        %v1755 = vadd.f32 %v1753, %v1754
        %v1756 = vrot.slane %v1755, 1
        %v1757 = vadd.f32 %v1755, %v1756
        %v1758 = vadd.f32 %v1737, %v1738
        %v1759 = vrot.slane %v1758, 4
        %v1760 = vadd.f32 %v1758, %v1759
        %v1761 = vrot.slane %v1760, 2
        %v1762 = vadd.f32 %v1760, %v1761
        %v1763 = vrot.slane %v1762, 1
        %v1764 = vadd.f32 %v1762, %v1763
        %v1765 = vadd.f32 %v1739, %v1740
        %v1766 = vrot.slane %v1765, 4
        %v1767 = vadd.f32 %v1765, %v1766
        %v1768 = vrot.slane %v1767, 2
        %v1769 = vadd.f32 %v1767, %v1768
        %v1770 = vrot.slane %v1769, 1
        %v1771 = vadd.f32 %v1769, %v1770
        %v1772 = vadd.f32 %v1741, %v1742
        %v1773 = vrot.slane %v1772, 4
        %v1774 = vadd.f32 %v1772, %v1773
        %v1775 = vrot.slane %v1774, 2
        %v1776 = vadd.f32 %v1774, %v1775
        %v1777 = vrot.slane %v1776, 1
        %v1778 = vadd.f32 %v1776, %v1777
        %v1779 = vadd.f32 %v1743, %v1744
        %v1780 = vrot.slane %v1779, 4
        %v1781 = vadd.f32 %v1779, %v1780
        %v1782 = vrot.slane %v1781, 2
        %v1783 = vadd.f32 %v1781, %v1782
        %v1784 = vrot.slane %v1783, 1
        %v1785 = vadd.f32 %v1783, %v1784
        %v1786 = vadd.f32 %v1745, %v1746
        %v1787 = vrot.slane %v1786, 4
        %v1788 = vadd.f32 %v1786, %v1787
        %v1789 = vrot.slane %v1788, 2
        %v1790 = vadd.f32 %v1788, %v1789
        %v1791 = vrot.slane %v1790, 1
        %v1792 = vadd.f32 %v1790, %v1791
        %v1793 = vadd.f32 %v1747, %v1748
        %v1794 = vrot.slane %v1793, 4
        %v1795 = vadd.f32 %v1793, %v1794
        %v1796 = vrot.slane %v1795, 2
        %v1797 = vadd.f32 %v1795, %v1796
        %v1798 = vrot.slane %v1797, 1
        %v1799 = vadd.f32 %v1797, %v1798
        %v1800 = vadd.f32 %v1749, %v1750
        %v1801 = vrot.slane %v1800, 4
        %v1802 = vadd.f32 %v1800, %v1801
        %v1803 = vrot.slane %v1802, 2
        %v1804 = vadd.f32 %v1802, %v1803
        %v1805 = vrot.slane %v1804, 1
        %v1806 = vadd.f32 %v1804, %v1805
        %v1807 = vadd.f32 %v1599, %v1757
        %v1808 = vadd.f32 %v1600, %v1764
        %v1809 = vadd.f32 %v1601, %v1771
        %v1810 = vadd.f32 %v1602, %v1778
        %v1811 = vadd.f32 %v1603, %v1785
        %v1812 = vadd.f32 %v1604, %v1792
        %v1813 = vadd.f32 %v1605, %v1799
        %v1814 = vadd.f32 %v1606, %v1806
        %v1815 = vlaneseq
        %v1816 = vshrl.u32 %v1815, 7
        %v1817 = vadd.s32 %v1816, 112
        %1818 = vset.pattern.permute.xlu0 %v1817
        %1819 = vperm.xlu0 %1818, %v351
        %v1820 = vpop.permute.xlu0 %1819
        %v1821 = vlaneseq
        %v1822 = vshrl.u32 %v1821, 7
        %v1823 = vadd.s32 %v1822, 120
        %1824 = vset.pattern.permute.xlu0 %v1823
        %1825 = vperm.xlu0 %1824, %v351
        %v1826 = vpop.permute.xlu0 %1825
        %v1827 = vlaneseq
        %v1828 = vshrl.u32 %v1827, 7
        %v1829 = vadd.s32 %v1828, 112
        %1830 = vset.pattern.permute.xlu0 %v1829
        %1831 = vperm.xlu0 %1830, %v364
        %v1832 = vpop.permute.xlu0 %1831
        %v1833 = vlaneseq
        %v1834 = vshrl.u32 %v1833, 7
        %v1835 = vadd.s32 %v1834, 120
        %1836 = vset.pattern.permute.xlu0 %v1835
        %1837 = vperm.xlu0 %1836, %v364
        %v1838 = vpop.permute.xlu0 %1837
        %v1839 = vlaneseq
        %v1840 = vshrl.u32 %v1839, 7
        %v1841 = vadd.s32 %v1840, 112
        %1842 = vset.pattern.permute.xlu0 %v1841
        %1843 = vperm.xlu0 %1842, %v377
        %v1844 = vpop.permute.xlu0 %1843
        %v1845 = vlaneseq
        %v1846 = vshrl.u32 %v1845, 7
        %v1847 = vadd.s32 %v1846, 120
        %1848 = vset.pattern.permute.xlu0 %v1847
        %1849 = vperm.xlu0 %1848, %v377
        %v1850 = vpop.permute.xlu0 %1849
        %v1851 = vlaneseq
        %v1852 = vshrl.u32 %v1851, 7
        %v1853 = vadd.s32 %v1852, 112
        %1854 = vset.pattern.permute.xlu0 %v1853
        %1855 = vperm.xlu0 %1854, %v390
        %v1856 = vpop.permute.xlu0 %1855
        %v1857 = vlaneseq
        %v1858 = vshrl.u32 %v1857, 7
        %v1859 = vadd.s32 %v1858, 120
        %1860 = vset.pattern.permute.xlu0 %v1859
        %1861 = vperm.xlu0 %1860, %v390
        %v1862 = vpop.permute.xlu0 %1861
        %v1863 = vlaneseq
        %v1864 = vshrl.u32 %v1863, 7
        %v1865 = vadd.s32 %v1864, 112
        %1866 = vset.pattern.permute.xlu0 %v1865
        %1867 = vperm.xlu0 %1866, %v403
        %v1868 = vpop.permute.xlu0 %1867
        %v1869 = vlaneseq
        %v1870 = vshrl.u32 %v1869, 7
        %v1871 = vadd.s32 %v1870, 120
        %1872 = vset.pattern.permute.xlu0 %v1871
        %1873 = vperm.xlu0 %1872, %v403
        %v1874 = vpop.permute.xlu0 %1873
        %v1875 = vlaneseq
        %v1876 = vshrl.u32 %v1875, 7
        %v1877 = vadd.s32 %v1876, 112
        %1878 = vset.pattern.permute.xlu0 %v1877
        %1879 = vperm.xlu0 %1878, %v416
        %v1880 = vpop.permute.xlu0 %1879
        %v1881 = vlaneseq
        %v1882 = vshrl.u32 %v1881, 7
        %v1883 = vadd.s32 %v1882, 120
        %1884 = vset.pattern.permute.xlu0 %v1883
        %1885 = vperm.xlu0 %1884, %v416
        %v1886 = vpop.permute.xlu0 %1885
        %v1887 = vlaneseq
        %v1888 = vshrl.u32 %v1887, 7
        %v1889 = vadd.s32 %v1888, 112
        %1890 = vset.pattern.permute.xlu0 %v1889
        %1891 = vperm.xlu0 %1890, %v429
        %v1892 = vpop.permute.xlu0 %1891
        %v1893 = vlaneseq
        %v1894 = vshrl.u32 %v1893, 7
        %v1895 = vadd.s32 %v1894, 120
        %1896 = vset.pattern.permute.xlu0 %v1895
        %1897 = vperm.xlu0 %1896, %v429
        %v1898 = vpop.permute.xlu0 %1897
        %v1899 = vlaneseq
        %v1900 = vshrl.u32 %v1899, 7
        %v1901 = vadd.s32 %v1900, 112
        %1902 = vset.pattern.permute.xlu0 %v1901
        %1903 = vperm.xlu0 %1902, %v442
        %v1904 = vpop.permute.xlu0 %1903
        %v1905 = vlaneseq
        %v1906 = vshrl.u32 %v1905, 7
        %v1907 = vadd.s32 %v1906, 120
        %1908 = vset.pattern.permute.xlu0 %v1907
        %1909 = vperm.xlu0 %1908, %v442
        %v1910 = vpop.permute.xlu0 %1909
        %vm1911 = vcmp.eq.s32.totalorder %v1820, %v349
        %vm1912 = vcmp.eq.s32.totalorder %v1826, %v349
        %vm1913 = vcmp.eq.s32.totalorder %v1832, %v349
        %vm1914 = vcmp.eq.s32.totalorder %v1838, %v349
        %vm1915 = vcmp.eq.s32.totalorder %v1844, %v349
        %vm1916 = vcmp.eq.s32.totalorder %v1850, %v349
        %vm1917 = vcmp.eq.s32.totalorder %v1856, %v349
        %vm1918 = vcmp.eq.s32.totalorder %v1862, %v349
        %vm1919 = vcmp.eq.s32.totalorder %v1868, %v349
        %vm1920 = vcmp.eq.s32.totalorder %v1874, %v349
        %vm1921 = vcmp.eq.s32.totalorder %v1880, %v349
        %vm1922 = vcmp.eq.s32.totalorder %v1886, %v349
        %vm1923 = vcmp.eq.s32.totalorder %v1892, %v349
        %vm1924 = vcmp.eq.s32.totalorder %v1898, %v349
        %vm1925 = vcmp.eq.s32.totalorder %v1904, %v349
        %vm1926 = vcmp.eq.s32.totalorder %v1910, %v349
        %v1927 = vsel %vm1911, 1, 0
        %v1928 = vsel %vm1912, 1, 0
        %v1929 = vsel %vm1913, 1, 0
        %v1930 = vsel %vm1914, 1, 0
        %v1931 = vsel %vm1915, 1, 0
        %v1932 = vsel %vm1916, 1, 0
        %v1933 = vsel %vm1917, 1, 0
        %v1934 = vsel %vm1918, 1, 0
        %v1935 = vsel %vm1919, 1, 0
        %v1936 = vsel %vm1920, 1, 0
        %v1937 = vsel %vm1921, 1, 0
        %v1938 = vsel %vm1922, 1, 0
        %v1939 = vsel %vm1923, 1, 0
        %v1940 = vsel %vm1924, 1, 0
        %v1941 = vsel %vm1925, 1, 0
        %v1942 = vsel %vm1926, 1, 0
        %v1943 = vcvt.s32.f32 %v1927
        %v1944 = vcvt.s32.f32 %v1928
        %v1945 = vcvt.s32.f32 %v1929
        %v1946 = vcvt.s32.f32 %v1930
        %v1947 = vcvt.s32.f32 %v1931
        %v1948 = vcvt.s32.f32 %v1932
        %v1949 = vcvt.s32.f32 %v1933
        %v1950 = vcvt.s32.f32 %v1934
        %v1951 = vcvt.s32.f32 %v1935
        %v1952 = vcvt.s32.f32 %v1936
        %v1953 = vcvt.s32.f32 %v1937
        %v1954 = vcvt.s32.f32 %v1938
        %v1955 = vcvt.s32.f32 %v1939
        %v1956 = vcvt.s32.f32 %v1940
        %v1957 = vcvt.s32.f32 %v1941
        %v1958 = vcvt.s32.f32 %v1942
        %v1959 = vadd.f32 %v1943, %v1944
        %v1960 = vrot.slane %v1959, 4
        %v1961 = vadd.f32 %v1959, %v1960
        %v1962 = vrot.slane %v1961, 2
        %v1963 = vadd.f32 %v1961, %v1962
        %v1964 = vrot.slane %v1963, 1
        %v1965 = vadd.f32 %v1963, %v1964
        %v1966 = vadd.f32 %v1945, %v1946
        %v1967 = vrot.slane %v1966, 4
        %v1968 = vadd.f32 %v1966, %v1967
        %v1969 = vrot.slane %v1968, 2
        %v1970 = vadd.f32 %v1968, %v1969
        %v1971 = vrot.slane %v1970, 1
        %v1972 = vadd.f32 %v1970, %v1971
        %v1973 = vadd.f32 %v1947, %v1948
        %v1974 = vrot.slane %v1973, 4
        %v1975 = vadd.f32 %v1973, %v1974
        %v1976 = vrot.slane %v1975, 2
        %v1977 = vadd.f32 %v1975, %v1976
        %v1978 = vrot.slane %v1977, 1
        %v1979 = vadd.f32 %v1977, %v1978
        %v1980 = vadd.f32 %v1949, %v1950
        %v1981 = vrot.slane %v1980, 4
        %v1982 = vadd.f32 %v1980, %v1981
        %v1983 = vrot.slane %v1982, 2
        %v1984 = vadd.f32 %v1982, %v1983
        %v1985 = vrot.slane %v1984, 1
        %v1986 = vadd.f32 %v1984, %v1985
        %v1987 = vadd.f32 %v1951, %v1952
        %v1988 = vrot.slane %v1987, 4
        %v1989 = vadd.f32 %v1987, %v1988
        %v1990 = vrot.slane %v1989, 2
        %v1991 = vadd.f32 %v1989, %v1990
        %v1992 = vrot.slane %v1991, 1
        %v1993 = vadd.f32 %v1991, %v1992
        %v1994 = vadd.f32 %v1953, %v1954
        %v1995 = vrot.slane %v1994, 4
        %v1996 = vadd.f32 %v1994, %v1995
        %v1997 = vrot.slane %v1996, 2
        %v1998 = vadd.f32 %v1996, %v1997
        %v1999 = vrot.slane %v1998, 1
        %v2000 = vadd.f32 %v1998, %v1999
        %v2001 = vadd.f32 %v1955, %v1956
        %v2002 = vrot.slane %v2001, 4
        %v2003 = vadd.f32 %v2001, %v2002
        %v2004 = vrot.slane %v2003, 2
        %v2005 = vadd.f32 %v2003, %v2004
        %v2006 = vrot.slane %v2005, 1
        %v2007 = vadd.f32 %v2005, %v2006
        %v2008 = vadd.f32 %v1957, %v1958
        %v2009 = vrot.slane %v2008, 4
        %v2010 = vadd.f32 %v2008, %v2009
        %v2011 = vrot.slane %v2010, 2
        %v2012 = vadd.f32 %v2010, %v2011
        %v2013 = vrot.slane %v2012, 1
        %v2014 = vadd.f32 %v2012, %v2013
        %v2015 = vadd.f32 %v1807, %v1965
        %v2016 = vadd.f32 %v1808, %v1972
        %v2017 = vadd.f32 %v1809, %v1979
        %v2018 = vadd.f32 %v1810, %v1986
        %v2019 = vadd.f32 %v1811, %v1993
        %v2020 = vadd.f32 %v1812, %v2000
        %v2021 = vadd.f32 %v1813, %v2007
        %v2022 = vadd.f32 %v1814, %v2014
        %v2023 = vperm.slane %v341, 0
        %v2024 = vlaneseq
        %v2025 = vshrl.u32 %v2024, 7
        %2027 = vset.pattern.permute.xlu0 %v2025
        %2028 = vperm.xlu0 %2027, %v2023
        %v2029 = vpop.permute.xlu0 %2028
        %v2030 = vlaneseq
        %v2031 = vshrl.u32 %v2030, 7
        %v2032 = vadd.s32 %v2031, 8
        %2033 = vset.pattern.permute.xlu0 %v2032
        %2034 = vperm.xlu0 %2033, %v2023
        %v2035 = vpop.permute.xlu0 %2034
        %v2036 = vperm.slane %v341, 1
        %v2037 = vlaneseq
        %v2038 = vshrl.u32 %v2037, 7
        %2040 = vset.pattern.permute.xlu0 %v2038
        %2041 = vperm.xlu0 %2040, %v2036
        %v2042 = vpop.permute.xlu0 %2041
        %v2043 = vlaneseq
        %v2044 = vshrl.u32 %v2043, 7
        %v2045 = vadd.s32 %v2044, 8
        %2046 = vset.pattern.permute.xlu0 %v2045
        %2047 = vperm.xlu0 %2046, %v2036
        %v2048 = vpop.permute.xlu0 %2047
        %v2049 = vperm.slane %v341, 2
        %v2050 = vlaneseq
        %v2051 = vshrl.u32 %v2050, 7
        %2053 = vset.pattern.permute.xlu0 %v2051
        %2054 = vperm.xlu0 %2053, %v2049
        %v2055 = vpop.permute.xlu0 %2054
        %v2056 = vlaneseq
        %v2057 = vshrl.u32 %v2056, 7
        %v2058 = vadd.s32 %v2057, 8
        %2059 = vset.pattern.permute.xlu0 %v2058
        %2060 = vperm.xlu0 %2059, %v2049
        %v2061 = vpop.permute.xlu0 %2060
        %v2062 = vperm.slane %v341, 3
        %v2063 = vlaneseq
        %v2064 = vshrl.u32 %v2063, 7
        %2066 = vset.pattern.permute.xlu0 %v2064
        %2067 = vperm.xlu0 %2066, %v2062
        %v2068 = vpop.permute.xlu0 %2067
        %v2069 = vlaneseq
        %v2070 = vshrl.u32 %v2069, 7
        %v2071 = vadd.s32 %v2070, 8
        %2072 = vset.pattern.permute.xlu0 %v2071
        %2073 = vperm.xlu0 %2072, %v2062
        %v2074 = vpop.permute.xlu0 %2073
        %v2075 = vperm.slane %v341, 4
        %v2076 = vlaneseq
        %v2077 = vshrl.u32 %v2076, 7
        %2079 = vset.pattern.permute.xlu0 %v2077
        %2080 = vperm.xlu0 %2079, %v2075
        %v2081 = vpop.permute.xlu0 %2080
        %v2082 = vlaneseq
        %v2083 = vshrl.u32 %v2082, 7
        %v2084 = vadd.s32 %v2083, 8
        %2085 = vset.pattern.permute.xlu0 %v2084
        %2086 = vperm.xlu0 %2085, %v2075
        %v2087 = vpop.permute.xlu0 %2086
        %v2088 = vperm.slane %v341, 5
        %v2089 = vlaneseq
        %v2090 = vshrl.u32 %v2089, 7
        %2092 = vset.pattern.permute.xlu0 %v2090
        %2093 = vperm.xlu0 %2092, %v2088
        %v2094 = vpop.permute.xlu0 %2093
        %v2095 = vlaneseq
        %v2096 = vshrl.u32 %v2095, 7
        %v2097 = vadd.s32 %v2096, 8
        %2098 = vset.pattern.permute.xlu0 %v2097
        %2099 = vperm.xlu0 %2098, %v2088
        %v2100 = vpop.permute.xlu0 %2099
        %v2101 = vperm.slane %v341, 6
        %v2102 = vlaneseq
        %v2103 = vshrl.u32 %v2102, 7
        %2105 = vset.pattern.permute.xlu0 %v2103
        %2106 = vperm.xlu0 %2105, %v2101
        %v2107 = vpop.permute.xlu0 %2106
        %v2108 = vlaneseq
        %v2109 = vshrl.u32 %v2108, 7
        %v2110 = vadd.s32 %v2109, 8
        %2111 = vset.pattern.permute.xlu0 %v2110
        %2112 = vperm.xlu0 %2111, %v2101
        %v2113 = vpop.permute.xlu0 %2112
        %v2114 = vperm.slane %v341, 7
        %v2115 = vlaneseq
        %v2116 = vshrl.u32 %v2115, 7
        %2118 = vset.pattern.permute.xlu0 %v2116
        %2119 = vperm.xlu0 %2118, %v2114
        %v2120 = vpop.permute.xlu0 %2119
        %v2121 = vlaneseq
        %v2122 = vshrl.u32 %v2121, 7
        %v2123 = vadd.s32 %v2122, 8
        %2124 = vset.pattern.permute.xlu0 %v2123
        %2125 = vperm.xlu0 %2124, %v2114
        %v2126 = vpop.permute.xlu0 %2125
        %vm2127 = vcmp.eq.s32.totalorder %v2029, %v349
        %vm2128 = vcmp.eq.s32.totalorder %v2035, %v349
        %vm2129 = vcmp.eq.s32.totalorder %v2042, %v349
        %vm2130 = vcmp.eq.s32.totalorder %v2048, %v349
        %vm2131 = vcmp.eq.s32.totalorder %v2055, %v349
        %vm2132 = vcmp.eq.s32.totalorder %v2061, %v349
        %vm2133 = vcmp.eq.s32.totalorder %v2068, %v349
        %vm2134 = vcmp.eq.s32.totalorder %v2074, %v349
        %vm2135 = vcmp.eq.s32.totalorder %v2081, %v349
        %vm2136 = vcmp.eq.s32.totalorder %v2087, %v349
        %vm2137 = vcmp.eq.s32.totalorder %v2094, %v349
        %vm2138 = vcmp.eq.s32.totalorder %v2100, %v349
        %vm2139 = vcmp.eq.s32.totalorder %v2107, %v349
        %vm2140 = vcmp.eq.s32.totalorder %v2113, %v349
        %vm2141 = vcmp.eq.s32.totalorder %v2120, %v349
        %vm2142 = vcmp.eq.s32.totalorder %v2126, %v349
        %v2143 = vsel %vm2127, 1, 0
        %v2144 = vsel %vm2128, 1, 0
        %v2145 = vsel %vm2129, 1, 0
        %v2146 = vsel %vm2130, 1, 0
        %v2147 = vsel %vm2131, 1, 0
        %v2148 = vsel %vm2132, 1, 0
        %v2149 = vsel %vm2133, 1, 0
        %v2150 = vsel %vm2134, 1, 0
        %v2151 = vsel %vm2135, 1, 0
        %v2152 = vsel %vm2136, 1, 0
        %v2153 = vsel %vm2137, 1, 0
        %v2154 = vsel %vm2138, 1, 0
        %v2155 = vsel %vm2139, 1, 0
        %v2156 = vsel %vm2140, 1, 0
        %v2157 = vsel %vm2141, 1, 0
        %v2158 = vsel %vm2142, 1, 0
        %v2159 = vcvt.s32.f32 %v2143
        %v2160 = vcvt.s32.f32 %v2144
        %v2161 = vcvt.s32.f32 %v2145
        %v2162 = vcvt.s32.f32 %v2146
        %v2163 = vcvt.s32.f32 %v2147
        %v2164 = vcvt.s32.f32 %v2148
        %v2165 = vcvt.s32.f32 %v2149
        %v2166 = vcvt.s32.f32 %v2150
        %v2167 = vcvt.s32.f32 %v2151
        %v2168 = vcvt.s32.f32 %v2152
        %v2169 = vcvt.s32.f32 %v2153
        %v2170 = vcvt.s32.f32 %v2154
        %v2171 = vcvt.s32.f32 %v2155
        %v2172 = vcvt.s32.f32 %v2156
        %v2173 = vcvt.s32.f32 %v2157
        %v2174 = vcvt.s32.f32 %v2158
        %v2175 = vadd.f32 %v2159, %v2160
        %v2176 = vrot.slane %v2175, 4
        %v2177 = vadd.f32 %v2175, %v2176
        %v2178 = vrot.slane %v2177, 2
        %v2179 = vadd.f32 %v2177, %v2178
        %v2180 = vrot.slane %v2179, 1
        %v2181 = vadd.f32 %v2179, %v2180
        %v2182 = vadd.f32 %v2161, %v2162
        %v2183 = vrot.slane %v2182, 4
        %v2184 = vadd.f32 %v2182, %v2183
        %v2185 = vrot.slane %v2184, 2
        %v2186 = vadd.f32 %v2184, %v2185
        %v2187 = vrot.slane %v2186, 1
        %v2188 = vadd.f32 %v2186, %v2187
        %v2189 = vadd.f32 %v2163, %v2164
        %v2190 = vrot.slane %v2189, 4
        %v2191 = vadd.f32 %v2189, %v2190
        %v2192 = vrot.slane %v2191, 2
        %v2193 = vadd.f32 %v2191, %v2192
        %v2194 = vrot.slane %v2193, 1
        %v2195 = vadd.f32 %v2193, %v2194
        %v2196 = vadd.f32 %v2165, %v2166
        %v2197 = vrot.slane %v2196, 4
        %v2198 = vadd.f32 %v2196, %v2197
        %v2199 = vrot.slane %v2198, 2
        %v2200 = vadd.f32 %v2198, %v2199
        %v2201 = vrot.slane %v2200, 1
        %v2202 = vadd.f32 %v2200, %v2201
        %v2203 = vadd.f32 %v2167, %v2168
        %v2204 = vrot.slane %v2203, 4
        %v2205 = vadd.f32 %v2203, %v2204
        %v2206 = vrot.slane %v2205, 2
        %v2207 = vadd.f32 %v2205, %v2206
        %v2208 = vrot.slane %v2207, 1
        %v2209 = vadd.f32 %v2207, %v2208
        %v2210 = vadd.f32 %v2169, %v2170
        %v2211 = vrot.slane %v2210, 4
        %v2212 = vadd.f32 %v2210, %v2211
        %v2213 = vrot.slane %v2212, 2
        %v2214 = vadd.f32 %v2212, %v2213
        %v2215 = vrot.slane %v2214, 1
        %v2216 = vadd.f32 %v2214, %v2215
        %v2217 = vadd.f32 %v2171, %v2172
        %v2218 = vrot.slane %v2217, 4
        %v2219 = vadd.f32 %v2217, %v2218
        %v2220 = vrot.slane %v2219, 2
        %v2221 = vadd.f32 %v2219, %v2220
        %v2222 = vrot.slane %v2221, 1
        %v2223 = vadd.f32 %v2221, %v2222
        %v2224 = vadd.f32 %v2173, %v2174
        %v2225 = vrot.slane %v2224, 4
        %v2226 = vadd.f32 %v2224, %v2225
        %v2227 = vrot.slane %v2226, 2
        %v2228 = vadd.f32 %v2226, %v2227
        %v2229 = vrot.slane %v2228, 1
        %v2230 = vadd.f32 %v2228, %v2229
        %v2231 = vadd.f32 %v2015, %v2181
        %v2232 = vadd.f32 %v2016, %v2188
        %v2233 = vadd.f32 %v2017, %v2195
        %v2234 = vadd.f32 %v2018, %v2202
        %v2235 = vadd.f32 %v2019, %v2209
        %v2236 = vadd.f32 %v2020, %v2216
        %v2237 = vadd.f32 %v2021, %v2223
        %v2238 = vadd.f32 %v2022, %v2230
        %v2239 = vlaneseq
        %v2240 = vshrl.u32 %v2239, 7
        %v2241 = vadd.s32 %v2240, 16
        %2242 = vset.pattern.permute.xlu0 %v2241
        %2243 = vperm.xlu0 %2242, %v2023
        %v2244 = vpop.permute.xlu0 %2243
        %v2245 = vlaneseq
        %v2246 = vshrl.u32 %v2245, 7
        %v2247 = vadd.s32 %v2246, 24
        %2248 = vset.pattern.permute.xlu0 %v2247
        %2249 = vperm.xlu0 %2248, %v2023
        %v2250 = vpop.permute.xlu0 %2249
        %v2251 = vlaneseq
        %v2252 = vshrl.u32 %v2251, 7
        %v2253 = vadd.s32 %v2252, 16
        %2254 = vset.pattern.permute.xlu0 %v2253
        %2255 = vperm.xlu0 %2254, %v2036
        %v2256 = vpop.permute.xlu0 %2255
        %v2257 = vlaneseq
        %v2258 = vshrl.u32 %v2257, 7
        %v2259 = vadd.s32 %v2258, 24
        %2260 = vset.pattern.permute.xlu0 %v2259
        %2261 = vperm.xlu0 %2260, %v2036
        %v2262 = vpop.permute.xlu0 %2261
        %v2263 = vlaneseq
        %v2264 = vshrl.u32 %v2263, 7
        %v2265 = vadd.s32 %v2264, 16
        %2266 = vset.pattern.permute.xlu0 %v2265
        %2267 = vperm.xlu0 %2266, %v2049
        %v2268 = vpop.permute.xlu0 %2267
        %v2269 = vlaneseq
        %v2270 = vshrl.u32 %v2269, 7
        %v2271 = vadd.s32 %v2270, 24
        %2272 = vset.pattern.permute.xlu0 %v2271
        %2273 = vperm.xlu0 %2272, %v2049
        %v2274 = vpop.permute.xlu0 %2273
        %v2275 = vlaneseq
        %v2276 = vshrl.u32 %v2275, 7
        %v2277 = vadd.s32 %v2276, 16
        %2278 = vset.pattern.permute.xlu0 %v2277
        %2279 = vperm.xlu0 %2278, %v2062
        %v2280 = vpop.permute.xlu0 %2279
        %v2281 = vlaneseq
        %v2282 = vshrl.u32 %v2281, 7
        %v2283 = vadd.s32 %v2282, 24
        %2284 = vset.pattern.permute.xlu0 %v2283
        %2285 = vperm.xlu0 %2284, %v2062
        %v2286 = vpop.permute.xlu0 %2285
        %v2287 = vlaneseq
        %v2288 = vshrl.u32 %v2287, 7
        %v2289 = vadd.s32 %v2288, 16
        %2290 = vset.pattern.permute.xlu0 %v2289
        %2291 = vperm.xlu0 %2290, %v2075
        %v2292 = vpop.permute.xlu0 %2291
        %v2293 = vlaneseq
        %v2294 = vshrl.u32 %v2293, 7
        %v2295 = vadd.s32 %v2294, 24
        %2296 = vset.pattern.permute.xlu0 %v2295
        %2297 = vperm.xlu0 %2296, %v2075
        %v2298 = vpop.permute.xlu0 %2297
        %v2299 = vlaneseq
        %v2300 = vshrl.u32 %v2299, 7
        %v2301 = vadd.s32 %v2300, 16
        %2302 = vset.pattern.permute.xlu0 %v2301
        %2303 = vperm.xlu0 %2302, %v2088
        %v2304 = vpop.permute.xlu0 %2303
        %v2305 = vlaneseq
        %v2306 = vshrl.u32 %v2305, 7
        %v2307 = vadd.s32 %v2306, 24
        %2308 = vset.pattern.permute.xlu0 %v2307
        %2309 = vperm.xlu0 %2308, %v2088
        %v2310 = vpop.permute.xlu0 %2309
        %v2311 = vlaneseq
        %v2312 = vshrl.u32 %v2311, 7
        %v2313 = vadd.s32 %v2312, 16
        %2314 = vset.pattern.permute.xlu0 %v2313
        %2315 = vperm.xlu0 %2314, %v2101
        %v2316 = vpop.permute.xlu0 %2315
        %v2317 = vlaneseq
        %v2318 = vshrl.u32 %v2317, 7
        %v2319 = vadd.s32 %v2318, 24
        %2320 = vset.pattern.permute.xlu0 %v2319
        %2321 = vperm.xlu0 %2320, %v2101
        %v2322 = vpop.permute.xlu0 %2321
        %v2323 = vlaneseq
        %v2324 = vshrl.u32 %v2323, 7
        %v2325 = vadd.s32 %v2324, 16
        %2326 = vset.pattern.permute.xlu0 %v2325
        %2327 = vperm.xlu0 %2326, %v2114
        %v2328 = vpop.permute.xlu0 %2327
        %v2329 = vlaneseq
        %v2330 = vshrl.u32 %v2329, 7
        %v2331 = vadd.s32 %v2330, 24
        %2332 = vset.pattern.permute.xlu0 %v2331
        %2333 = vperm.xlu0 %2332, %v2114
        %v2334 = vpop.permute.xlu0 %2333
        %vm2335 = vcmp.eq.s32.totalorder %v2244, %v349
        %vm2336 = vcmp.eq.s32.totalorder %v2250, %v349
        %vm2337 = vcmp.eq.s32.totalorder %v2256, %v349
        %vm2338 = vcmp.eq.s32.totalorder %v2262, %v349
        %vm2339 = vcmp.eq.s32.totalorder %v2268, %v349
        %vm2340 = vcmp.eq.s32.totalorder %v2274, %v349
        %vm2341 = vcmp.eq.s32.totalorder %v2280, %v349
        %vm2342 = vcmp.eq.s32.totalorder %v2286, %v349
        %vm2343 = vcmp.eq.s32.totalorder %v2292, %v349
        %vm2344 = vcmp.eq.s32.totalorder %v2298, %v349
        %vm2345 = vcmp.eq.s32.totalorder %v2304, %v349
        %vm2346 = vcmp.eq.s32.totalorder %v2310, %v349
        %vm2347 = vcmp.eq.s32.totalorder %v2316, %v349
        %vm2348 = vcmp.eq.s32.totalorder %v2322, %v349
        %vm2349 = vcmp.eq.s32.totalorder %v2328, %v349
        %vm2350 = vcmp.eq.s32.totalorder %v2334, %v349
        %v2351 = vsel %vm2335, 1, 0
        %v2352 = vsel %vm2336, 1, 0
        %v2353 = vsel %vm2337, 1, 0
        %v2354 = vsel %vm2338, 1, 0
        %v2355 = vsel %vm2339, 1, 0
        %v2356 = vsel %vm2340, 1, 0
        %v2357 = vsel %vm2341, 1, 0
        %v2358 = vsel %vm2342, 1, 0
        %v2359 = vsel %vm2343, 1, 0
        %v2360 = vsel %vm2344, 1, 0
        %v2361 = vsel %vm2345, 1, 0
        %v2362 = vsel %vm2346, 1, 0
        %v2363 = vsel %vm2347, 1, 0
        %v2364 = vsel %vm2348, 1, 0
        %v2365 = vsel %vm2349, 1, 0
        %v2366 = vsel %vm2350, 1, 0
        %v2367 = vcvt.s32.f32 %v2351
        %v2368 = vcvt.s32.f32 %v2352
        %v2369 = vcvt.s32.f32 %v2353
        %v2370 = vcvt.s32.f32 %v2354
        %v2371 = vcvt.s32.f32 %v2355
        %v2372 = vcvt.s32.f32 %v2356
        %v2373 = vcvt.s32.f32 %v2357
        %v2374 = vcvt.s32.f32 %v2358
        %v2375 = vcvt.s32.f32 %v2359
        %v2376 = vcvt.s32.f32 %v2360
        %v2377 = vcvt.s32.f32 %v2361
        %v2378 = vcvt.s32.f32 %v2362
        %v2379 = vcvt.s32.f32 %v2363
        %v2380 = vcvt.s32.f32 %v2364
        %v2381 = vcvt.s32.f32 %v2365
        %v2382 = vcvt.s32.f32 %v2366
        %v2383 = vadd.f32 %v2367, %v2368
        %v2384 = vrot.slane %v2383, 4
        %v2385 = vadd.f32 %v2383, %v2384
        %v2386 = vrot.slane %v2385, 2
        %v2387 = vadd.f32 %v2385, %v2386
        %v2388 = vrot.slane %v2387, 1
        %v2389 = vadd.f32 %v2387, %v2388
        %v2390 = vadd.f32 %v2369, %v2370
        %v2391 = vrot.slane %v2390, 4
        %v2392 = vadd.f32 %v2390, %v2391
        %v2393 = vrot.slane %v2392, 2
        %v2394 = vadd.f32 %v2392, %v2393
        %v2395 = vrot.slane %v2394, 1
        %v2396 = vadd.f32 %v2394, %v2395
        %v2397 = vadd.f32 %v2371, %v2372
        %v2398 = vrot.slane %v2397, 4
        %v2399 = vadd.f32 %v2397, %v2398
        %v2400 = vrot.slane %v2399, 2
        %v2401 = vadd.f32 %v2399, %v2400
        %v2402 = vrot.slane %v2401, 1
        %v2403 = vadd.f32 %v2401, %v2402
        %v2404 = vadd.f32 %v2373, %v2374
        %v2405 = vrot.slane %v2404, 4
        %v2406 = vadd.f32 %v2404, %v2405
        %v2407 = vrot.slane %v2406, 2
        %v2408 = vadd.f32 %v2406, %v2407
        %v2409 = vrot.slane %v2408, 1
        %v2410 = vadd.f32 %v2408, %v2409
        %v2411 = vadd.f32 %v2375, %v2376
        %v2412 = vrot.slane %v2411, 4
        %v2413 = vadd.f32 %v2411, %v2412
        %v2414 = vrot.slane %v2413, 2
        %v2415 = vadd.f32 %v2413, %v2414
        %v2416 = vrot.slane %v2415, 1
        %v2417 = vadd.f32 %v2415, %v2416
        %v2418 = vadd.f32 %v2377, %v2378
        %v2419 = vrot.slane %v2418, 4
        %v2420 = vadd.f32 %v2418, %v2419
        %v2421 = vrot.slane %v2420, 2
        %v2422 = vadd.f32 %v2420, %v2421
        %v2423 = vrot.slane %v2422, 1
        %v2424 = vadd.f32 %v2422, %v2423
        %v2425 = vadd.f32 %v2379, %v2380
        %v2426 = vrot.slane %v2425, 4
        %v2427 = vadd.f32 %v2425, %v2426
        %v2428 = vrot.slane %v2427, 2
        %v2429 = vadd.f32 %v2427, %v2428
        %v2430 = vrot.slane %v2429, 1
        %v2431 = vadd.f32 %v2429, %v2430
        %v2432 = vadd.f32 %v2381, %v2382
        %v2433 = vrot.slane %v2432, 4
        %v2434 = vadd.f32 %v2432, %v2433
        %v2435 = vrot.slane %v2434, 2
        %v2436 = vadd.f32 %v2434, %v2435
        %v2437 = vrot.slane %v2436, 1
        %v2438 = vadd.f32 %v2436, %v2437
        %v2439 = vadd.f32 %v2231, %v2389
        %v2440 = vadd.f32 %v2232, %v2396
        %v2441 = vadd.f32 %v2233, %v2403
        %v2442 = vadd.f32 %v2234, %v2410
        %v2443 = vadd.f32 %v2235, %v2417
        %v2444 = vadd.f32 %v2236, %v2424
        %v2445 = vadd.f32 %v2237, %v2431
        %v2446 = vadd.f32 %v2238, %v2438
        %v2447 = vlaneseq
        %v2448 = vshrl.u32 %v2447, 7
        %v2449 = vadd.s32 %v2448, 32
        %2450 = vset.pattern.permute.xlu0 %v2449
        %2451 = vperm.xlu0 %2450, %v2023
        %v2452 = vpop.permute.xlu0 %2451
        %v2453 = vlaneseq
        %v2454 = vshrl.u32 %v2453, 7
        %v2455 = vadd.s32 %v2454, 40
        %2456 = vset.pattern.permute.xlu0 %v2455
        %2457 = vperm.xlu0 %2456, %v2023
        %v2458 = vpop.permute.xlu0 %2457
        %v2459 = vlaneseq
        %v2460 = vshrl.u32 %v2459, 7
        %v2461 = vadd.s32 %v2460, 32
        %2462 = vset.pattern.permute.xlu0 %v2461
        %2463 = vperm.xlu0 %2462, %v2036
        %v2464 = vpop.permute.xlu0 %2463
        %v2465 = vlaneseq
        %v2466 = vshrl.u32 %v2465, 7
        %v2467 = vadd.s32 %v2466, 40
        %2468 = vset.pattern.permute.xlu0 %v2467
        %2469 = vperm.xlu0 %2468, %v2036
        %v2470 = vpop.permute.xlu0 %2469
        %v2471 = vlaneseq
        %v2472 = vshrl.u32 %v2471, 7
        %v2473 = vadd.s32 %v2472, 32
        %2474 = vset.pattern.permute.xlu0 %v2473
        %2475 = vperm.xlu0 %2474, %v2049
        %v2476 = vpop.permute.xlu0 %2475
        %v2477 = vlaneseq
        %v2478 = vshrl.u32 %v2477, 7
        %v2479 = vadd.s32 %v2478, 40
        %2480 = vset.pattern.permute.xlu0 %v2479
        %2481 = vperm.xlu0 %2480, %v2049
        %v2482 = vpop.permute.xlu0 %2481
        %v2483 = vlaneseq
        %v2484 = vshrl.u32 %v2483, 7
        %v2485 = vadd.s32 %v2484, 32
        %2486 = vset.pattern.permute.xlu0 %v2485
        %2487 = vperm.xlu0 %2486, %v2062
        %v2488 = vpop.permute.xlu0 %2487
        %v2489 = vlaneseq
        %v2490 = vshrl.u32 %v2489, 7
        %v2491 = vadd.s32 %v2490, 40
        %2492 = vset.pattern.permute.xlu0 %v2491
        %2493 = vperm.xlu0 %2492, %v2062
        %v2494 = vpop.permute.xlu0 %2493
        %v2495 = vlaneseq
        %v2496 = vshrl.u32 %v2495, 7
        %v2497 = vadd.s32 %v2496, 32
        %2498 = vset.pattern.permute.xlu0 %v2497
        %2499 = vperm.xlu0 %2498, %v2075
        %v2500 = vpop.permute.xlu0 %2499
        %v2501 = vlaneseq
        %v2502 = vshrl.u32 %v2501, 7
        %v2503 = vadd.s32 %v2502, 40
        %2504 = vset.pattern.permute.xlu0 %v2503
        %2505 = vperm.xlu0 %2504, %v2075
        %v2506 = vpop.permute.xlu0 %2505
        %v2507 = vlaneseq
        %v2508 = vshrl.u32 %v2507, 7
        %v2509 = vadd.s32 %v2508, 32
        %2510 = vset.pattern.permute.xlu0 %v2509
        %2511 = vperm.xlu0 %2510, %v2088
        %v2512 = vpop.permute.xlu0 %2511
        %v2513 = vlaneseq
        %v2514 = vshrl.u32 %v2513, 7
        %v2515 = vadd.s32 %v2514, 40
        %2516 = vset.pattern.permute.xlu0 %v2515
        %2517 = vperm.xlu0 %2516, %v2088
        %v2518 = vpop.permute.xlu0 %2517
        %v2519 = vlaneseq
        %v2520 = vshrl.u32 %v2519, 7
        %v2521 = vadd.s32 %v2520, 32
        %2522 = vset.pattern.permute.xlu0 %v2521
        %2523 = vperm.xlu0 %2522, %v2101
        %v2524 = vpop.permute.xlu0 %2523
        %v2525 = vlaneseq
        %v2526 = vshrl.u32 %v2525, 7
        %v2527 = vadd.s32 %v2526, 40
        %2528 = vset.pattern.permute.xlu0 %v2527
        %2529 = vperm.xlu0 %2528, %v2101
        %v2530 = vpop.permute.xlu0 %2529
        %v2531 = vlaneseq
        %v2532 = vshrl.u32 %v2531, 7
        %v2533 = vadd.s32 %v2532, 32
        %2534 = vset.pattern.permute.xlu0 %v2533
        %2535 = vperm.xlu0 %2534, %v2114
        %v2536 = vpop.permute.xlu0 %2535
        %v2537 = vlaneseq
        %v2538 = vshrl.u32 %v2537, 7
        %v2539 = vadd.s32 %v2538, 40
        %2540 = vset.pattern.permute.xlu0 %v2539
        %2541 = vperm.xlu0 %2540, %v2114
        %v2542 = vpop.permute.xlu0 %2541
        %vm2543 = vcmp.eq.s32.totalorder %v2452, %v349
        %vm2544 = vcmp.eq.s32.totalorder %v2458, %v349
        %vm2545 = vcmp.eq.s32.totalorder %v2464, %v349
        %vm2546 = vcmp.eq.s32.totalorder %v2470, %v349
        %vm2547 = vcmp.eq.s32.totalorder %v2476, %v349
        %vm2548 = vcmp.eq.s32.totalorder %v2482, %v349
        %vm2549 = vcmp.eq.s32.totalorder %v2488, %v349
        %vm2550 = vcmp.eq.s32.totalorder %v2494, %v349
        %vm2551 = vcmp.eq.s32.totalorder %v2500, %v349
        %vm2552 = vcmp.eq.s32.totalorder %v2506, %v349
        %vm2553 = vcmp.eq.s32.totalorder %v2512, %v349
        %vm2554 = vcmp.eq.s32.totalorder %v2518, %v349
        %vm2555 = vcmp.eq.s32.totalorder %v2524, %v349
        %vm2556 = vcmp.eq.s32.totalorder %v2530, %v349
        %vm2557 = vcmp.eq.s32.totalorder %v2536, %v349
        %vm2558 = vcmp.eq.s32.totalorder %v2542, %v349
        %v2559 = vsel %vm2543, 1, 0
        %v2560 = vsel %vm2544, 1, 0
        %v2561 = vsel %vm2545, 1, 0
        %v2562 = vsel %vm2546, 1, 0
        %v2563 = vsel %vm2547, 1, 0
        %v2564 = vsel %vm2548, 1, 0
        %v2565 = vsel %vm2549, 1, 0
        %v2566 = vsel %vm2550, 1, 0
        %v2567 = vsel %vm2551, 1, 0
        %v2568 = vsel %vm2552, 1, 0
        %v2569 = vsel %vm2553, 1, 0
        %v2570 = vsel %vm2554, 1, 0
        %v2571 = vsel %vm2555, 1, 0
        %v2572 = vsel %vm2556, 1, 0
        %v2573 = vsel %vm2557, 1, 0
        %v2574 = vsel %vm2558, 1, 0
        %v2575 = vcvt.s32.f32 %v2559
        %v2576 = vcvt.s32.f32 %v2560
        %v2577 = vcvt.s32.f32 %v2561
        %v2578 = vcvt.s32.f32 %v2562
        %v2579 = vcvt.s32.f32 %v2563
        %v2580 = vcvt.s32.f32 %v2564
        %v2581 = vcvt.s32.f32 %v2565
        %v2582 = vcvt.s32.f32 %v2566
        %v2583 = vcvt.s32.f32 %v2567
        %v2584 = vcvt.s32.f32 %v2568
        %v2585 = vcvt.s32.f32 %v2569
        %v2586 = vcvt.s32.f32 %v2570
        %v2587 = vcvt.s32.f32 %v2571
        %v2588 = vcvt.s32.f32 %v2572
        %v2589 = vcvt.s32.f32 %v2573
        %v2590 = vcvt.s32.f32 %v2574
        %v2591 = vadd.f32 %v2575, %v2576
        %v2592 = vrot.slane %v2591, 4
        %v2593 = vadd.f32 %v2591, %v2592
        %v2594 = vrot.slane %v2593, 2
        %v2595 = vadd.f32 %v2593, %v2594
        %v2596 = vrot.slane %v2595, 1
        %v2597 = vadd.f32 %v2595, %v2596
        %v2598 = vadd.f32 %v2577, %v2578
        %v2599 = vrot.slane %v2598, 4
        %v2600 = vadd.f32 %v2598, %v2599
        %v2601 = vrot.slane %v2600, 2
        %v2602 = vadd.f32 %v2600, %v2601
        %v2603 = vrot.slane %v2602, 1
        %v2604 = vadd.f32 %v2602, %v2603
        %v2605 = vadd.f32 %v2579, %v2580
        %v2606 = vrot.slane %v2605, 4
        %v2607 = vadd.f32 %v2605, %v2606
        %v2608 = vrot.slane %v2607, 2
        %v2609 = vadd.f32 %v2607, %v2608
        %v2610 = vrot.slane %v2609, 1
        %v2611 = vadd.f32 %v2609, %v2610
        %v2612 = vadd.f32 %v2581, %v2582
        %v2613 = vrot.slane %v2612, 4
        %v2614 = vadd.f32 %v2612, %v2613
        %v2615 = vrot.slane %v2614, 2
        %v2616 = vadd.f32 %v2614, %v2615
        %v2617 = vrot.slane %v2616, 1
        %v2618 = vadd.f32 %v2616, %v2617
        %v2619 = vadd.f32 %v2583, %v2584
        %v2620 = vrot.slane %v2619, 4
        %v2621 = vadd.f32 %v2619, %v2620
        %v2622 = vrot.slane %v2621, 2
        %v2623 = vadd.f32 %v2621, %v2622
        %v2624 = vrot.slane %v2623, 1
        %v2625 = vadd.f32 %v2623, %v2624
        %v2626 = vadd.f32 %v2585, %v2586
        %v2627 = vrot.slane %v2626, 4
        %v2628 = vadd.f32 %v2626, %v2627
        %v2629 = vrot.slane %v2628, 2
        %v2630 = vadd.f32 %v2628, %v2629
        %v2631 = vrot.slane %v2630, 1
        %v2632 = vadd.f32 %v2630, %v2631
        %v2633 = vadd.f32 %v2587, %v2588
        %v2634 = vrot.slane %v2633, 4
        %v2635 = vadd.f32 %v2633, %v2634
        %v2636 = vrot.slane %v2635, 2
        %v2637 = vadd.f32 %v2635, %v2636
        %v2638 = vrot.slane %v2637, 1
        %v2639 = vadd.f32 %v2637, %v2638
        %v2640 = vadd.f32 %v2589, %v2590
        %v2641 = vrot.slane %v2640, 4
        %v2642 = vadd.f32 %v2640, %v2641
        %v2643 = vrot.slane %v2642, 2
        %v2644 = vadd.f32 %v2642, %v2643
        %v2645 = vrot.slane %v2644, 1
        %v2646 = vadd.f32 %v2644, %v2645
        %v2647 = vadd.f32 %v2439, %v2597
        %v2648 = vadd.f32 %v2440, %v2604
        %v2649 = vadd.f32 %v2441, %v2611
        %v2650 = vadd.f32 %v2442, %v2618
        %v2651 = vadd.f32 %v2443, %v2625
        %v2652 = vadd.f32 %v2444, %v2632
        %v2653 = vadd.f32 %v2445, %v2639
        %v2654 = vadd.f32 %v2446, %v2646
        %v2655 = vlaneseq
        %v2656 = vshrl.u32 %v2655, 7
        %v2657 = vadd.s32 %v2656, 48
        %2658 = vset.pattern.permute.xlu0 %v2657
        %2659 = vperm.xlu0 %2658, %v2023
        %v2660 = vpop.permute.xlu0 %2659
        %v2661 = vlaneseq
        %v2662 = vshrl.u32 %v2661, 7
        %v2663 = vadd.s32 %v2662, 56
        %2664 = vset.pattern.permute.xlu0 %v2663
        %2665 = vperm.xlu0 %2664, %v2023
        %v2666 = vpop.permute.xlu0 %2665
        %v2667 = vlaneseq
        %v2668 = vshrl.u32 %v2667, 7
        %v2669 = vadd.s32 %v2668, 48
        %2670 = vset.pattern.permute.xlu0 %v2669
        %2671 = vperm.xlu0 %2670, %v2036
        %v2672 = vpop.permute.xlu0 %2671
        %v2673 = vlaneseq
        %v2674 = vshrl.u32 %v2673, 7
        %v2675 = vadd.s32 %v2674, 56
        %2676 = vset.pattern.permute.xlu0 %v2675
        %2677 = vperm.xlu0 %2676, %v2036
        %v2678 = vpop.permute.xlu0 %2677
        %v2679 = vlaneseq
        %v2680 = vshrl.u32 %v2679, 7
        %v2681 = vadd.s32 %v2680, 48
        %2682 = vset.pattern.permute.xlu0 %v2681
        %2683 = vperm.xlu0 %2682, %v2049
        %v2684 = vpop.permute.xlu0 %2683
        %v2685 = vlaneseq
        %v2686 = vshrl.u32 %v2685, 7
        %v2687 = vadd.s32 %v2686, 56
        %2688 = vset.pattern.permute.xlu0 %v2687
        %2689 = vperm.xlu0 %2688, %v2049
        %v2690 = vpop.permute.xlu0 %2689
        %v2691 = vlaneseq
        %v2692 = vshrl.u32 %v2691, 7
        %v2693 = vadd.s32 %v2692, 48
        %2694 = vset.pattern.permute.xlu0 %v2693
        %2695 = vperm.xlu0 %2694, %v2062
        %v2696 = vpop.permute.xlu0 %2695
        %v2697 = vlaneseq
        %v2698 = vshrl.u32 %v2697, 7
        %v2699 = vadd.s32 %v2698, 56
        %2700 = vset.pattern.permute.xlu0 %v2699
        %2701 = vperm.xlu0 %2700, %v2062
        %v2702 = vpop.permute.xlu0 %2701
        %v2703 = vlaneseq
        %v2704 = vshrl.u32 %v2703, 7
        %v2705 = vadd.s32 %v2704, 48
        %2706 = vset.pattern.permute.xlu0 %v2705
        %2707 = vperm.xlu0 %2706, %v2075
        %v2708 = vpop.permute.xlu0 %2707
        %v2709 = vlaneseq
        %v2710 = vshrl.u32 %v2709, 7
        %v2711 = vadd.s32 %v2710, 56
        %2712 = vset.pattern.permute.xlu0 %v2711
        %2713 = vperm.xlu0 %2712, %v2075
        %v2714 = vpop.permute.xlu0 %2713
        %v2715 = vlaneseq
        %v2716 = vshrl.u32 %v2715, 7
        %v2717 = vadd.s32 %v2716, 48
        %2718 = vset.pattern.permute.xlu0 %v2717
        %2719 = vperm.xlu0 %2718, %v2088
        %v2720 = vpop.permute.xlu0 %2719
        %v2721 = vlaneseq
        %v2722 = vshrl.u32 %v2721, 7
        %v2723 = vadd.s32 %v2722, 56
        %2724 = vset.pattern.permute.xlu0 %v2723
        %2725 = vperm.xlu0 %2724, %v2088
        %v2726 = vpop.permute.xlu0 %2725
        %v2727 = vlaneseq
        %v2728 = vshrl.u32 %v2727, 7
        %v2729 = vadd.s32 %v2728, 48
        %2730 = vset.pattern.permute.xlu0 %v2729
        %2731 = vperm.xlu0 %2730, %v2101
        %v2732 = vpop.permute.xlu0 %2731
        %v2733 = vlaneseq
        %v2734 = vshrl.u32 %v2733, 7
        %v2735 = vadd.s32 %v2734, 56
        %2736 = vset.pattern.permute.xlu0 %v2735
        %2737 = vperm.xlu0 %2736, %v2101
        %v2738 = vpop.permute.xlu0 %2737
        %v2739 = vlaneseq
        %v2740 = vshrl.u32 %v2739, 7
        %v2741 = vadd.s32 %v2740, 48
        %2742 = vset.pattern.permute.xlu0 %v2741
        %2743 = vperm.xlu0 %2742, %v2114
        %v2744 = vpop.permute.xlu0 %2743
        %v2745 = vlaneseq
        %v2746 = vshrl.u32 %v2745, 7
        %v2747 = vadd.s32 %v2746, 56
        %2748 = vset.pattern.permute.xlu0 %v2747
        %2749 = vperm.xlu0 %2748, %v2114
        %v2750 = vpop.permute.xlu0 %2749
        %vm2751 = vcmp.eq.s32.totalorder %v2660, %v349
        %vm2752 = vcmp.eq.s32.totalorder %v2666, %v349
        %vm2753 = vcmp.eq.s32.totalorder %v2672, %v349
        %vm2754 = vcmp.eq.s32.totalorder %v2678, %v349
        %vm2755 = vcmp.eq.s32.totalorder %v2684, %v349
        %vm2756 = vcmp.eq.s32.totalorder %v2690, %v349
        %vm2757 = vcmp.eq.s32.totalorder %v2696, %v349
        %vm2758 = vcmp.eq.s32.totalorder %v2702, %v349
        %vm2759 = vcmp.eq.s32.totalorder %v2708, %v349
        %vm2760 = vcmp.eq.s32.totalorder %v2714, %v349
        %vm2761 = vcmp.eq.s32.totalorder %v2720, %v349
        %vm2762 = vcmp.eq.s32.totalorder %v2726, %v349
        %vm2763 = vcmp.eq.s32.totalorder %v2732, %v349
        %vm2764 = vcmp.eq.s32.totalorder %v2738, %v349
        %vm2765 = vcmp.eq.s32.totalorder %v2744, %v349
        %vm2766 = vcmp.eq.s32.totalorder %v2750, %v349
        %v2767 = vsel %vm2751, 1, 0
        %v2768 = vsel %vm2752, 1, 0
        %v2769 = vsel %vm2753, 1, 0
        %v2770 = vsel %vm2754, 1, 0
        %v2771 = vsel %vm2755, 1, 0
        %v2772 = vsel %vm2756, 1, 0
        %v2773 = vsel %vm2757, 1, 0
        %v2774 = vsel %vm2758, 1, 0
        %v2775 = vsel %vm2759, 1, 0
        %v2776 = vsel %vm2760, 1, 0
        %v2777 = vsel %vm2761, 1, 0
        %v2778 = vsel %vm2762, 1, 0
        %v2779 = vsel %vm2763, 1, 0
        %v2780 = vsel %vm2764, 1, 0
        %v2781 = vsel %vm2765, 1, 0
        %v2782 = vsel %vm2766, 1, 0
        %v2783 = vcvt.s32.f32 %v2767
        %v2784 = vcvt.s32.f32 %v2768
        %v2785 = vcvt.s32.f32 %v2769
        %v2786 = vcvt.s32.f32 %v2770
        %v2787 = vcvt.s32.f32 %v2771
        %v2788 = vcvt.s32.f32 %v2772
        %v2789 = vcvt.s32.f32 %v2773
        %v2790 = vcvt.s32.f32 %v2774
        %v2791 = vcvt.s32.f32 %v2775
        %v2792 = vcvt.s32.f32 %v2776
        %v2793 = vcvt.s32.f32 %v2777
        %v2794 = vcvt.s32.f32 %v2778
        %v2795 = vcvt.s32.f32 %v2779
        %v2796 = vcvt.s32.f32 %v2780
        %v2797 = vcvt.s32.f32 %v2781
        %v2798 = vcvt.s32.f32 %v2782
        %v2799 = vadd.f32 %v2783, %v2784
        %v2800 = vrot.slane %v2799, 4
        %v2801 = vadd.f32 %v2799, %v2800
        %v2802 = vrot.slane %v2801, 2
        %v2803 = vadd.f32 %v2801, %v2802
        %v2804 = vrot.slane %v2803, 1
        %v2805 = vadd.f32 %v2803, %v2804
        %v2806 = vadd.f32 %v2785, %v2786
        %v2807 = vrot.slane %v2806, 4
        %v2808 = vadd.f32 %v2806, %v2807
        %v2809 = vrot.slane %v2808, 2
        %v2810 = vadd.f32 %v2808, %v2809
        %v2811 = vrot.slane %v2810, 1
        %v2812 = vadd.f32 %v2810, %v2811
        %v2813 = vadd.f32 %v2787, %v2788
        %v2814 = vrot.slane %v2813, 4
        %v2815 = vadd.f32 %v2813, %v2814
        %v2816 = vrot.slane %v2815, 2
        %v2817 = vadd.f32 %v2815, %v2816
        %v2818 = vrot.slane %v2817, 1
        %v2819 = vadd.f32 %v2817, %v2818
        %v2820 = vadd.f32 %v2789, %v2790
        %v2821 = vrot.slane %v2820, 4
        %v2822 = vadd.f32 %v2820, %v2821
        %v2823 = vrot.slane %v2822, 2
        %v2824 = vadd.f32 %v2822, %v2823
        %v2825 = vrot.slane %v2824, 1
        %v2826 = vadd.f32 %v2824, %v2825
        %v2827 = vadd.f32 %v2791, %v2792
        %v2828 = vrot.slane %v2827, 4
        %v2829 = vadd.f32 %v2827, %v2828
        %v2830 = vrot.slane %v2829, 2
        %v2831 = vadd.f32 %v2829, %v2830
        %v2832 = vrot.slane %v2831, 1
        %v2833 = vadd.f32 %v2831, %v2832
        %v2834 = vadd.f32 %v2793, %v2794
        %v2835 = vrot.slane %v2834, 4
        %v2836 = vadd.f32 %v2834, %v2835
        %v2837 = vrot.slane %v2836, 2
        %v2838 = vadd.f32 %v2836, %v2837
        %v2839 = vrot.slane %v2838, 1
        %v2840 = vadd.f32 %v2838, %v2839
        %v2841 = vadd.f32 %v2795, %v2796
        %v2842 = vrot.slane %v2841, 4
        %v2843 = vadd.f32 %v2841, %v2842
        %v2844 = vrot.slane %v2843, 2
        %v2845 = vadd.f32 %v2843, %v2844
        %v2846 = vrot.slane %v2845, 1
        %v2847 = vadd.f32 %v2845, %v2846
        %v2848 = vadd.f32 %v2797, %v2798
        %v2849 = vrot.slane %v2848, 4
        %v2850 = vadd.f32 %v2848, %v2849
        %v2851 = vrot.slane %v2850, 2
        %v2852 = vadd.f32 %v2850, %v2851
        %v2853 = vrot.slane %v2852, 1
        %v2854 = vadd.f32 %v2852, %v2853
        %v2855 = vadd.f32 %v2647, %v2805
        %v2856 = vadd.f32 %v2648, %v2812
        %v2857 = vadd.f32 %v2649, %v2819
        %v2858 = vadd.f32 %v2650, %v2826
        %v2859 = vadd.f32 %v2651, %v2833
        %v2860 = vadd.f32 %v2652, %v2840
        %v2861 = vadd.f32 %v2653, %v2847
        %v2862 = vadd.f32 %v2654, %v2854
        %v2863 = vlaneseq
        %v2864 = vshrl.u32 %v2863, 7
        %v2865 = vadd.s32 %v2864, 64
        %2866 = vset.pattern.permute.xlu0 %v2865
        %2867 = vperm.xlu0 %2866, %v2023
        %v2868 = vpop.permute.xlu0 %2867
        %v2869 = vlaneseq
        %v2870 = vshrl.u32 %v2869, 7
        %v2871 = vadd.s32 %v2870, 72
        %2872 = vset.pattern.permute.xlu0 %v2871
        %2873 = vperm.xlu0 %2872, %v2023
        %v2874 = vpop.permute.xlu0 %2873
        %v2875 = vlaneseq
        %v2876 = vshrl.u32 %v2875, 7
        %v2877 = vadd.s32 %v2876, 64
        %2878 = vset.pattern.permute.xlu0 %v2877
        %2879 = vperm.xlu0 %2878, %v2036
        %v2880 = vpop.permute.xlu0 %2879
        %v2881 = vlaneseq
        %v2882 = vshrl.u32 %v2881, 7
        %v2883 = vadd.s32 %v2882, 72
        %2884 = vset.pattern.permute.xlu0 %v2883
        %2885 = vperm.xlu0 %2884, %v2036
        %v2886 = vpop.permute.xlu0 %2885
        %v2887 = vlaneseq
        %v2888 = vshrl.u32 %v2887, 7
        %v2889 = vadd.s32 %v2888, 64
        %2890 = vset.pattern.permute.xlu0 %v2889
        %2891 = vperm.xlu0 %2890, %v2049
        %v2892 = vpop.permute.xlu0 %2891
        %v2893 = vlaneseq
        %v2894 = vshrl.u32 %v2893, 7
        %v2895 = vadd.s32 %v2894, 72
        %2896 = vset.pattern.permute.xlu0 %v2895
        %2897 = vperm.xlu0 %2896, %v2049
        %v2898 = vpop.permute.xlu0 %2897
        %v2899 = vlaneseq
        %v2900 = vshrl.u32 %v2899, 7
        %v2901 = vadd.s32 %v2900, 64
        %2902 = vset.pattern.permute.xlu0 %v2901
        %2903 = vperm.xlu0 %2902, %v2062
        %v2904 = vpop.permute.xlu0 %2903
        %v2905 = vlaneseq
        %v2906 = vshrl.u32 %v2905, 7
        %v2907 = vadd.s32 %v2906, 72
        %2908 = vset.pattern.permute.xlu0 %v2907
        %2909 = vperm.xlu0 %2908, %v2062
        %v2910 = vpop.permute.xlu0 %2909
        %v2911 = vlaneseq
        %v2912 = vshrl.u32 %v2911, 7
        %v2913 = vadd.s32 %v2912, 64
        %2914 = vset.pattern.permute.xlu0 %v2913
        %2915 = vperm.xlu0 %2914, %v2075
        %v2916 = vpop.permute.xlu0 %2915
        %v2917 = vlaneseq
        %v2918 = vshrl.u32 %v2917, 7
        %v2919 = vadd.s32 %v2918, 72
        %2920 = vset.pattern.permute.xlu0 %v2919
        %2921 = vperm.xlu0 %2920, %v2075
        %v2922 = vpop.permute.xlu0 %2921
        %v2923 = vlaneseq
        %v2924 = vshrl.u32 %v2923, 7
        %v2925 = vadd.s32 %v2924, 64
        %2926 = vset.pattern.permute.xlu0 %v2925
        %2927 = vperm.xlu0 %2926, %v2088
        %v2928 = vpop.permute.xlu0 %2927
        %v2929 = vlaneseq
        %v2930 = vshrl.u32 %v2929, 7
        %v2931 = vadd.s32 %v2930, 72
        %2932 = vset.pattern.permute.xlu0 %v2931
        %2933 = vperm.xlu0 %2932, %v2088
        %v2934 = vpop.permute.xlu0 %2933
        %v2935 = vlaneseq
        %v2936 = vshrl.u32 %v2935, 7
        %v2937 = vadd.s32 %v2936, 64
        %2938 = vset.pattern.permute.xlu0 %v2937
        %2939 = vperm.xlu0 %2938, %v2101
        %v2940 = vpop.permute.xlu0 %2939
        %v2941 = vlaneseq
        %v2942 = vshrl.u32 %v2941, 7
        %v2943 = vadd.s32 %v2942, 72
        %2944 = vset.pattern.permute.xlu0 %v2943
        %2945 = vperm.xlu0 %2944, %v2101
        %v2946 = vpop.permute.xlu0 %2945
        %v2947 = vlaneseq
        %v2948 = vshrl.u32 %v2947, 7
        %v2949 = vadd.s32 %v2948, 64
        %2950 = vset.pattern.permute.xlu0 %v2949
        %2951 = vperm.xlu0 %2950, %v2114
        %v2952 = vpop.permute.xlu0 %2951
        %v2953 = vlaneseq
        %v2954 = vshrl.u32 %v2953, 7
        %v2955 = vadd.s32 %v2954, 72
        %2956 = vset.pattern.permute.xlu0 %v2955
        %2957 = vperm.xlu0 %2956, %v2114
        %v2958 = vpop.permute.xlu0 %2957
        %vm2959 = vcmp.eq.s32.totalorder %v2868, %v349
        %vm2960 = vcmp.eq.s32.totalorder %v2874, %v349
        %vm2961 = vcmp.eq.s32.totalorder %v2880, %v349
        %vm2962 = vcmp.eq.s32.totalorder %v2886, %v349
        %vm2963 = vcmp.eq.s32.totalorder %v2892, %v349
        %vm2964 = vcmp.eq.s32.totalorder %v2898, %v349
        %vm2965 = vcmp.eq.s32.totalorder %v2904, %v349
        %vm2966 = vcmp.eq.s32.totalorder %v2910, %v349
        %vm2967 = vcmp.eq.s32.totalorder %v2916, %v349
        %vm2968 = vcmp.eq.s32.totalorder %v2922, %v349
        %vm2969 = vcmp.eq.s32.totalorder %v2928, %v349
        %vm2970 = vcmp.eq.s32.totalorder %v2934, %v349
        %vm2971 = vcmp.eq.s32.totalorder %v2940, %v349
        %vm2972 = vcmp.eq.s32.totalorder %v2946, %v349
        %vm2973 = vcmp.eq.s32.totalorder %v2952, %v349
        %vm2974 = vcmp.eq.s32.totalorder %v2958, %v349
        %v2975 = vsel %vm2959, 1, 0
        %v2976 = vsel %vm2960, 1, 0
        %v2977 = vsel %vm2961, 1, 0
        %v2978 = vsel %vm2962, 1, 0
        %v2979 = vsel %vm2963, 1, 0
        %v2980 = vsel %vm2964, 1, 0
        %v2981 = vsel %vm2965, 1, 0
        %v2982 = vsel %vm2966, 1, 0
        %v2983 = vsel %vm2967, 1, 0
        %v2984 = vsel %vm2968, 1, 0
        %v2985 = vsel %vm2969, 1, 0
        %v2986 = vsel %vm2970, 1, 0
        %v2987 = vsel %vm2971, 1, 0
        %v2988 = vsel %vm2972, 1, 0
        %v2989 = vsel %vm2973, 1, 0
        %v2990 = vsel %vm2974, 1, 0
        %v2991 = vcvt.s32.f32 %v2975
        %v2992 = vcvt.s32.f32 %v2976
        %v2993 = vcvt.s32.f32 %v2977
        %v2994 = vcvt.s32.f32 %v2978
        %v2995 = vcvt.s32.f32 %v2979
        %v2996 = vcvt.s32.f32 %v2980
        %v2997 = vcvt.s32.f32 %v2981
        %v2998 = vcvt.s32.f32 %v2982
        %v2999 = vcvt.s32.f32 %v2983
        %v3000 = vcvt.s32.f32 %v2984
        %v3001 = vcvt.s32.f32 %v2985
        %v3002 = vcvt.s32.f32 %v2986
        %v3003 = vcvt.s32.f32 %v2987
        %v3004 = vcvt.s32.f32 %v2988
        %v3005 = vcvt.s32.f32 %v2989
        %v3006 = vcvt.s32.f32 %v2990
        %v3007 = vadd.f32 %v2991, %v2992
        %v3008 = vrot.slane %v3007, 4
        %v3009 = vadd.f32 %v3007, %v3008
        %v3010 = vrot.slane %v3009, 2
        %v3011 = vadd.f32 %v3009, %v3010
        %v3012 = vrot.slane %v3011, 1
        %v3013 = vadd.f32 %v3011, %v3012
        %v3014 = vadd.f32 %v2993, %v2994
        %v3015 = vrot.slane %v3014, 4
        %v3016 = vadd.f32 %v3014, %v3015
        %v3017 = vrot.slane %v3016, 2
        %v3018 = vadd.f32 %v3016, %v3017
        %v3019 = vrot.slane %v3018, 1
        %v3020 = vadd.f32 %v3018, %v3019
        %v3021 = vadd.f32 %v2995, %v2996
        %v3022 = vrot.slane %v3021, 4
        %v3023 = vadd.f32 %v3021, %v3022
        %v3024 = vrot.slane %v3023, 2
        %v3025 = vadd.f32 %v3023, %v3024
        %v3026 = vrot.slane %v3025, 1
        %v3027 = vadd.f32 %v3025, %v3026
        %v3028 = vadd.f32 %v2997, %v2998
        %v3029 = vrot.slane %v3028, 4
        %v3030 = vadd.f32 %v3028, %v3029
        %v3031 = vrot.slane %v3030, 2
        %v3032 = vadd.f32 %v3030, %v3031
        %v3033 = vrot.slane %v3032, 1
        %v3034 = vadd.f32 %v3032, %v3033
        %v3035 = vadd.f32 %v2999, %v3000
        %v3036 = vrot.slane %v3035, 4
        %v3037 = vadd.f32 %v3035, %v3036
        %v3038 = vrot.slane %v3037, 2
        %v3039 = vadd.f32 %v3037, %v3038
        %v3040 = vrot.slane %v3039, 1
        %v3041 = vadd.f32 %v3039, %v3040
        %v3042 = vadd.f32 %v3001, %v3002
        %v3043 = vrot.slane %v3042, 4
        %v3044 = vadd.f32 %v3042, %v3043
        %v3045 = vrot.slane %v3044, 2
        %v3046 = vadd.f32 %v3044, %v3045
        %v3047 = vrot.slane %v3046, 1
        %v3048 = vadd.f32 %v3046, %v3047
        %v3049 = vadd.f32 %v3003, %v3004
        %v3050 = vrot.slane %v3049, 4
        %v3051 = vadd.f32 %v3049, %v3050
        %v3052 = vrot.slane %v3051, 2
        %v3053 = vadd.f32 %v3051, %v3052
        %v3054 = vrot.slane %v3053, 1
        %v3055 = vadd.f32 %v3053, %v3054
        %v3056 = vadd.f32 %v3005, %v3006
        %v3057 = vrot.slane %v3056, 4
        %v3058 = vadd.f32 %v3056, %v3057
        %v3059 = vrot.slane %v3058, 2
        %v3060 = vadd.f32 %v3058, %v3059
        %v3061 = vrot.slane %v3060, 1
        %v3062 = vadd.f32 %v3060, %v3061
        %v3063 = vadd.f32 %v2855, %v3013
        %v3064 = vadd.f32 %v2856, %v3020
        %v3065 = vadd.f32 %v2857, %v3027
        %v3066 = vadd.f32 %v2858, %v3034
        %v3067 = vadd.f32 %v2859, %v3041
        %v3068 = vadd.f32 %v2860, %v3048
        %v3069 = vadd.f32 %v2861, %v3055
        %v3070 = vadd.f32 %v2862, %v3062
        %v3071 = vlaneseq
        %v3072 = vshrl.u32 %v3071, 7
        %v3073 = vadd.s32 %v3072, 80
        %3074 = vset.pattern.permute.xlu0 %v3073
        %3075 = vperm.xlu0 %3074, %v2023
        %v3076 = vpop.permute.xlu0 %3075
        %v3077 = vlaneseq
        %v3078 = vshrl.u32 %v3077, 7
        %v3079 = vadd.s32 %v3078, 88
        %3080 = vset.pattern.permute.xlu0 %v3079
        %3081 = vperm.xlu0 %3080, %v2023
        %v3082 = vpop.permute.xlu0 %3081
        %v3083 = vlaneseq
        %v3084 = vshrl.u32 %v3083, 7
        %v3085 = vadd.s32 %v3084, 80
        %3086 = vset.pattern.permute.xlu0 %v3085
        %3087 = vperm.xlu0 %3086, %v2036
        %v3088 = vpop.permute.xlu0 %3087
        %v3089 = vlaneseq
        %v3090 = vshrl.u32 %v3089, 7
        %v3091 = vadd.s32 %v3090, 88
        %3092 = vset.pattern.permute.xlu0 %v3091
        %3093 = vperm.xlu0 %3092, %v2036
        %v3094 = vpop.permute.xlu0 %3093
        %v3095 = vlaneseq
        %v3096 = vshrl.u32 %v3095, 7
        %v3097 = vadd.s32 %v3096, 80
        %3098 = vset.pattern.permute.xlu0 %v3097
        %3099 = vperm.xlu0 %3098, %v2049
        %v3100 = vpop.permute.xlu0 %3099
        %v3101 = vlaneseq
        %v3102 = vshrl.u32 %v3101, 7
        %v3103 = vadd.s32 %v3102, 88
        %3104 = vset.pattern.permute.xlu0 %v3103
        %3105 = vperm.xlu0 %3104, %v2049
        %v3106 = vpop.permute.xlu0 %3105
        %v3107 = vlaneseq
        %v3108 = vshrl.u32 %v3107, 7
        %v3109 = vadd.s32 %v3108, 80
        %3110 = vset.pattern.permute.xlu0 %v3109
        %3111 = vperm.xlu0 %3110, %v2062
        %v3112 = vpop.permute.xlu0 %3111
        %v3113 = vlaneseq
        %v3114 = vshrl.u32 %v3113, 7
        %v3115 = vadd.s32 %v3114, 88
        %3116 = vset.pattern.permute.xlu0 %v3115
        %3117 = vperm.xlu0 %3116, %v2062
        %v3118 = vpop.permute.xlu0 %3117
        %v3119 = vlaneseq
        %v3120 = vshrl.u32 %v3119, 7
        %v3121 = vadd.s32 %v3120, 80
        %3122 = vset.pattern.permute.xlu0 %v3121
        %3123 = vperm.xlu0 %3122, %v2075
        %v3124 = vpop.permute.xlu0 %3123
        %v3125 = vlaneseq
        %v3126 = vshrl.u32 %v3125, 7
        %v3127 = vadd.s32 %v3126, 88
        %3128 = vset.pattern.permute.xlu0 %v3127
        %3129 = vperm.xlu0 %3128, %v2075
        %v3130 = vpop.permute.xlu0 %3129
        %v3131 = vlaneseq
        %v3132 = vshrl.u32 %v3131, 7
        %v3133 = vadd.s32 %v3132, 80
        %3134 = vset.pattern.permute.xlu0 %v3133
        %3135 = vperm.xlu0 %3134, %v2088
        %v3136 = vpop.permute.xlu0 %3135
        %v3137 = vlaneseq
        %v3138 = vshrl.u32 %v3137, 7
        %v3139 = vadd.s32 %v3138, 88
        %3140 = vset.pattern.permute.xlu0 %v3139
        %3141 = vperm.xlu0 %3140, %v2088
        %v3142 = vpop.permute.xlu0 %3141
        %v3143 = vlaneseq
        %v3144 = vshrl.u32 %v3143, 7
        %v3145 = vadd.s32 %v3144, 80
        %3146 = vset.pattern.permute.xlu0 %v3145
        %3147 = vperm.xlu0 %3146, %v2101
        %v3148 = vpop.permute.xlu0 %3147
        %v3149 = vlaneseq
        %v3150 = vshrl.u32 %v3149, 7
        %v3151 = vadd.s32 %v3150, 88
        %3152 = vset.pattern.permute.xlu0 %v3151
        %3153 = vperm.xlu0 %3152, %v2101
        %v3154 = vpop.permute.xlu0 %3153
        %v3155 = vlaneseq
        %v3156 = vshrl.u32 %v3155, 7
        %v3157 = vadd.s32 %v3156, 80
        %3158 = vset.pattern.permute.xlu0 %v3157
        %3159 = vperm.xlu0 %3158, %v2114
        %v3160 = vpop.permute.xlu0 %3159
        %v3161 = vlaneseq
        %v3162 = vshrl.u32 %v3161, 7
        %v3163 = vadd.s32 %v3162, 88
        %3164 = vset.pattern.permute.xlu0 %v3163
        %3165 = vperm.xlu0 %3164, %v2114
        %v3166 = vpop.permute.xlu0 %3165
        %vm3167 = vcmp.eq.s32.totalorder %v3076, %v349
        %vm3168 = vcmp.eq.s32.totalorder %v3082, %v349
        %vm3169 = vcmp.eq.s32.totalorder %v3088, %v349
        %vm3170 = vcmp.eq.s32.totalorder %v3094, %v349
        %vm3171 = vcmp.eq.s32.totalorder %v3100, %v349
        %vm3172 = vcmp.eq.s32.totalorder %v3106, %v349
        %vm3173 = vcmp.eq.s32.totalorder %v3112, %v349
        %vm3174 = vcmp.eq.s32.totalorder %v3118, %v349
        %vm3175 = vcmp.eq.s32.totalorder %v3124, %v349
        %vm3176 = vcmp.eq.s32.totalorder %v3130, %v349
        %vm3177 = vcmp.eq.s32.totalorder %v3136, %v349
        %vm3178 = vcmp.eq.s32.totalorder %v3142, %v349
        %vm3179 = vcmp.eq.s32.totalorder %v3148, %v349
        %vm3180 = vcmp.eq.s32.totalorder %v3154, %v349
        %vm3181 = vcmp.eq.s32.totalorder %v3160, %v349
        %vm3182 = vcmp.eq.s32.totalorder %v3166, %v349
        %v3183 = vsel %vm3167, 1, 0
        %v3184 = vsel %vm3168, 1, 0
        %v3185 = vsel %vm3169, 1, 0
        %v3186 = vsel %vm3170, 1, 0
        %v3187 = vsel %vm3171, 1, 0
        %v3188 = vsel %vm3172, 1, 0
        %v3189 = vsel %vm3173, 1, 0
        %v3190 = vsel %vm3174, 1, 0
        %v3191 = vsel %vm3175, 1, 0
        %v3192 = vsel %vm3176, 1, 0
        %v3193 = vsel %vm3177, 1, 0
        %v3194 = vsel %vm3178, 1, 0
        %v3195 = vsel %vm3179, 1, 0
        %v3196 = vsel %vm3180, 1, 0
        %v3197 = vsel %vm3181, 1, 0
        %v3198 = vsel %vm3182, 1, 0
        %v3199 = vcvt.s32.f32 %v3183
        %v3200 = vcvt.s32.f32 %v3184
        %v3201 = vcvt.s32.f32 %v3185
        %v3202 = vcvt.s32.f32 %v3186
        %v3203 = vcvt.s32.f32 %v3187
        %v3204 = vcvt.s32.f32 %v3188
        %v3205 = vcvt.s32.f32 %v3189
        %v3206 = vcvt.s32.f32 %v3190
        %v3207 = vcvt.s32.f32 %v3191
        %v3208 = vcvt.s32.f32 %v3192
        %v3209 = vcvt.s32.f32 %v3193
        %v3210 = vcvt.s32.f32 %v3194
        %v3211 = vcvt.s32.f32 %v3195
        %v3212 = vcvt.s32.f32 %v3196
        %v3213 = vcvt.s32.f32 %v3197
        %v3214 = vcvt.s32.f32 %v3198
        %v3215 = vadd.f32 %v3199, %v3200
        %v3216 = vrot.slane %v3215, 4
        %v3217 = vadd.f32 %v3215, %v3216
        %v3218 = vrot.slane %v3217, 2
        %v3219 = vadd.f32 %v3217, %v3218
        %v3220 = vrot.slane %v3219, 1
        %v3221 = vadd.f32 %v3219, %v3220
        %v3222 = vadd.f32 %v3201, %v3202
        %v3223 = vrot.slane %v3222, 4
        %v3224 = vadd.f32 %v3222, %v3223
        %v3225 = vrot.slane %v3224, 2
        %v3226 = vadd.f32 %v3224, %v3225
        %v3227 = vrot.slane %v3226, 1
        %v3228 = vadd.f32 %v3226, %v3227
        %v3229 = vadd.f32 %v3203, %v3204
        %v3230 = vrot.slane %v3229, 4
        %v3231 = vadd.f32 %v3229, %v3230
        %v3232 = vrot.slane %v3231, 2
        %v3233 = vadd.f32 %v3231, %v3232
        %v3234 = vrot.slane %v3233, 1
        %v3235 = vadd.f32 %v3233, %v3234
        %v3236 = vadd.f32 %v3205, %v3206
        %v3237 = vrot.slane %v3236, 4
        %v3238 = vadd.f32 %v3236, %v3237
        %v3239 = vrot.slane %v3238, 2
        %v3240 = vadd.f32 %v3238, %v3239
        %v3241 = vrot.slane %v3240, 1
        %v3242 = vadd.f32 %v3240, %v3241
        %v3243 = vadd.f32 %v3207, %v3208
        %v3244 = vrot.slane %v3243, 4
        %v3245 = vadd.f32 %v3243, %v3244
        %v3246 = vrot.slane %v3245, 2
        %v3247 = vadd.f32 %v3245, %v3246
        %v3248 = vrot.slane %v3247, 1
        %v3249 = vadd.f32 %v3247, %v3248
        %v3250 = vadd.f32 %v3209, %v3210
        %v3251 = vrot.slane %v3250, 4
        %v3252 = vadd.f32 %v3250, %v3251
        %v3253 = vrot.slane %v3252, 2
        %v3254 = vadd.f32 %v3252, %v3253
        %v3255 = vrot.slane %v3254, 1
        %v3256 = vadd.f32 %v3254, %v3255
        %v3257 = vadd.f32 %v3211, %v3212
        %v3258 = vrot.slane %v3257, 4
        %v3259 = vadd.f32 %v3257, %v3258
        %v3260 = vrot.slane %v3259, 2
        %v3261 = vadd.f32 %v3259, %v3260
        %v3262 = vrot.slane %v3261, 1
        %v3263 = vadd.f32 %v3261, %v3262
        %v3264 = vadd.f32 %v3213, %v3214
        %v3265 = vrot.slane %v3264, 4
        %v3266 = vadd.f32 %v3264, %v3265
        %v3267 = vrot.slane %v3266, 2
        %v3268 = vadd.f32 %v3266, %v3267
        %v3269 = vrot.slane %v3268, 1
        %v3270 = vadd.f32 %v3268, %v3269
        %v3271 = vadd.f32 %v3063, %v3221
        %v3272 = vadd.f32 %v3064, %v3228
        %v3273 = vadd.f32 %v3065, %v3235
        %v3274 = vadd.f32 %v3066, %v3242
        %v3275 = vadd.f32 %v3067, %v3249
        %v3276 = vadd.f32 %v3068, %v3256
        %v3277 = vadd.f32 %v3069, %v3263
        %v3278 = vadd.f32 %v3070, %v3270
        %v3279 = vlaneseq
        %v3280 = vshrl.u32 %v3279, 7
        %v3281 = vadd.s32 %v3280, 96
        %3282 = vset.pattern.permute.xlu0 %v3281
        %3283 = vperm.xlu0 %3282, %v2023
        %v3284 = vpop.permute.xlu0 %3283
        %v3285 = vlaneseq
        %v3286 = vshrl.u32 %v3285, 7
        %v3287 = vadd.s32 %v3286, 104
        %3288 = vset.pattern.permute.xlu0 %v3287
        %3289 = vperm.xlu0 %3288, %v2023
        %v3290 = vpop.permute.xlu0 %3289
        %v3291 = vlaneseq
        %v3292 = vshrl.u32 %v3291, 7
        %v3293 = vadd.s32 %v3292, 96
        %3294 = vset.pattern.permute.xlu0 %v3293
        %3295 = vperm.xlu0 %3294, %v2036
        %v3296 = vpop.permute.xlu0 %3295
        %v3297 = vlaneseq
        %v3298 = vshrl.u32 %v3297, 7
        %v3299 = vadd.s32 %v3298, 104
        %3300 = vset.pattern.permute.xlu0 %v3299
        %3301 = vperm.xlu0 %3300, %v2036
        %v3302 = vpop.permute.xlu0 %3301
        %v3303 = vlaneseq
        %v3304 = vshrl.u32 %v3303, 7
        %v3305 = vadd.s32 %v3304, 96
        %3306 = vset.pattern.permute.xlu0 %v3305
        %3307 = vperm.xlu0 %3306, %v2049
        %v3308 = vpop.permute.xlu0 %3307
        %v3309 = vlaneseq
        %v3310 = vshrl.u32 %v3309, 7
        %v3311 = vadd.s32 %v3310, 104
        %3312 = vset.pattern.permute.xlu0 %v3311
        %3313 = vperm.xlu0 %3312, %v2049
        %v3314 = vpop.permute.xlu0 %3313
        %v3315 = vlaneseq
        %v3316 = vshrl.u32 %v3315, 7
        %v3317 = vadd.s32 %v3316, 96
        %3318 = vset.pattern.permute.xlu0 %v3317
        %3319 = vperm.xlu0 %3318, %v2062
        %v3320 = vpop.permute.xlu0 %3319
        %v3321 = vlaneseq
        %v3322 = vshrl.u32 %v3321, 7
        %v3323 = vadd.s32 %v3322, 104
        %3324 = vset.pattern.permute.xlu0 %v3323
        %3325 = vperm.xlu0 %3324, %v2062
        %v3326 = vpop.permute.xlu0 %3325
        %v3327 = vlaneseq
        %v3328 = vshrl.u32 %v3327, 7
        %v3329 = vadd.s32 %v3328, 96
        %3330 = vset.pattern.permute.xlu0 %v3329
        %3331 = vperm.xlu0 %3330, %v2075
        %v3332 = vpop.permute.xlu0 %3331
        %v3333 = vlaneseq
        %v3334 = vshrl.u32 %v3333, 7
        %v3335 = vadd.s32 %v3334, 104
        %3336 = vset.pattern.permute.xlu0 %v3335
        %3337 = vperm.xlu0 %3336, %v2075
        %v3338 = vpop.permute.xlu0 %3337
        %v3339 = vlaneseq
        %v3340 = vshrl.u32 %v3339, 7
        %v3341 = vadd.s32 %v3340, 96
        %3342 = vset.pattern.permute.xlu0 %v3341
        %3343 = vperm.xlu0 %3342, %v2088
        %v3344 = vpop.permute.xlu0 %3343
        %v3345 = vlaneseq
        %v3346 = vshrl.u32 %v3345, 7
        %v3347 = vadd.s32 %v3346, 104
        %3348 = vset.pattern.permute.xlu0 %v3347
        %3349 = vperm.xlu0 %3348, %v2088
        %v3350 = vpop.permute.xlu0 %3349
        %v3351 = vlaneseq
        %v3352 = vshrl.u32 %v3351, 7
        %v3353 = vadd.s32 %v3352, 96
        %3354 = vset.pattern.permute.xlu0 %v3353
        %3355 = vperm.xlu0 %3354, %v2101
        %v3356 = vpop.permute.xlu0 %3355
        %v3357 = vlaneseq
        %v3358 = vshrl.u32 %v3357, 7
        %v3359 = vadd.s32 %v3358, 104
        %3360 = vset.pattern.permute.xlu0 %v3359
        %3361 = vperm.xlu0 %3360, %v2101
        %v3362 = vpop.permute.xlu0 %3361
        %v3363 = vlaneseq
        %v3364 = vshrl.u32 %v3363, 7
        %v3365 = vadd.s32 %v3364, 96
        %3366 = vset.pattern.permute.xlu0 %v3365
        %3367 = vperm.xlu0 %3366, %v2114
        %v3368 = vpop.permute.xlu0 %3367
        %v3369 = vlaneseq
        %v3370 = vshrl.u32 %v3369, 7
        %v3371 = vadd.s32 %v3370, 104
        %3372 = vset.pattern.permute.xlu0 %v3371
        %3373 = vperm.xlu0 %3372, %v2114
        %v3374 = vpop.permute.xlu0 %3373
        %vm3375 = vcmp.eq.s32.totalorder %v3284, %v349
        %vm3376 = vcmp.eq.s32.totalorder %v3290, %v349
        %vm3377 = vcmp.eq.s32.totalorder %v3296, %v349
        %vm3378 = vcmp.eq.s32.totalorder %v3302, %v349
        %vm3379 = vcmp.eq.s32.totalorder %v3308, %v349
        %vm3380 = vcmp.eq.s32.totalorder %v3314, %v349
        %vm3381 = vcmp.eq.s32.totalorder %v3320, %v349
        %vm3382 = vcmp.eq.s32.totalorder %v3326, %v349
        %vm3383 = vcmp.eq.s32.totalorder %v3332, %v349
        %vm3384 = vcmp.eq.s32.totalorder %v3338, %v349
        %vm3385 = vcmp.eq.s32.totalorder %v3344, %v349
        %vm3386 = vcmp.eq.s32.totalorder %v3350, %v349
        %vm3387 = vcmp.eq.s32.totalorder %v3356, %v349
        %vm3388 = vcmp.eq.s32.totalorder %v3362, %v349
        %vm3389 = vcmp.eq.s32.totalorder %v3368, %v349
        %vm3390 = vcmp.eq.s32.totalorder %v3374, %v349
        %v3391 = vsel %vm3375, 1, 0
        %v3392 = vsel %vm3376, 1, 0
        %v3393 = vsel %vm3377, 1, 0
        %v3394 = vsel %vm3378, 1, 0
        %v3395 = vsel %vm3379, 1, 0
        %v3396 = vsel %vm3380, 1, 0
        %v3397 = vsel %vm3381, 1, 0
        %v3398 = vsel %vm3382, 1, 0
        %v3399 = vsel %vm3383, 1, 0
        %v3400 = vsel %vm3384, 1, 0
        %v3401 = vsel %vm3385, 1, 0
        %v3402 = vsel %vm3386, 1, 0
        %v3403 = vsel %vm3387, 1, 0
        %v3404 = vsel %vm3388, 1, 0
        %v3405 = vsel %vm3389, 1, 0
        %v3406 = vsel %vm3390, 1, 0
        %v3407 = vcvt.s32.f32 %v3391
        %v3408 = vcvt.s32.f32 %v3392
        %v3409 = vcvt.s32.f32 %v3393
        %v3410 = vcvt.s32.f32 %v3394
        %v3411 = vcvt.s32.f32 %v3395
        %v3412 = vcvt.s32.f32 %v3396
        %v3413 = vcvt.s32.f32 %v3397
        %v3414 = vcvt.s32.f32 %v3398
        %v3415 = vcvt.s32.f32 %v3399
        %v3416 = vcvt.s32.f32 %v3400
        %v3417 = vcvt.s32.f32 %v3401
        %v3418 = vcvt.s32.f32 %v3402
        %v3419 = vcvt.s32.f32 %v3403
        %v3420 = vcvt.s32.f32 %v3404
        %v3421 = vcvt.s32.f32 %v3405
        %v3422 = vcvt.s32.f32 %v3406
        %v3423 = vadd.f32 %v3407, %v3408
        %v3424 = vrot.slane %v3423, 4
        %v3425 = vadd.f32 %v3423, %v3424
        %v3426 = vrot.slane %v3425, 2
        %v3427 = vadd.f32 %v3425, %v3426
        %v3428 = vrot.slane %v3427, 1
        %v3429 = vadd.f32 %v3427, %v3428
        %v3430 = vadd.f32 %v3409, %v3410
        %v3431 = vrot.slane %v3430, 4
        %v3432 = vadd.f32 %v3430, %v3431
        %v3433 = vrot.slane %v3432, 2
        %v3434 = vadd.f32 %v3432, %v3433
        %v3435 = vrot.slane %v3434, 1
        %v3436 = vadd.f32 %v3434, %v3435
        %v3437 = vadd.f32 %v3411, %v3412
        %v3438 = vrot.slane %v3437, 4
        %v3439 = vadd.f32 %v3437, %v3438
        %v3440 = vrot.slane %v3439, 2
        %v3441 = vadd.f32 %v3439, %v3440
        %v3442 = vrot.slane %v3441, 1
        %v3443 = vadd.f32 %v3441, %v3442
        %v3444 = vadd.f32 %v3413, %v3414
        %v3445 = vrot.slane %v3444, 4
        %v3446 = vadd.f32 %v3444, %v3445
        %v3447 = vrot.slane %v3446, 2
        %v3448 = vadd.f32 %v3446, %v3447
        %v3449 = vrot.slane %v3448, 1
        %v3450 = vadd.f32 %v3448, %v3449
        %v3451 = vadd.f32 %v3415, %v3416
        %v3452 = vrot.slane %v3451, 4
        %v3453 = vadd.f32 %v3451, %v3452
        %v3454 = vrot.slane %v3453, 2
        %v3455 = vadd.f32 %v3453, %v3454
        %v3456 = vrot.slane %v3455, 1
        %v3457 = vadd.f32 %v3455, %v3456
        %v3458 = vadd.f32 %v3417, %v3418
        %v3459 = vrot.slane %v3458, 4
        %v3460 = vadd.f32 %v3458, %v3459
        %v3461 = vrot.slane %v3460, 2
        %v3462 = vadd.f32 %v3460, %v3461
        %v3463 = vrot.slane %v3462, 1
        %v3464 = vadd.f32 %v3462, %v3463
        %v3465 = vadd.f32 %v3419, %v3420
        %v3466 = vrot.slane %v3465, 4
        %v3467 = vadd.f32 %v3465, %v3466
        %v3468 = vrot.slane %v3467, 2
        %v3469 = vadd.f32 %v3467, %v3468
        %v3470 = vrot.slane %v3469, 1
        %v3471 = vadd.f32 %v3469, %v3470
        %v3472 = vadd.f32 %v3421, %v3422
        %v3473 = vrot.slane %v3472, 4
        %v3474 = vadd.f32 %v3472, %v3473
        %v3475 = vrot.slane %v3474, 2
        %v3476 = vadd.f32 %v3474, %v3475
        %v3477 = vrot.slane %v3476, 1
        %v3478 = vadd.f32 %v3476, %v3477
        %v3479 = vadd.f32 %v3271, %v3429
        %v3480 = vadd.f32 %v3272, %v3436
        %v3481 = vadd.f32 %v3273, %v3443
        %v3482 = vadd.f32 %v3274, %v3450
        %v3483 = vadd.f32 %v3275, %v3457
        %v3484 = vadd.f32 %v3276, %v3464
        %v3485 = vadd.f32 %v3277, %v3471
        %v3486 = vadd.f32 %v3278, %v3478
        %v3487 = vlaneseq
        %v3488 = vshrl.u32 %v3487, 7
        %v3489 = vadd.s32 %v3488, 112
        %3490 = vset.pattern.permute.xlu0 %v3489
        %3491 = vperm.xlu0 %3490, %v2023
        %v3492 = vpop.permute.xlu0 %3491
        %v3493 = vlaneseq
        %v3494 = vshrl.u32 %v3493, 7
        %v3495 = vadd.s32 %v3494, 120
        %3496 = vset.pattern.permute.xlu0 %v3495
        %3497 = vperm.xlu0 %3496, %v2023
        %v3498 = vpop.permute.xlu0 %3497
        %v3499 = vlaneseq
        %v3500 = vshrl.u32 %v3499, 7
        %v3501 = vadd.s32 %v3500, 112
        %3502 = vset.pattern.permute.xlu0 %v3501
        %3503 = vperm.xlu0 %3502, %v2036
        %v3504 = vpop.permute.xlu0 %3503
        %v3505 = vlaneseq
        %v3506 = vshrl.u32 %v3505, 7
        %v3507 = vadd.s32 %v3506, 120
        %3508 = vset.pattern.permute.xlu0 %v3507
        %3509 = vperm.xlu0 %3508, %v2036
        %v3510 = vpop.permute.xlu0 %3509
        %v3511 = vlaneseq
        %v3512 = vshrl.u32 %v3511, 7
        %v3513 = vadd.s32 %v3512, 112
        %3514 = vset.pattern.permute.xlu0 %v3513
        %3515 = vperm.xlu0 %3514, %v2049
        %v3516 = vpop.permute.xlu0 %3515
        %v3517 = vlaneseq
        %v3518 = vshrl.u32 %v3517, 7
        %v3519 = vadd.s32 %v3518, 120
        %3520 = vset.pattern.permute.xlu0 %v3519
        %3521 = vperm.xlu0 %3520, %v2049
        %v3522 = vpop.permute.xlu0 %3521
        %v3523 = vlaneseq
        %v3524 = vshrl.u32 %v3523, 7
        %v3525 = vadd.s32 %v3524, 112
        %3526 = vset.pattern.permute.xlu0 %v3525
        %3527 = vperm.xlu0 %3526, %v2062
        %v3528 = vpop.permute.xlu0 %3527
        %v3529 = vlaneseq
        %v3530 = vshrl.u32 %v3529, 7
        %v3531 = vadd.s32 %v3530, 120
        %3532 = vset.pattern.permute.xlu0 %v3531
        %3533 = vperm.xlu0 %3532, %v2062
        %v3534 = vpop.permute.xlu0 %3533
        %v3535 = vlaneseq
        %v3536 = vshrl.u32 %v3535, 7
        %v3537 = vadd.s32 %v3536, 112
        %3538 = vset.pattern.permute.xlu0 %v3537
        %3539 = vperm.xlu0 %3538, %v2075
        %v3540 = vpop.permute.xlu0 %3539
        %v3541 = vlaneseq
        %v3542 = vshrl.u32 %v3541, 7
        %v3543 = vadd.s32 %v3542, 120
        %3544 = vset.pattern.permute.xlu0 %v3543
        %3545 = vperm.xlu0 %3544, %v2075
        %v3546 = vpop.permute.xlu0 %3545
        %v3547 = vlaneseq
        %v3548 = vshrl.u32 %v3547, 7
        %v3549 = vadd.s32 %v3548, 112
        %3550 = vset.pattern.permute.xlu0 %v3549
        %3551 = vperm.xlu0 %3550, %v2088
        %v3552 = vpop.permute.xlu0 %3551
        %v3553 = vlaneseq
        %v3554 = vshrl.u32 %v3553, 7
        %v3555 = vadd.s32 %v3554, 120
        %3556 = vset.pattern.permute.xlu0 %v3555
        %3557 = vperm.xlu0 %3556, %v2088
        %v3558 = vpop.permute.xlu0 %3557
        %v3559 = vlaneseq
        %v3560 = vshrl.u32 %v3559, 7
        %v3561 = vadd.s32 %v3560, 112
        %3562 = vset.pattern.permute.xlu0 %v3561
        %3563 = vperm.xlu0 %3562, %v2101
        %v3564 = vpop.permute.xlu0 %3563
        %v3565 = vlaneseq
        %v3566 = vshrl.u32 %v3565, 7
        %v3567 = vadd.s32 %v3566, 120
        %3568 = vset.pattern.permute.xlu0 %v3567
        %3569 = vperm.xlu0 %3568, %v2101
        %v3570 = vpop.permute.xlu0 %3569
        %v3571 = vlaneseq
        %v3572 = vshrl.u32 %v3571, 7
        %v3573 = vadd.s32 %v3572, 112
        %3574 = vset.pattern.permute.xlu0 %v3573
        %3575 = vperm.xlu0 %3574, %v2114
        %v3576 = vpop.permute.xlu0 %3575
        %v3577 = vlaneseq
        %v3578 = vshrl.u32 %v3577, 7
        %v3579 = vadd.s32 %v3578, 120
        %3580 = vset.pattern.permute.xlu0 %v3579
        %3581 = vperm.xlu0 %3580, %v2114
        %v3582 = vpop.permute.xlu0 %3581
        %vm3583 = vcmp.eq.s32.totalorder %v3492, %v349
        %vm3584 = vcmp.eq.s32.totalorder %v3498, %v349
        %vm3585 = vcmp.eq.s32.totalorder %v3504, %v349
        %vm3586 = vcmp.eq.s32.totalorder %v3510, %v349
        %vm3587 = vcmp.eq.s32.totalorder %v3516, %v349
        %vm3588 = vcmp.eq.s32.totalorder %v3522, %v349
        %vm3589 = vcmp.eq.s32.totalorder %v3528, %v349
        %vm3590 = vcmp.eq.s32.totalorder %v3534, %v349
        %vm3591 = vcmp.eq.s32.totalorder %v3540, %v349
        %vm3592 = vcmp.eq.s32.totalorder %v3546, %v349
        %vm3593 = vcmp.eq.s32.totalorder %v3552, %v349
        %vm3594 = vcmp.eq.s32.totalorder %v3558, %v349
        %vm3595 = vcmp.eq.s32.totalorder %v3564, %v349
        %vm3596 = vcmp.eq.s32.totalorder %v3570, %v349
        %vm3597 = vcmp.eq.s32.totalorder %v3576, %v349
        %vm3598 = vcmp.eq.s32.totalorder %v3582, %v349
        %v3599 = vsel %vm3583, 1, 0
        %v3600 = vsel %vm3584, 1, 0
        %v3601 = vsel %vm3585, 1, 0
        %v3602 = vsel %vm3586, 1, 0
        %v3603 = vsel %vm3587, 1, 0
        %v3604 = vsel %vm3588, 1, 0
        %v3605 = vsel %vm3589, 1, 0
        %v3606 = vsel %vm3590, 1, 0
        %v3607 = vsel %vm3591, 1, 0
        %v3608 = vsel %vm3592, 1, 0
        %v3609 = vsel %vm3593, 1, 0
        %v3610 = vsel %vm3594, 1, 0
        %v3611 = vsel %vm3595, 1, 0
        %v3612 = vsel %vm3596, 1, 0
        %v3613 = vsel %vm3597, 1, 0
        %v3614 = vsel %vm3598, 1, 0
        %v3615 = vcvt.s32.f32 %v3599
        %v3616 = vcvt.s32.f32 %v3600
        %v3617 = vcvt.s32.f32 %v3601
        %v3618 = vcvt.s32.f32 %v3602
        %v3619 = vcvt.s32.f32 %v3603
        %v3620 = vcvt.s32.f32 %v3604
        %v3621 = vcvt.s32.f32 %v3605
        %v3622 = vcvt.s32.f32 %v3606
        %v3623 = vcvt.s32.f32 %v3607
        %v3624 = vcvt.s32.f32 %v3608
        %v3625 = vcvt.s32.f32 %v3609
        %v3626 = vcvt.s32.f32 %v3610
        %v3627 = vcvt.s32.f32 %v3611
        %v3628 = vcvt.s32.f32 %v3612
        %v3629 = vcvt.s32.f32 %v3613
        %v3630 = vcvt.s32.f32 %v3614
        %v3631 = vadd.f32 %v3615, %v3616
        %v3632 = vrot.slane %v3631, 4
        %v3633 = vadd.f32 %v3631, %v3632
        %v3634 = vrot.slane %v3633, 2
        %v3635 = vadd.f32 %v3633, %v3634
        %v3636 = vrot.slane %v3635, 1
        %v3637 = vadd.f32 %v3635, %v3636
        %v3638 = vadd.f32 %v3617, %v3618
        %v3639 = vrot.slane %v3638, 4
        %v3640 = vadd.f32 %v3638, %v3639
        %v3641 = vrot.slane %v3640, 2
        %v3642 = vadd.f32 %v3640, %v3641
        %v3643 = vrot.slane %v3642, 1
        %v3644 = vadd.f32 %v3642, %v3643
        %v3645 = vadd.f32 %v3619, %v3620
        %v3646 = vrot.slane %v3645, 4
        %v3647 = vadd.f32 %v3645, %v3646
        %v3648 = vrot.slane %v3647, 2
        %v3649 = vadd.f32 %v3647, %v3648
        %v3650 = vrot.slane %v3649, 1
        %v3651 = vadd.f32 %v3649, %v3650
        %v3652 = vadd.f32 %v3621, %v3622
        %v3653 = vrot.slane %v3652, 4
        %v3654 = vadd.f32 %v3652, %v3653
        %v3655 = vrot.slane %v3654, 2
        %v3656 = vadd.f32 %v3654, %v3655
        %v3657 = vrot.slane %v3656, 1
        %v3658 = vadd.f32 %v3656, %v3657
        %v3659 = vadd.f32 %v3623, %v3624
        %v3660 = vrot.slane %v3659, 4
        %v3661 = vadd.f32 %v3659, %v3660
        %v3662 = vrot.slane %v3661, 2
        %v3663 = vadd.f32 %v3661, %v3662
        %v3664 = vrot.slane %v3663, 1
        %v3665 = vadd.f32 %v3663, %v3664
        %v3666 = vadd.f32 %v3625, %v3626
        %v3667 = vrot.slane %v3666, 4
        %v3668 = vadd.f32 %v3666, %v3667
        %v3669 = vrot.slane %v3668, 2
        %v3670 = vadd.f32 %v3668, %v3669
        %v3671 = vrot.slane %v3670, 1
        %v3672 = vadd.f32 %v3670, %v3671
        %v3673 = vadd.f32 %v3627, %v3628
        %v3674 = vrot.slane %v3673, 4
        %v3675 = vadd.f32 %v3673, %v3674
        %v3676 = vrot.slane %v3675, 2
        %v3677 = vadd.f32 %v3675, %v3676
        %v3678 = vrot.slane %v3677, 1
        %v3679 = vadd.f32 %v3677, %v3678
        %v3680 = vadd.f32 %v3629, %v3630
        %v3681 = vrot.slane %v3680, 4
        %v3682 = vadd.f32 %v3680, %v3681
        %v3683 = vrot.slane %v3682, 2
        %v3684 = vadd.f32 %v3682, %v3683
        %v3685 = vrot.slane %v3684, 1
        %v3686 = vadd.f32 %v3684, %v3685
        %v3687 = vadd.f32 %v3479, %v3637
        %v3688 = vadd.f32 %v3480, %v3644
        %v3689 = vadd.f32 %v3481, %v3651
        %v3690 = vadd.f32 %v3482, %v3658
        %v3691 = vadd.f32 %v3483, %v3665
        %v3692 = vadd.f32 %v3484, %v3672
        %v3693 = vadd.f32 %v3485, %v3679
        %v3694 = vadd.f32 %v3486, %v3686
        %vm3695 = vcmp.eq.s32.totalorder %v349, 0
        %vm3704 = vcmask 1041409
        %v3705 = vsel %vm3704, %v3688, %v3687
        %vm3706 = vcmask 1042434
        %v3707 = vsel %vm3706, %v3689, %v3705
        %vm3708 = vcmask 1043459
        %v3709 = vsel %vm3708, %v3690, %v3707
        %vm3710 = vcmask 1044484
        %v3711 = vsel %vm3710, %v3691, %v3709
        %vm3712 = vcmask 1045509
        %v3713 = vsel %vm3712, %v3692, %v3711
        %vm3714 = vcmask 1046534
        %v3715 = vsel %vm3714, %v3693, %v3713
        %vm3716 = vcmask 1047559
        %v3717 = vsel %vm3716, %v3694, %v3715
        %v3719 = vsel %vm3695, 0.0, %v3717
        %v3720 = vld [vmem:[#allocation2] sm:$0xff]
        %v3721 = vpack.c.bf16 %v3719, %v3719
        %v3722 = vld [vmem:[#allocation7] sm:$0xf]
        %v3723 = vld [vmem:[#allocation7 + $0x4] sm:$0xf]
        %v3724 = vld [vmem:[#allocation7 + $0x8] sm:$0xf]
        %v3725 = vld [vmem:[#allocation7 + $0xc] sm:$0xf]
        %v3726 = vld [vmem:[#allocation7 + $0x10] sm:$0xf]
        %v3727 = vld [vmem:[#allocation7 + $0x14] sm:$0xf]
        %v3728 = vld [vmem:[#allocation7 + $0x18] sm:$0xf]
        %v3729 = vld [vmem:[#allocation7 + $0x1c] sm:$0xf]
        %v3730 = vld [vmem:[#allocation7 + $0x20] sm:$0xf]
        %v3731 = vld [vmem:[#allocation7 + $0x24] sm:$0xf]
        %v3732 = vld [vmem:[#allocation7 + $0x28] sm:$0xf]
        %v3733 = vld [vmem:[#allocation7 + $0x2c] sm:$0xf]
        %v3734 = vld [vmem:[#allocation7 + $0x30] sm:$0xf]
        %v3735 = vld [vmem:[#allocation7 + $0x34] sm:$0xf]
        %v3736 = vld [vmem:[#allocation7 + $0x38] sm:$0xf]
        %v3737 = vld [vmem:[#allocation7 + $0x3c] sm:$0xf]
        %v3738 = vpack.c.bf16 %v346, %v346
        %v3739 = vpack.c.bf16 %v347, %v347
        %v3740 = vld [vmem:[%s293] sm:$0xf]
        %v3741 = vld [vmem:[%s293 + $0x4] sm:$0xf]
        %v3742 = vld [vmem:[%s293 + $0x8] sm:$0xf]
        %v3743 = vld [vmem:[%s293 + $0xc] sm:$0xf]
        %v3744 = vld [vmem:[%s293 + $0x10] sm:$0xf]
        %v3745 = vld [vmem:[%s293 + $0x14] sm:$0xf]
        %v3746 = vld [vmem:[%s293 + $0x18] sm:$0xf]
        %v3747 = vld [vmem:[%s293 + $0x1c] sm:$0xf]
        %v3748 = vld [vmem:[%s293 + $0x20] sm:$0xf]
        %v3749 = vld [vmem:[%s293 + $0x24] sm:$0xf]
        %v3750 = vld [vmem:[%s293 + $0x28] sm:$0xf]
        %v3751 = vld [vmem:[%s293 + $0x2c] sm:$0xf]
        %v3752 = vld [vmem:[%s293 + $0x30] sm:$0xf]
        %v3753 = vld [vmem:[%s293 + $0x34] sm:$0xf]
        %v3754 = vld [vmem:[%s293 + $0x38] sm:$0xf]
        %v3755 = vld [vmem:[%s293 + $0x3c] sm:$0xf]
        %v3756 = vld [vmem:[%s293 + $0x40] sm:$0xf]
        %v3757 = vld [vmem:[%s293 + $0x44] sm:$0xf]
        %v3758 = vld [vmem:[%s293 + $0x48] sm:$0xf]
        %v3759 = vld [vmem:[%s293 + $0x4c] sm:$0xf]
        %v3760 = vld [vmem:[%s293 + $0x50] sm:$0xf]
        %v3761 = vld [vmem:[%s293 + $0x54] sm:$0xf]
        %v3762 = vld [vmem:[%s293 + $0x58] sm:$0xf]
        %v3763 = vld [vmem:[%s293 + $0x5c] sm:$0xf]
        %v3764 = vld [vmem:[%s293 + $0x60] sm:$0xf]
        %v3765 = vld [vmem:[%s293 + $0x64] sm:$0xf]
        %v3766 = vld [vmem:[%s293 + $0x68] sm:$0xf]
        %v3767 = vld [vmem:[%s293 + $0x6c] sm:$0xf]
        %v3768 = vld [vmem:[%s293 + $0x70] sm:$0xf]
        %v3769 = vld [vmem:[%s293 + $0x74] sm:$0xf]
        %v3770 = vld [vmem:[%s293 + $0x78] sm:$0xf]
        %v3771 = vld [vmem:[%s293 + $0x7c] sm:$0xf]
        %v3804 = vunpack.c.l.b16 %v3740
        %v3805 = vunpack.c.l.b16 %v3741
        %v3806 = vunpack.c.l.b16 %v3742
        %v3807 = vunpack.c.l.b16 %v3743
        %v3808 = vunpack.c.l.b16 %v3744
        %v3809 = vunpack.c.l.b16 %v3745
        %v3810 = vunpack.c.l.b16 %v3746
        %v3811 = vunpack.c.l.b16 %v3747
        %v3812 = vunpack.c.l.b16 %v3748
        %v3813 = vunpack.c.l.b16 %v3749
        %v3814 = vunpack.c.l.b16 %v3750
        %v3815 = vunpack.c.l.b16 %v3751
        %v3816 = vunpack.c.l.b16 %v3752
        %v3817 = vunpack.c.l.b16 %v3753
        %v3818 = vunpack.c.l.b16 %v3754
        %v3819 = vunpack.c.l.b16 %v3755
        %v3820 = vunpack.c.l.b16 %v3756
        %v3821 = vunpack.c.l.b16 %v3757
        %v3822 = vunpack.c.l.b16 %v3758
        %v3823 = vunpack.c.l.b16 %v3759
        %v3824 = vunpack.c.l.b16 %v3760
        %v3825 = vunpack.c.l.b16 %v3761
        %v3826 = vunpack.c.l.b16 %v3762
        %v3827 = vunpack.c.l.b16 %v3763
        %v3828 = vunpack.c.l.b16 %v3764
        %v3829 = vunpack.c.l.b16 %v3765
        %v3830 = vunpack.c.l.b16 %v3766
        %v3831 = vunpack.c.l.b16 %v3767
        %v3832 = vunpack.c.l.b16 %v3768
        %v3833 = vunpack.c.l.b16 %v3769
        %v3834 = vunpack.c.l.b16 %v3770
        %v3835 = vunpack.c.l.b16 %v3771
        %v3836 = vpack.c.b16 %v3805, %v3804
        %v3837 = vpack.c.b16 %v3807, %v3806
        %v3838 = vpack.c.b16 %v3809, %v3808
        %v3839 = vpack.c.b16 %v3811, %v3810
        %v3840 = vpack.c.b16 %v3813, %v3812
        %v3841 = vpack.c.b16 %v3815, %v3814
        %v3842 = vpack.c.b16 %v3817, %v3816
        %v3843 = vpack.c.b16 %v3819, %v3818
        %v3844 = vpack.c.b16 %v3821, %v3820
        %v3845 = vpack.c.b16 %v3823, %v3822
        %v3846 = vpack.c.b16 %v3825, %v3824
        %v3847 = vpack.c.b16 %v3827, %v3826
        %v3848 = vpack.c.b16 %v3829, %v3828
        %v3849 = vpack.c.b16 %v3831, %v3830
        %v3850 = vpack.c.b16 %v3833, %v3832
        %v3851 = vpack.c.b16 %v3835, %v3834
        %3868 = vmatpush.bf16.msra.mxu0 %v3843
        %3869 = vmatpush.bf16.msra.mxu0 %v3842
        %3870 = vmatpush.bf16.msra.mxu0 %v3841
        %3871 = vmatpush.bf16.msra.mxu0 %v3840
        %3872 = vmatpush.bf16.msra.mxu0 %v3839
        %3873 = vmatpush.bf16.msra.mxu0 %v3838
        %3874 = vmatpush.bf16.msra.mxu0 %v3837
        %3875 = vmatpush.bf16.msra.mxu0 %v3836
        %3876 = vmatmul.bf16.gmra.mxu0 %v3738
        %v3877 = vpop.f32.mrf.mxu0
        %v3878 = vadd.f32 0.0, %v3877
        %v3879 = vpop.f32.mrf.mxu0
        %3880 = vdwg.mxu0
        %3881 = vmatpush.bf16.msra.mxu0 %v3851
        %3882 = vmatpush.bf16.msra.mxu0 %v3850
        %3883 = vmatpush.bf16.msra.mxu0 %v3849
        %3884 = vmatpush.bf16.msra.mxu0 %v3848
        %3885 = vmatpush.bf16.msra.mxu0 %v3847
        %3886 = vmatpush.bf16.msra.mxu0 %v3846
        %3887 = vmatpush.bf16.msra.mxu0 %v3845
        %3888 = vmatpush.bf16.msra.mxu0 %v3844
        %3889 = vmatmul.bf16.gmra.mxu0 %v3739
        %v3890 = vpop.f32.mrf.mxu0
        %v3891 = vadd.f32 %v3878, %v3890
        %v3892 = vpop.f32.mrf.mxu0
        %3893 = vdwg.mxu0
        %v3910 = vunpack.c.l.b16 %v3722
        %v3911 = vunpack.c.l.b16 %v3723
        %v3912 = vunpack.c.l.b16 %v3724
        %v3913 = vunpack.c.l.b16 %v3725
        %v3914 = vunpack.c.l.b16 %v3726
        %v3915 = vunpack.c.l.b16 %v3727
        %v3916 = vunpack.c.l.b16 %v3728
        %v3917 = vunpack.c.l.b16 %v3729
        %v3918 = vunpack.c.l.b16 %v3730
        %v3919 = vunpack.c.l.b16 %v3731
        %v3920 = vunpack.c.l.b16 %v3732
        %v3921 = vunpack.c.l.b16 %v3733
        %v3922 = vunpack.c.l.b16 %v3734
        %v3923 = vunpack.c.l.b16 %v3735
        %v3924 = vunpack.c.l.b16 %v3736
        %v3925 = vunpack.c.l.b16 %v3737
        %v3926 = vpack.c.b16 %v3911, %v3910
        %v3927 = vpack.c.b16 %v3913, %v3912
        %v3928 = vpack.c.b16 %v3915, %v3914
        %v3929 = vpack.c.b16 %v3917, %v3916
        %v3930 = vpack.c.b16 %v3919, %v3918
        %v3931 = vpack.c.b16 %v3921, %v3920
        %v3932 = vpack.c.b16 %v3923, %v3922
        %v3933 = vpack.c.b16 %v3925, %v3924
        %3942 = vmatpush.bf16.msra.mxu0 %v3933
        %3943 = vmatpush.bf16.msra.mxu0 %v3932
        %3944 = vmatpush.bf16.msra.mxu0 %v3931
        %3945 = vmatpush.bf16.msra.mxu0 %v3930
        %3946 = vmatpush.bf16.msra.mxu0 %v3929
        %3947 = vmatpush.bf16.msra.mxu0 %v3928
        %3948 = vmatpush.bf16.msra.mxu0 %v3927
        %3949 = vmatpush.bf16.msra.mxu0 %v3926
        %3950 = vmatmul.bf16.gmra.mxu0 %v3721
        %v3951 = vpop.f32.mrf.mxu0
        %v3952 = vadd.f32 %v3891, %v3951
        %v3953 = vpop.f32.mrf.mxu0
        %3954 = vdwg.mxu0
        %v3955 = vadd.f32 %v3720, %v3952
        %3956 = vst [vmem:[#allocation2] sm:$0xff] %v3955
        %v3957 = vld [vmem:[#allocation3] sm:$0xff]
        %v3958 = vadd.f32 %v346, %v347
        %3959 = vadd.xlane.f32.xlu0 %v3958
        %v3960 = vpop.xlane.xlu0 %3959
        %v3961 = vadd.f32 %v3957, %v3960
        %vm3962 = vcmask 7168
        %3963 = vst.msk [vmem:[#allocation3] sm:$0xff] %vm3962, %v3961
        %p3964 = scmp.eq.s32.totalorder %s28, 1
        // Predicated region
        $region61: #{tpu_custom_call.1} parent=39 // pred_check
          %p3965 = pneg %p3964
        $region62: #{tpu_custom_call.1} parent=39 // pred_check_branch
          %3967 = sbr.rel (%p3965) target = $region64
        $region63: #{tpu_custom_call.1} parent=39 // pred_region
          %v3968 = vld [vmem:[#allocation3] sm:$0xff]
          %v3969 = vadd.f32 %v3968, 1e-10
          %v3970 = vld [vmem:[#allocation2] sm:$0xff]
          %3972 = vset.pattern.permute.xlu0 0
          %3973 = vperm.xlu0 %3972, %v3969
          %v3974 = vpop.permute.xlu0 %3973
          %v3976 = vrcp.pop %v3974
          %v3977 = vmul.f32 %v3974, %v3976
          %v3978 = vsub.f32 1.0, %v3977
          %v3979 = vmul.f32 %v3976, %v3978
          %v3980 = vadd.f32 %v3976, %v3979
          %vm3981 = vweird.f32 %v3974
          %vm3982 = vweird.f32 %v3976
          %vm3983 = vmor %vm3981, %vm3982
          %v3984 = vsel %vm3983, %v3976, %v3980
          %v3985 = vand.u32 2147483647, %v3974
          %vm3986 = vcmp.eq.f32.partialorder %v3985, 8.507059e+37
          %v3987 = vand.u32 %v3974, 2147483648
          %v3988 = vor.u32 1.1754944e-38, %v3987
          %v3989 = vsel %vm3986, %v3988, %v3984
          %v3990 = vmul.f32 %v3970, %v3989
          %v3991 = vld [vmem:[#allocation10] sm:$0xff]
          %v3992 = vld [vmem:[#allocation10 + $0x8] sm:$0xff]
          %v3993 = vld [vmem:[#allocation10 + $0x10] sm:$0xff]
          %v3994 = vld [vmem:[#allocation10 + $0x18] sm:$0xff]
          %v3995 = vld [vmem:[#allocation10 + $0x20] sm:$0xff]
          %v3996 = vld [vmem:[#allocation10 + $0x28] sm:$0xff]
          %v3997 = vld [vmem:[#allocation10 + $0x30] sm:$0xff]
          %v3998 = vld [vmem:[#allocation10 + $0x38] sm:$0xff]
          %v3999 = vld [vmem:[#allocation10 + $0x40] sm:$0xff]
          %v4000 = vld [vmem:[#allocation10 + $0x48] sm:$0xff]
          %v4001 = vld [vmem:[#allocation10 + $0x50] sm:$0xff]
          %v4002 = vld [vmem:[#allocation10 + $0x58] sm:$0xff]
          %v4003 = vld [vmem:[#allocation10 + $0x60] sm:$0xff]
          %v4004 = vld [vmem:[#allocation10 + $0x68] sm:$0xff]
          %v4005 = vld [vmem:[#allocation10 + $0x70] sm:$0xff]
          %v4006 = vld [vmem:[#allocation10 + $0x78] sm:$0xff]
          %v4007 = vld [vmem:[%s4] sm:$0x1]
          %v4009 = vperm.slane %v4007, 0
          %4011 = vmatpush.msra.mxu0 %v4006
          %4012 = vmatpush.msra.mxu0 %v4005
          %4013 = vmatpush.msra.mxu0 %v4004
          %4014 = vmatpush.msra.mxu0 %v4003
          %4015 = vmatpush.msra.mxu0 %v4002
          %4016 = vmatpush.msra.mxu0 %v4001
          %4017 = vmatpush.msra.mxu0 %v4000
          %4018 = vmatpush.msra.mxu0 %v3999
          %4019 = vmatpush.msra.mxu0 %v3998
          %4020 = vmatpush.msra.mxu0 %v3997
          %4021 = vmatpush.msra.mxu0 %v3996
          %4022 = vmatpush.msra.mxu0 %v3995
          %4023 = vmatpush.msra.mxu0 %v3994
          %4024 = vmatpush.msra.mxu0 %v3993
          %4025 = vmatpush.msra.mxu0 %v3992
          %4026 = vmatpush.msra.mxu0 %v3991
          %4027 = vmatmul.f32.gmra.mxu0 %v3990
          %v4028 = vpop.f32.mrf.mxu0
          %v4029 = vadd.f32 %v4009, %v4028
          %4030 = vdwg.mxu0
          %vm4031 = vcmp.lt.s32.totalorder %v349, 4
          %v4032 = vsel %vm4031, %v4029, -1e+30
          %4033 = vmax.xlane.f32.xlu0 %v4032
          %v4034 = vpop.xlane.xlu0 %4033
          %v4035 = vsub.f32 %v4032, %v4034
          %v4036 = vmul.f32 %v4035, 1.442695
          %v4037 = vpow.pop %v4036
          %4038 = vadd.xlane.f32.xlu0 %v4037
          %v4039 = vpop.xlane.xlu0 %4038
          %v4040 = vlog2.pop %v4039
          %v4041 = vmul.f32 %v4040, 0.6931472
          %v4042 = vadd.f32 %v4034, %v4041
          %v4043 = vsub.f32 %v4032, %v4042
          %4044 = vst [vmem:[%s330] sm:$0xff] %v4043
        $region64: #{tpu_custom_call.1} parent=39 // pred_fallthru
          _
        %s4045 = sand.u32 %s160, 1
        %s4046 = scalar_lea.sflag [#allocation6], %s4045
        %s4047 = sand.u32 %s160, 1
        %s4048 = smul.addr %s4047, 8
        %s4049 = scalar_lea.vmem [#allocation11], %s4048
        // Predicated region
        $region65: #{tpu_custom_call.1} parent=39 // pred_check
          %p4050 = pneg %p170
        $region66: #{tpu_custom_call.1} parent=39 // pred_check_branch
          %4052 = sbr.rel (%p4050) target = $region68
        $region67: #{tpu_custom_call.1} parent=39 // pred_region
          %4054 = vsyncadd %s4046, 0
          %s4055 = smul.addr %s27, 8
          %s4056 = scalar_lea.hbm %s5, %s4055
          %s4058 = sshll.u32 %s4049, 4
          %s4059 = int_to_ptr.vmem [resolvable:$true] %s4058
          %s4060 = sshll.u32 %s4056, 4
          %s4061 = int_to_ptr.hbm [resolvable:$true] %s4060
          %4063 = dma.vmem_to_hbm [thread:$0]  %s4059, 128, %s4061, %s4046
        $region68: #{tpu_custom_call.1} parent=39 // pred_fallthru
          _
      $region40: #{tpu_custom_call.1} parent=5 // pred_fallthru
        _
      %p4064 = scmp.le.s32.totalorder 2, %s18
      // Predicated region
      $region69: #{tpu_custom_call.1} parent=5 // pred_check
        %p4065 = pneg %p4064
      $region70: #{tpu_custom_call.1} parent=5 // pred_check_branch
        %4067 = sbr.rel (%p4065) target = $region72
      $region71: #{tpu_custom_call.1} parent=5 // pred_region
        %s4068 = ssub.s32 %s18, 2
        // Predicated region
        $region73: #{tpu_custom_call.1} parent=71 // pred_check
          %p4069 = pneg %p176
        $region74: #{tpu_custom_call.1} parent=71 // pred_check_branch
          %4071 = sbr.rel (%p4069) target = $region76
        $region75: #{tpu_custom_call.1} parent=71 // pred_region
          %s4072 = sand.u32 %s161, 1
          %s4073 = scalar_lea.sflag [#allocation6], %s4072
          %s4074 = sand.u32 %s161, 1
          %s4075 = smul.addr %s4074, 8
          %s4076 = scalar_lea.vmem [#allocation11], %s4075
          %4078 = dma.done %s4073, 128
        $region76: #{tpu_custom_call.1} parent=71 // pred_fallthru
          _
      $region72: #{tpu_custom_call.1} parent=5 // pred_fallthru
        _
    $region6: #{tpu_custom_call.1} parent=1 // loop_footer
      %s22 = sadd.s32 1, %s18
    $region7: #{tpu_custom_call.1} parent=1 // loop_footer_branch
      %17 = sbr.rel target = $region3
    $region8: #{tpu_custom_call.1} parent=1 // loop_exit
      _
    %4079 = vsyncpa [#allocation5], 1
    %s4080 = scalar_lea.sflag [#allocation5], 1
    %4081 = vsyncpa %s4080, 1
    %4082 = vsyncpa [#allocation8], 1
    %4083 = vsyncpa [#allocation6], 1
    %s4084 = scalar_lea.sflag [#allocation6], 1
    %4085 = vsyncpa %s4084, 1

</llo_original>
